<compile_context>
chip_gen: v7x
topology: tpu7x:2x2x1
jax: 0.10.0
libtpu: 0.0.40
codegen_flags: <defaults>
</compile_context>

<pallas_src>
import functools

import jax
import jax.numpy as jnp
from jax.experimental import pallas as pl
from jax.experimental.pallas import tpu as pltpu


# --------------------------- in-kernel math helpers -------------------------

_INV_SQRT2 = 0.7071067811865476


def _erf_poly(x):
    # Abramowitz & Stegun 7.1.26 (|abs err| < 1.5e-7) using only ops that are
    # guaranteed to lower on Mosaic (abs / where / mul / add / div / exp).
    sign = jnp.where(x < 0.0, -1.0, 1.0)
    ax = jnp.abs(x)
    t = 1.0 / (1.0 + 0.3275911 * ax)
    poly = ((((1.061405429 * t - 1.453152027) * t + 1.421413741) * t
             - 0.284496736) * t + 0.254829592) * t
    return sign * (1.0 - poly * jnp.exp(-ax * ax))


def _erf_supported_in_pallas():
    """Probe whether lax.erf lowers inside a Pallas TPU kernel on this build."""
    def k(x_ref, o_ref):
        o_ref[...] = jax.lax.erf(x_ref[...])
    try:
        pl.pallas_call(
            k, out_shape=jax.ShapeDtypeStruct((8, 128), jnp.float32)
        )(jnp.zeros((8, 128), jnp.float32))
        return True
    except Exception:  # lowering not available -> fall back to polynomial erf
        return False


_HAS_ERF = _erf_supported_in_pallas()


def _erf_f32(x):
    return jax.lax.erf(x) if _HAS_ERF else _erf_poly(x)


def _gelu_exact(x):
    # Matches PyTorch F.gelu(approximate='none') used by TransformerEncoderLayer.
    return 0.5 * x * (1.0 + _erf_f32(x * _INV_SQRT2))


def _layernorm(x, g, b, eps):
    mean = jnp.mean(x, axis=-1, keepdims=True)
    xc = x - mean
    var = jnp.mean(xc * xc, axis=-1, keepdims=True)
    return xc * jax.lax.rsqrt(var + eps) * g + b


# ------------------------------ fused ViT kernel ----------------------------


def _vit_kernel(
    # inputs
    patches_ref, cls_ref, pos_ref, w_patch_ref, b_patch_ref,
    w_qkv_ref, b_qkv_ref, w_out_ref, b_out_ref, g1_ref, beta1_ref,
    w_ff1_ref, b_ff1_ref, w_ff2_ref, b_ff2_ref, g2_ref, beta2_ref,
    gf_ref, bf_ref, w_head_ref, b_head_ref,
    # outputs
    logits_ref,
    # scratch
    x_scr,
    *, num_heads, head_dim, ln_eps):
    layer = pl.program_id(1)
    embed = num_heads * head_dim
    scale = 1.0 / (head_dim ** 0.5)

    # ---- layer 0 of this batch element: build the token sequence in VMEM ---
    @pl.when(layer == 0)
    def _():
        # Conv2d(kernel=stride=patch) == per-patch flatten + matmul.
        patch_tok = jnp.dot(patches_ref[0].astype(jnp.float32),
                            w_patch_ref[...].astype(jnp.float32),
                            preferred_element_type=jnp.float32)
        patch_tok = patch_tok + b_patch_ref[...].astype(jnp.float32)
        tokens = jnp.concatenate(
            [cls_ref[...].astype(jnp.float32), patch_tok], axis=0)     # (S, E)
        # TODO(synk): pos_drop / all Dropout layers are identity (inference).
        x_scr[...] = tokens + pos_ref[...].astype(jnp.float32)

    x = x_scr[...]                                                      # (S, E) f32

    # ------------------- self-attention block (post-norm) -------------------
    qkv = jnp.dot(x, w_qkv_ref[0], preferred_element_type=jnp.float32)
    qkv = qkv + b_qkv_ref[0]                                            # (S, 3E)

    head_outs = []
    for h in range(num_heads):                                          # unrolled
        c0 = h * head_dim
        q = qkv[:, c0:c0 + head_dim] * scale
        k = qkv[:, embed + c0:embed + c0 + head_dim]
        v = qkv[:, 2 * embed + c0:2 * embed + c0 + head_dim]
        s = jax.lax.dot_general(q, k, (((1,), (1,)), ((), ())),
                                preferred_element_type=jnp.float32)     # (S, S)
        s = s - jnp.max(s, axis=-1, keepdims=True)
        p = jnp.exp(s)
        p = p * pl.reciprocal(jnp.sum(p, axis=-1, keepdims=True), approx=True)
        head_outs.append(jnp.dot(p, v, preferred_element_type=jnp.float32))
    attn = jnp.concatenate(head_outs, axis=-1)                          # (S, E)
    attn = jnp.dot(attn, w_out_ref[0], preferred_element_type=jnp.float32)
    attn = attn + b_out_ref[0]
    x = _layernorm(x + attn, g1_ref[0], beta1_ref[0], ln_eps)           # norm1

    # --------------------------- feed-forward block --------------------------
    h1 = jnp.dot(x, w_ff1_ref[0], preferred_element_type=jnp.float32)
    h1 = _gelu_exact(h1 + b_ff1_ref[0])                                 # (S, FF)
    h2 = jnp.dot(h1, w_ff2_ref[0], preferred_element_type=jnp.float32)
    h2 = h2 + b_ff2_ref[0]
    x = _layernorm(x + h2, g2_ref[0], beta2_ref[0], ln_eps)             # norm2

    x_scr[...] = x

    # ---- last layer: final LayerNorm on the cls token + classifier head ----
    @pl.when(layer == pl.num_programs(1) - 1)
    def _():
        cls_tok = _layernorm(x[0:1, :], gf_ref[...], bf_ref[...], ln_eps)
        logits = jnp.dot(cls_tok, w_head_ref[...],
                         preferred_element_type=jnp.float32) + b_head_ref[...]
        logits_ref[0] = logits.astype(logits_ref.dtype)


# ------------------------------- model wrapper -------------------------------


def simple_vit_forward(x, params, cfg):
    B, C, H, W = x.shape
    P = cfg["patch"]
    E = cfg["embed_dim"]
    nh, nw = H // P, W // P
    N = nh * nw
    S = N + 1
    depth = cfg["depth"]
    num_heads = cfg["num_heads"]
    Dh = E // num_heads
    classes = cfg["num_classes"]
    CPP = C * P * P

    # Pure layout op (patch extraction) kept in JAX glue.
    patches = (x.reshape(B, C, nh, P, nw, P)
                .transpose(0, 2, 4, 1, 3, 5)
                .reshape(B, N, CPP))

    L = params["layers"]
    layer_names = ["w_qkv", "b_qkv", "w_out", "b_out", "g1", "beta1",
                   "w_ff1", "b_ff1", "w_ff2", "b_ff2", "g2", "beta2"]
    layer_args = [L[n] for n in layer_names]

    shared_pre = [params["cls_token"].reshape(1, E),
                  params["pos_embed"].reshape(S, E),
                  params["w_patch"],
                  params["b_patch"].reshape(1, E)]
    shared_post = [params["g_final"].reshape(1, E),
                   params["b_final"].reshape(1, E),
                   params["w_head"],
                   params["b_head"].reshape(1, classes)]

    def rep_spec(arr):
        # Same full-array block every grid step (shared weights / embeddings).
        return pl.BlockSpec(arr.shape, lambda b, l: (0,) * arr.ndim)

    def layer_spec(arr):
        # Per-layer stacked weights: leading depth axis indexed by the layer id.
        return pl.BlockSpec((1,) + arr.shape[1:],
                            lambda b, l: (l,) + (0,) * (arr.ndim - 1))

    in_specs = ([pl.BlockSpec((1, N, CPP), lambda b, l: (b, 0, 0))]
                + [rep_spec(a) for a in shared_pre]
                + [layer_spec(a) for a in layer_args]
                + [rep_spec(a) for a in shared_post])

    kernel = functools.partial(_vit_kernel, num_heads=num_heads,
                               head_dim=Dh, ln_eps=1e-5)

    logits = pl.pallas_call(
        kernel,
        out_shape=jax.ShapeDtypeStruct((B, 1, classes), jnp.float32),
        grid_spec=pltpu.PrefetchScalarGridSpec(
            num_scalar_prefetch=0,
            grid=(B, depth),
            in_specs=in_specs,
            out_specs=pl.BlockSpec((1, 1, classes), lambda b, l: (b, 0, 0)),
            scratch_shapes=[pltpu.VMEM((S, E), jnp.float32)],
        ),
        compiler_params=pltpu.CompilerParams(
            dimension_semantics=("parallel", "arbitrary"),
            vmem_limit_bytes=32 * 1024 * 1024,
        ),
    )(patches, *shared_pre, *layer_args, *shared_post)
    return logits.reshape(B, classes)


# --------------------------- deterministic init ------------------------------


def init_params(key, cfg):
    C, P, E = cfg["in_channels"], cfg["patch"], cfg["embed_dim"]
    FF = int(E * cfg["mlp_ratio"])
    N = (cfg["img_size"] // P) ** 2
    depth, classes = cfg["depth"], cfg["num_classes"]

    keys = iter(jax.random.split(key, 16))

    def nrm(shape, scale=0.02):
        return scale * jax.random.normal(next(keys), shape, dtype=jnp.float32)

    return {
        "w_patch": nrm((C * P * P, E)),
        "b_patch": nrm((E,)),
        "cls_token": nrm((1, 1, E)),
        "pos_embed": nrm((1, N + 1, E)),
        "g_final": jnp.ones((E,), jnp.float32),
        "b_final": jnp.zeros((E,), jnp.float32),
        "w_head": nrm((E, classes)),
        "b_head": jnp.zeros((classes,), jnp.float32),
        # Per-layer parameters stacked along a leading depth axis.
        "layers": {
            "w_qkv": nrm((depth, E, 3 * E)),
            "b_qkv": jnp.zeros((depth, 1, 3 * E), jnp.float32),
            "w_out": nrm((depth, E, E)),
            "b_out": jnp.zeros((depth, 1, E), jnp.float32),
            "g1": jnp.ones((depth, 1, E), jnp.float32),
            "beta1": jnp.zeros((depth, 1, E), jnp.float32),
            "w_ff1": nrm((depth, E, FF)),
            "b_ff1": jnp.zeros((depth, 1, FF), jnp.float32),
            "w_ff2": nrm((depth, FF, E)),
            "b_ff2": jnp.zeros((depth, 1, E), jnp.float32),
            "g2": jnp.ones((depth, 1, E), jnp.float32),
            "beta2": jnp.zeros((depth, 1, E), jnp.float32),
        },
    }


if __name__ == "__main__":
    cfg = dict(img_size=16, patch=4, in_channels=3, num_classes=10,
               embed_dim=32, depth=2, num_heads=4, mlp_ratio=4.0)

    key = jax.random.PRNGKey(0)
    k_x, k_p = jax.random.split(key)
    x = jax.random.normal(
        k_x, (2, cfg["in_channels"], cfg["img_size"], cfg["img_size"]),
        dtype=jnp.float32)
    params = init_params(k_p, cfg)

    logits = simple_vit_forward(x, params, cfg)
    logits = jax.block_until_ready(logits)
    assert logits.shape == (2, cfg["num_classes"])
    assert bool(jnp.all(jnp.isfinite(logits)))
    print("KERNEL_OK")
</pallas_src>

<mosaic_0001>
module attributes {stable_mosaic.version = 11 : i64} {
  func.func @k(%arg0: memref<8x128xf32, #tpu.memory_space<vmem>>, %arg1: memref<8x128xf32, #tpu.memory_space<vmem>>) attributes {dimension_semantics = [], scalar_prefetch = 0 : i64, scratch_operands = 0 : i64, tpu.core_type = #tpu.core_type<tc>} {
    %c0 = arith.constant 0 : index
    %c0_0 = arith.constant 0 : index
    %0 = vector.load %arg0[%c0, %c0_0] : memref<8x128xf32, #tpu.memory_space<vmem>>, vector<8x128xf32>
    %1 = math.erf %0 : vector<8x128xf32>
    %c0_1 = arith.constant 0 : index
    %c0_2 = arith.constant 0 : index
    %2 = vector.load %arg1[%c0_1, %c0_2] : memref<8x128xf32, #tpu.memory_space<vmem>>, vector<8x128xf32>
    tpu.vector_store %arg1[%c0_1, %c0_2], %1 {strides = array<i32>} : memref<8x128xf32, #tpu.memory_space<vmem>>, vector<8x128xf32>,
    return
  }
}

module attributes {stable_mosaic.version = 11 : i64} {
  func.func @_vit_kernel(%arg0: i32, %arg1: i32, %arg2: memref<1x16x48xf32, #tpu.memory_space<vmem>>, %arg3: memref<1x32xf32, #tpu.memory_space<vmem>>, %arg4: memref<17x32xf32, #tpu.memory_space<vmem>>, %arg5: memref<48x32xf32, #tpu.memory_space<vmem>>, %arg6: memref<1x32xf32, #tpu.memory_space<vmem>>, %arg7: memref<1x32x96xf32, #tpu.memory_space<vmem>>, %arg8: memref<1x1x96xf32, #tpu.memory_space<vmem>>, %arg9: memref<1x32x32xf32, #tpu.memory_space<vmem>>, %arg10: memref<1x1x32xf32, #tpu.memory_space<vmem>>, %arg11: memref<1x1x32xf32, #tpu.memory_space<vmem>>, %arg12: memref<1x1x32xf32, #tpu.memory_space<vmem>>, %arg13: memref<1x32x128xf32, #tpu.memory_space<vmem>>, %arg14: memref<1x1x128xf32, #tpu.memory_space<vmem>>, %arg15: memref<1x128x32xf32, #tpu.memory_space<vmem>>, %arg16: memref<1x1x32xf32, #tpu.memory_space<vmem>>, %arg17: memref<1x1x32xf32, #tpu.memory_space<vmem>>, %arg18: memref<1x1x32xf32, #tpu.memory_space<vmem>>, %arg19: memref<1x32xf32, #tpu.memory_space<vmem>>, %arg20: memref<1x32xf32, #tpu.memory_space<vmem>>, %arg21: memref<32x10xf32, #tpu.memory_space<vmem>>, %arg22: memref<1x10xf32, #tpu.memory_space<vmem>>, %arg23: memref<1x1x10xf32, #tpu.memory_space<vmem>>, %arg24: memref<17x32xf32, #tpu.memory_space<vmem>>) attributes {dimension_semantics = [#tpu.dimension_semantics<parallel>, #tpu.dimension_semantics<arbitrary>], iteration_bounds = array<i64: 2, 2>, scalar_prefetch = 0 : i64, scratch_operands = 1 : i64, tpu.core_type = #tpu.core_type<tc>, window_params = [{transform_indices = @transform_0, window_bounds = array<i64: 1, 16, 48>}, {pipeline_mode = #tpu.pipeline_mode<synchronous>, transform_indices = @transform_1, window_bounds = array<i64: 1, 32>}, {pipeline_mode = #tpu.pipeline_mode<synchronous>, transform_indices = @transform_2, window_bounds = array<i64: 17, 32>}, {pipeline_mode = #tpu.pipeline_mode<synchronous>, transform_indices = @transform_3, window_bounds = array<i64: 48, 32>}, {pipeline_mode = #tpu.pipeline_mode<synchronous>, transform_indices = @transform_4, window_bounds = array<i64: 1, 32>}, {transform_indices = @transform_5, window_bounds = array<i64: 1, 32, 96>}, {transform_indices = @transform_6, window_bounds = array<i64: 1, 1, 96>}, {transform_indices = @transform_7, window_bounds = array<i64: 1, 32, 32>}, {transform_indices = @transform_8, window_bounds = array<i64: 1, 1, 32>}, {transform_indices = @transform_9, window_bounds = array<i64: 1, 1, 32>}, {transform_indices = @transform_10, window_bounds = array<i64: 1, 1, 32>}, {transform_indices = @transform_11, window_bounds = array<i64: 1, 32, 128>}, {transform_indices = @transform_12, window_bounds = array<i64: 1, 1, 128>}, {transform_indices = @transform_13, window_bounds = array<i64: 1, 128, 32>}, {transform_indices = @transform_14, window_bounds = array<i64: 1, 1, 32>}, {transform_indices = @transform_15, window_bounds = array<i64: 1, 1, 32>}, {transform_indices = @transform_16, window_bounds = array<i64: 1, 1, 32>}, {pipeline_mode = #tpu.pipeline_mode<synchronous>, transform_indices = @transform_17, window_bounds = array<i64: 1, 32>}, {pipeline_mode = #tpu.pipeline_mode<synchronous>, transform_indices = @transform_18, window_bounds = array<i64: 1, 32>}, {pipeline_mode = #tpu.pipeline_mode<synchronous>, transform_indices = @transform_19, window_bounds = array<i64: 32, 10>}, {pipeline_mode = #tpu.pipeline_mode<synchronous>, transform_indices = @transform_20, window_bounds = array<i64: 1, 10>}, {transform_indices = @transform_21, window_bounds = array<i64: 1, 1, 10>}]} {
    %c0_i32 = arith.constant 0 : i32
    %0 = arith.cmpi eq, %arg1, %c0_i32 : i32
    %1 = arith.extui %0 : i1 to i32
    %c0_i32_0 = arith.constant 0 : i32
    %2 = arith.cmpi ne, %1, %c0_i32_0 : i32
    scf.if %2 {
      %c0_90 = arith.constant 0 : index
      %c0_91 = arith.constant 0 : index
      %c0_92 = arith.constant 0 : index
      %196 = vector.load %arg2[%c0_90, %c0_91, %c0_92] : memref<1x16x48xf32, #tpu.memory_space<vmem>>, vector<1x16x48xf32>
      %197 = vector.shape_cast %196 : vector<1x16x48xf32> to vector<16x48xf32>
      %c0_93 = arith.constant 0 : index
      %c0_94 = arith.constant 0 : index
      %198 = vector.load %arg5[%c0_93, %c0_94] : memref<48x32xf32, #tpu.memory_space<vmem>>, vector<48x32xf32>
      %cst_95 = arith.constant dense<0.000000e+00> : vector<16x32xf32>
      %199 = tpu.matmul %197, %198, %cst_95 {dimension_numbers = #tpu.dot_dimension_numbers<[1], [0], [0], [1], [0, 0, 1, 1], [], []>} : vector<16x48xf32>, vector<48x32xf32>, vector<16x32xf32> -> vector<16x32xf32>
      %c0_96 = arith.constant 0 : index
      %c0_97 = arith.constant 0 : index
      %200 = vector.load %arg6[%c0_96, %c0_97] : memref<1x32xf32, #tpu.memory_space<vmem>>, vector<1x32xf32>
      %201 = vector.broadcast %200 : vector<1x32xf32> to vector<16x32xf32>
      %202 = arith.addf %199, %201 : vector<16x32xf32>
      %c0_98 = arith.constant 0 : index
      %c0_99 = arith.constant 0 : index
      %203 = vector.load %arg3[%c0_98, %c0_99] : memref<1x32xf32, #tpu.memory_space<vmem>>, vector<1x32xf32>
      %204 = tpu.concatenate %203, %202 in 0 : vector<1x32xf32>, vector<16x32xf32> -> vector<17x32xf32>
      %c0_100 = arith.constant 0 : index
      %c0_101 = arith.constant 0 : index
      %205 = vector.load %arg4[%c0_100, %c0_101] : memref<17x32xf32, #tpu.memory_space<vmem>>, vector<17x32xf32>
      %206 = arith.addf %204, %205 : vector<17x32xf32>
      %c0_102 = arith.constant 0 : index
      %c0_103 = arith.constant 0 : index
      %207 = vector.load %arg24[%c0_102, %c0_103] : memref<17x32xf32, #tpu.memory_space<vmem>>, vector<17x32xf32>
      tpu.vector_store %arg24[%c0_102, %c0_103], %206 {strides = array<i32>} : memref<17x32xf32, #tpu.memory_space<vmem>>, vector<17x32xf32>,
    } else {
    }
    %c0 = arith.constant 0 : index
    %c0_1 = arith.constant 0 : index
    %3 = vector.load %arg24[%c0, %c0_1] : memref<17x32xf32, #tpu.memory_space<vmem>>, vector<17x32xf32>
    %c0_2 = arith.constant 0 : index
    %c0_3 = arith.constant 0 : index
    %c0_4 = arith.constant 0 : index
    %4 = vector.load %arg7[%c0_2, %c0_3, %c0_4] : memref<1x32x96xf32, #tpu.memory_space<vmem>>, vector<1x32x96xf32>
    %5 = vector.shape_cast %4 : vector<1x32x96xf32> to vector<32x96xf32>
    %cst = arith.constant dense<0.000000e+00> : vector<17x96xf32>
    %6 = tpu.matmul %3, %5, %cst {dimension_numbers = #tpu.dot_dimension_numbers<[1], [0], [0], [1], [0, 0, 1, 1], [], []>} : vector<17x32xf32>, vector<32x96xf32>, vector<17x96xf32> -> vector<17x96xf32>
    %c0_5 = arith.constant 0 : index
    %c0_6 = arith.constant 0 : index
    %c0_7 = arith.constant 0 : index
    %7 = vector.load %arg8[%c0_5, %c0_6, %c0_7] : memref<1x1x96xf32, #tpu.memory_space<vmem>>, vector<1x1x96xf32>
    %8 = vector.shape_cast %7 : vector<1x1x96xf32> to vector<1x96xf32>
    %9 = vector.broadcast %8 : vector<1x96xf32> to vector<17x96xf32>
    %10 = arith.addf %6, %9 : vector<17x96xf32>
    %11 = vector.extract_strided_slice %10 {offsets = [0, 0], sizes = [17, 8], strides = [1, 1]} : vector<17x96xf32> to vector<17x8xf32>
    %cst_8 = arith.constant 0.353553385 : f32
    %12 = vector.broadcast %cst_8 : f32 to vector<17x8xf32>
    %13 = arith.mulf %11, %12 : vector<17x8xf32>
    %14 = vector.extract_strided_slice %10 {offsets = [0, 32], sizes = [17, 8], strides = [1, 1]} : vector<17x96xf32> to vector<17x8xf32>
    %15 = vector.extract_strided_slice %10 {offsets = [0, 64], sizes = [17, 8], strides = [1, 1]} : vector<17x96xf32> to vector<17x8xf32>
    %cst_9 = arith.constant dense<0.000000e+00> : vector<17x17xf32>
    %16 = tpu.matmul %13, %14, %cst_9 {dimension_numbers = #tpu.dot_dimension_numbers<[1], [1], [0], [0], [0, 0, 1, 0], [], []>} : vector<17x8xf32>, vector<17x8xf32>, vector<17x17xf32> -> vector<17x17xf32>
    %cst_10 = arith.constant dense<0xFF800000> : vector<17xf32>
    %17 = vector.multi_reduction <maximumf>, %16, %cst_10 [1] : vector<17x17xf32> to vector<17xf32>
    %18 = vector.shape_cast %17 : vector<17xf32> to vector<17x1xf32>
    %19 = vector.broadcast %18 : vector<17x1xf32> to vector<17x17xf32>
    %20 = arith.subf %16, %19 : vector<17x17xf32>
    %21 = math.exp %20 : vector<17x17xf32>
    %cst_11 = arith.constant dense<0.000000e+00> : vector<17xf32>
    %22 = vector.multi_reduction <add>, %21, %cst_11 [1] : vector<17x17xf32> to vector<17xf32>
    %23 = vector.shape_cast %22 : vector<17xf32> to vector<17x1xf32>
    %24 = tpu.reciprocal %23 {approx = true} : vector<17x1xf32> -> vector<17x1xf32>
    %25 = vector.broadcast %24 : vector<17x1xf32> to vector<17x17xf32>
    %26 = arith.mulf %21, %25 : vector<17x17xf32>
    %cst_12 = arith.constant dense<0.000000e+00> : vector<17x8xf32>
    %27 = tpu.matmul %26, %15, %cst_12 {dimension_numbers = #tpu.dot_dimension_numbers<[1], [0], [0], [1], [0, 0, 1, 1], [], []>} : vector<17x17xf32>, vector<17x8xf32>, vector<17x8xf32> -> vector<17x8xf32>
    %28 = vector.extract_strided_slice %10 {offsets = [0, 8], sizes = [17, 8], strides = [1, 1]} : vector<17x96xf32> to vector<17x8xf32>
    %cst_13 = arith.constant 0.353553385 : f32
    %29 = vector.broadcast %cst_13 : f32 to vector<17x8xf32>
    %30 = arith.mulf %28, %29 : vector<17x8xf32>
    %31 = vector.extract_strided_slice %10 {offsets = [0, 40], sizes = [17, 8], strides = [1, 1]} : vector<17x96xf32> to vector<17x8xf32>
    %32 = vector.extract_strided_slice %10 {offsets = [0, 72], sizes = [17, 8], strides = [1, 1]} : vector<17x96xf32> to vector<17x8xf32>
    %cst_14 = arith.constant dense<0.000000e+00> : vector<17x17xf32>
    %33 = tpu.matmul %30, %31, %cst_14 {dimension_numbers = #tpu.dot_dimension_numbers<[1], [1], [0], [0], [0, 0, 1, 0], [], []>} : vector<17x8xf32>, vector<17x8xf32>, vector<17x17xf32> -> vector<17x17xf32>
    %cst_15 = arith.constant dense<0xFF800000> : vector<17xf32>
    %34 = vector.multi_reduction <maximumf>, %33, %cst_15 [1] : vector<17x17xf32> to vector<17xf32>
    %35 = vector.shape_cast %34 : vector<17xf32> to vector<17x1xf32>
    %36 = vector.broadcast %35 : vector<17x1xf32> to vector<17x17xf32>
    %37 = arith.subf %33, %36 : vector<17x17xf32>
    %38 = math.exp %37 : vector<17x17xf32>
    %cst_16 = arith.constant dense<0.000000e+00> : vector<17xf32>
    %39 = vector.multi_reduction <add>, %38, %cst_16 [1] : vector<17x17xf32> to vector<17xf32>
    %40 = vector.shape_cast %39 : vector<17xf32> to vector<17x1xf32>
    %41 = tpu.reciprocal %40 {approx = true} : vector<17x1xf32> -> vector<17x1xf32>
    %42 = vector.broadcast %41 : vector<17x1xf32> to vector<17x17xf32>
    %43 = arith.mulf %38, %42 : vector<17x17xf32>
    %cst_17 = arith.constant dense<0.000000e+00> : vector<17x8xf32>
    %44 = tpu.matmul %43, %32, %cst_17 {dimension_numbers = #tpu.dot_dimension_numbers<[1], [0], [0], [1], [0, 0, 1, 1], [], []>} : vector<17x17xf32>, vector<17x8xf32>, vector<17x8xf32> -> vector<17x8xf32>
    %45 = vector.extract_strided_slice %10 {offsets = [0, 16], sizes = [17, 8], strides = [1, 1]} : vector<17x96xf32> to vector<17x8xf32>
    %cst_18 = arith.constant 0.353553385 : f32
    %46 = vector.broadcast %cst_18 : f32 to vector<17x8xf32>
    %47 = arith.mulf %45, %46 : vector<17x8xf32>
    %48 = vector.extract_strided_slice %10 {offsets = [0, 48], sizes = [17, 8], strides = [1, 1]} : vector<17x96xf32> to vector<17x8xf32>
    %49 = vector.extract_strided_slice %10 {offsets = [0, 80], sizes = [17, 8], strides = [1, 1]} : vector<17x96xf32> to vector<17x8xf32>
    %cst_19 = arith.constant dense<0.000000e+00> : vector<17x17xf32>
    %50 = tpu.matmul %47, %48, %cst_19 {dimension_numbers = #tpu.dot_dimension_numbers<[1], [1], [0], [0], [0, 0, 1, 0], [], []>} : vector<17x8xf32>, vector<17x8xf32>, vector<17x17xf32> -> vector<17x17xf32>
    %cst_20 = arith.constant dense<0xFF800000> : vector<17xf32>
    %51 = vector.multi_reduction <maximumf>, %50, %cst_20 [1] : vector<17x17xf32> to vector<17xf32>
    %52 = vector.shape_cast %51 : vector<17xf32> to vector<17x1xf32>
    %53 = vector.broadcast %52 : vector<17x1xf32> to vector<17x17xf32>
    %54 = arith.subf %50, %53 : vector<17x17xf32>
    %55 = math.exp %54 : vector<17x17xf32>
    %cst_21 = arith.constant dense<0.000000e+00> : vector<17xf32>
    %56 = vector.multi_reduction <add>, %55, %cst_21 [1] : vector<17x17xf32> to vector<17xf32>
    %57 = vector.shape_cast %56 : vector<17xf32> to vector<17x1xf32>
    %58 = tpu.reciprocal %57 {approx = true} : vector<17x1xf32> -> vector<17x1xf32>
    %59 = vector.broadcast %58 : vector<17x1xf32> to vector<17x17xf32>
    %60 = arith.mulf %55, %59 : vector<17x17xf32>
    %cst_22 = arith.constant dense<0.000000e+00> : vector<17x8xf32>
    %61 = tpu.matmul %60, %49, %cst_22 {dimension_numbers = #tpu.dot_dimension_numbers<[1], [0], [0], [1], [0, 0, 1, 1], [], []>} : vector<17x17xf32>, vector<17x8xf32>, vector<17x8xf32> -> vector<17x8xf32>
    %62 = vector.extract_strided_slice %10 {offsets = [0, 24], sizes = [17, 8], strides = [1, 1]} : vector<17x96xf32> to vector<17x8xf32>
    %cst_23 = arith.constant 0.353553385 : f32
    %63 = vector.broadcast %cst_23 : f32 to vector<17x8xf32>
    %64 = arith.mulf %62, %63 : vector<17x8xf32>
    %65 = vector.extract_strided_slice %10 {offsets = [0, 56], sizes = [17, 8], strides = [1, 1]} : vector<17x96xf32> to vector<17x8xf32>
    %66 = vector.extract_strided_slice %10 {offsets = [0, 88], sizes = [17, 8], strides = [1, 1]} : vector<17x96xf32> to vector<17x8xf32>
    %cst_24 = arith.constant dense<0.000000e+00> : vector<17x17xf32>
    %67 = tpu.matmul %64, %65, %cst_24 {dimension_numbers = #tpu.dot_dimension_numbers<[1], [1], [0], [0], [0, 0, 1, 0], [], []>} : vector<17x8xf32>, vector<17x8xf32>, vector<17x17xf32> -> vector<17x17xf32>
    %cst_25 = arith.constant dense<0xFF800000> : vector<17xf32>
    %68 = vector.multi_reduction <maximumf>, %67, %cst_25 [1] : vector<17x17xf32> to vector<17xf32>
    %69 = vector.shape_cast %68 : vector<17xf32> to vector<17x1xf32>
    %70 = vector.broadcast %69 : vector<17x1xf32> to vector<17x17xf32>
    %71 = arith.subf %67, %70 : vector<17x17xf32>
    %72 = math.exp %71 : vector<17x17xf32>
    %cst_26 = arith.constant dense<0.000000e+00> : vector<17xf32>
    %73 = vector.multi_reduction <add>, %72, %cst_26 [1] : vector<17x17xf32> to vector<17xf32>
    %74 = vector.shape_cast %73 : vector<17xf32> to vector<17x1xf32>
    %75 = tpu.reciprocal %74 {approx = true} : vector<17x1xf32> -> vector<17x1xf32>
    %76 = vector.broadcast %75 : vector<17x1xf32> to vector<17x17xf32>
    %77 = arith.mulf %72, %76 : vector<17x17xf32>
    %cst_27 = arith.constant dense<0.000000e+00> : vector<17x8xf32>
    %78 = tpu.matmul %77, %66, %cst_27 {dimension_numbers = #tpu.dot_dimension_numbers<[1], [0], [0], [1], [0, 0, 1, 1], [], []>} : vector<17x17xf32>, vector<17x8xf32>, vector<17x8xf32> -> vector<17x8xf32>
    %79 = tpu.concatenate %27, %44, %61, %78 in 1 : vector<17x8xf32>, vector<17x8xf32>, vector<17x8xf32>, vector<17x8xf32> -> vector<17x32xf32>
    %c0_28 = arith.constant 0 : index
    %c0_29 = arith.constant 0 : index
    %c0_30 = arith.constant 0 : index
    %80 = vector.load %arg9[%c0_28, %c0_29, %c0_30] : memref<1x32x32xf32, #tpu.memory_space<vmem>>, vector<1x32x32xf32>
    %81 = vector.shape_cast %80 : vector<1x32x32xf32> to vector<32x32xf32>
    %cst_31 = arith.constant dense<0.000000e+00> : vector<17x32xf32>
    %82 = tpu.matmul %79, %81, %cst_31 {dimension_numbers = #tpu.dot_dimension_numbers<[1], [0], [0], [1], [0, 0, 1, 1], [], []>} : vector<17x32xf32>, vector<32x32xf32>, vector<17x32xf32> -> vector<17x32xf32>
    %c0_32 = arith.constant 0 : index
    %c0_33 = arith.constant 0 : index
    %c0_34 = arith.constant 0 : index
    %83 = vector.load %arg10[%c0_32, %c0_33, %c0_34] : memref<1x1x32xf32, #tpu.memory_space<vmem>>, vector<1x1x32xf32>
    %84 = vector.shape_cast %83 : vector<1x1x32xf32> to vector<1x32xf32>
    %85 = vector.broadcast %84 : vector<1x32xf32> to vector<17x32xf32>
    %86 = arith.addf %82, %85 : vector<17x32xf32>
    %87 = arith.addf %3, %86 : vector<17x32xf32>
    %c0_35 = arith.constant 0 : index
    %c0_36 = arith.constant 0 : index
    %c0_37 = arith.constant 0 : index
    %88 = vector.load %arg11[%c0_35, %c0_36, %c0_37] : memref<1x1x32xf32, #tpu.memory_space<vmem>>, vector<1x1x32xf32>
    %89 = vector.shape_cast %88 : vector<1x1x32xf32> to vector<1x32xf32>
    %c0_38 = arith.constant 0 : index
    %c0_39 = arith.constant 0 : index
    %c0_40 = arith.constant 0 : index
    %90 = vector.load %arg12[%c0_38, %c0_39, %c0_40] : memref<1x1x32xf32, #tpu.memory_space<vmem>>, vector<1x1x32xf32>
    %91 = vector.shape_cast %90 : vector<1x1x32xf32> to vector<1x32xf32>
    %cst_41 = arith.constant dense<0.000000e+00> : vector<17xf32>
    %92 = vector.multi_reduction <add>, %87, %cst_41 [1] : vector<17x32xf32> to vector<17xf32>
    %93 = vector.shape_cast %92 : vector<17xf32> to vector<17x1xf32>
    %cst_42 = arith.constant 3.200000e+01 : f32
    %94 = vector.broadcast %cst_42 : f32 to vector<17x1xf32>
    %95 = arith.divf %93, %94 : vector<17x1xf32>
    %96 = vector.broadcast %95 : vector<17x1xf32> to vector<17x32xf32>
    %97 = arith.subf %87, %96 : vector<17x32xf32>
    %98 = arith.mulf %97, %97 : vector<17x32xf32>
    %cst_43 = arith.constant dense<0.000000e+00> : vector<17xf32>
    %99 = vector.multi_reduction <add>, %98, %cst_43 [1] : vector<17x32xf32> to vector<17xf32>
    %100 = vector.shape_cast %99 : vector<17xf32> to vector<17x1xf32>
    %cst_44 = arith.constant 3.200000e+01 : f32
    %101 = vector.broadcast %cst_44 : f32 to vector<17x1xf32>
    %102 = arith.divf %100, %101 : vector<17x1xf32>
    %cst_45 = arith.constant 9.99999974E-6 : f32
    %103 = vector.broadcast %cst_45 : f32 to vector<17x1xf32>
    %104 = arith.addf %102, %103 : vector<17x1xf32>
    %105 = math.rsqrt %104 : vector<17x1xf32>
    %106 = vector.broadcast %105 : vector<17x1xf32> to vector<17x32xf32>
    %107 = arith.mulf %97, %106 : vector<17x32xf32>
    %108 = vector.broadcast %89 : vector<1x32xf32> to vector<17x32xf32>
    %109 = arith.mulf %107, %108 : vector<17x32xf32>
    %110 = vector.broadcast %91 : vector<1x32xf32> to vector<17x32xf32>
    %111 = arith.addf %109, %110 : vector<17x32xf32>
    %c0_46 = arith.constant 0 : index
    %c0_47 = arith.constant 0 : index
    %c0_48 = arith.constant 0 : index
    %112 = vector.load %arg13[%c0_46, %c0_47, %c0_48] : memref<1x32x128xf32, #tpu.memory_space<vmem>>, vector<1x32x128xf32>
    %113 = vector.shape_cast %112 : vector<1x32x128xf32> to vector<32x128xf32>
    %cst_49 = arith.constant dense<0.000000e+00> : vector<17x128xf32>
    %114 = tpu.matmul %111, %113, %cst_49 {dimension_numbers = #tpu.dot_dimension_numbers<[1], [0], [0], [1], [0, 0, 1, 1], [], []>} : vector<17x32xf32>, vector<32x128xf32>, vector<17x128xf32> -> vector<17x128xf32>
    %c0_50 = arith.constant 0 : index
    %c0_51 = arith.constant 0 : index
    %c0_52 = arith.constant 0 : index
    %115 = vector.load %arg14[%c0_50, %c0_51, %c0_52] : memref<1x1x128xf32, #tpu.memory_space<vmem>>, vector<1x1x128xf32>
    %116 = vector.shape_cast %115 : vector<1x1x128xf32> to vector<1x128xf32>
    %117 = vector.broadcast %116 : vector<1x128xf32> to vector<17x128xf32>
    %118 = arith.addf %114, %117 : vector<17x128xf32>
    %cst_53 = arith.constant 5.000000e-01 : f32
    %119 = vector.broadcast %cst_53 : f32 to vector<17x128xf32>
    %120 = arith.mulf %119, %118 : vector<17x128xf32>
    %cst_54 = arith.constant 0.707106769 : f32
    %121 = vector.broadcast %cst_54 : f32 to vector<17x128xf32>
    %122 = arith.mulf %118, %121 : vector<17x128xf32>
    %cst_55 = arith.constant 0.000000e+00 : f32
    %123 = vector.broadcast %cst_55 : f32 to vector<17x128xf32>
    %124 = arith.cmpf olt, %122, %123 : vector<17x128xf32>
    %cst_56 = arith.constant -1.000000e+00 : f32
    %cst_57 = arith.constant 1.000000e+00 : f32
    %125 = vector.broadcast %cst_56 : f32 to vector<17x128xf32>
    %126 = vector.broadcast %cst_57 : f32 to vector<17x128xf32>
    %127 = arith.select %124, %125, %126 : vector<17x128xi1>, vector<17x128xf32>
    %128 = math.absf %122 : vector<17x128xf32>
    %cst_58 = arith.constant 0.327591091 : f32
    %129 = vector.broadcast %cst_58 : f32 to vector<17x128xf32>
    %130 = arith.mulf %129, %128 : vector<17x128xf32>
    %cst_59 = arith.constant 1.000000e+00 : f32
    %131 = vector.broadcast %cst_59 : f32 to vector<17x128xf32>
    %132 = arith.addf %131, %130 : vector<17x128xf32>
    %cst_60 = arith.constant 1.000000e+00 : f32
    %133 = vector.broadcast %cst_60 : f32 to vector<17x128xf32>
    %134 = arith.divf %133, %132 : vector<17x128xf32>
    %cst_61 = arith.constant 1.06140542 : f32
    %135 = vector.broadcast %cst_61 : f32 to vector<17x128xf32>
    %136 = arith.mulf %135, %134 : vector<17x128xf32>
    %cst_62 = arith.constant 1.45315206 : f32
    %137 = vector.broadcast %cst_62 : f32 to vector<17x128xf32>
    %138 = arith.subf %136, %137 : vector<17x128xf32>
    %139 = arith.mulf %138, %134 : vector<17x128xf32>
    %cst_63 = arith.constant 1.42141378 : f32
    %140 = vector.broadcast %cst_63 : f32 to vector<17x128xf32>
    %141 = arith.addf %139, %140 : vector<17x128xf32>
    %142 = arith.mulf %141, %134 : vector<17x128xf32>
    %cst_64 = arith.constant 0.284496725 : f32
    %143 = vector.broadcast %cst_64 : f32 to vector<17x128xf32>
    %144 = arith.subf %142, %143 : vector<17x128xf32>
    %145 = arith.mulf %144, %134 : vector<17x128xf32>
    %cst_65 = arith.constant 0.254829586 : f32
    %146 = vector.broadcast %cst_65 : f32 to vector<17x128xf32>
    %147 = arith.addf %145, %146 : vector<17x128xf32>
    %148 = arith.mulf %147, %134 : vector<17x128xf32>
    %cst_66 = arith.constant 0.000000e+00 : f32
    %149 = vector.broadcast %cst_66 : f32 to vector<17x128xf32>
    %150 = arith.subf %149, %128 : vector<17x128xf32>
    %151 = arith.mulf %150, %128 : vector<17x128xf32>
    %152 = math.exp %151 : vector<17x128xf32>
    %153 = arith.mulf %148, %152 : vector<17x128xf32>
    %cst_67 = arith.constant 1.000000e+00 : f32
    %154 = vector.broadcast %cst_67 : f32 to vector<17x128xf32>
    %155 = arith.subf %154, %153 : vector<17x128xf32>
    %156 = arith.mulf %127, %155 : vector<17x128xf32>
    %cst_68 = arith.constant 1.000000e+00 : f32
    %157 = vector.broadcast %cst_68 : f32 to vector<17x128xf32>
    %158 = arith.addf %157, %156 : vector<17x128xf32>
    %159 = arith.mulf %120, %158 : vector<17x128xf32>
    %c0_69 = arith.constant 0 : index
    %c0_70 = arith.constant 0 : index
    %c0_71 = arith.constant 0 : index
    %160 = vector.load %arg15[%c0_69, %c0_70, %c0_71] : memref<1x128x32xf32, #tpu.memory_space<vmem>>, vector<1x128x32xf32>
    %161 = vector.shape_cast %160 : vector<1x128x32xf32> to vector<128x32xf32>
    %cst_72 = arith.constant dense<0.000000e+00> : vector<17x32xf32>
    %162 = tpu.matmul %159, %161, %cst_72 {dimension_numbers = #tpu.dot_dimension_numbers<[1], [0], [0], [1], [0, 0, 1, 1], [], []>} : vector<17x128xf32>, vector<128x32xf32>, vector<17x32xf32> -> vector<17x32xf32>
    %c0_73 = arith.constant 0 : index
    %c0_74 = arith.constant 0 : index
    %c0_75 = arith.constant 0 : index
    %163 = vector.load %arg16[%c0_73, %c0_74, %c0_75] : memref<1x1x32xf32, #tpu.memory_space<vmem>>, vector<1x1x32xf32>
    %164 = vector.shape_cast %163 : vector<1x1x32xf32> to vector<1x32xf32>
    %165 = vector.broadcast %164 : vector<1x32xf32> to vector<17x32xf32>
    %166 = arith.addf %162, %165 : vector<17x32xf32>
    %167 = arith.addf %111, %166 : vector<17x32xf32>
    %c0_76 = arith.constant 0 : index
    %c0_77 = arith.constant 0 : index
    %c0_78 = arith.constant 0 : index
    %168 = vector.load %arg17[%c0_76, %c0_77, %c0_78] : memref<1x1x32xf32, #tpu.memory_space<vmem>>, vector<1x1x32xf32>
    %169 = vector.shape_cast %168 : vector<1x1x32xf32> to vector<1x32xf32>
    %c0_79 = arith.constant 0 : index
    %c0_80 = arith.constant 0 : index
    %c0_81 = arith.constant 0 : index
    %170 = vector.load %arg18[%c0_79, %c0_80, %c0_81] : memref<1x1x32xf32, #tpu.memory_space<vmem>>, vector<1x1x32xf32>
    %171 = vector.shape_cast %170 : vector<1x1x32xf32> to vector<1x32xf32>
    %cst_82 = arith.constant dense<0.000000e+00> : vector<17xf32>
    %172 = vector.multi_reduction <add>, %167, %cst_82 [1] : vector<17x32xf32> to vector<17xf32>
    %173 = vector.shape_cast %172 : vector<17xf32> to vector<17x1xf32>
    %cst_83 = arith.constant 3.200000e+01 : f32
    %174 = vector.broadcast %cst_83 : f32 to vector<17x1xf32>
    %175 = arith.divf %173, %174 : vector<17x1xf32>
    %176 = vector.broadcast %175 : vector<17x1xf32> to vector<17x32xf32>
    %177 = arith.subf %167, %176 : vector<17x32xf32>
    %178 = arith.mulf %177, %177 : vector<17x32xf32>
    %cst_84 = arith.constant dense<0.000000e+00> : vector<17xf32>
    %179 = vector.multi_reduction <add>, %178, %cst_84 [1] : vector<17x32xf32> to vector<17xf32>
    %180 = vector.shape_cast %179 : vector<17xf32> to vector<17x1xf32>
    %cst_85 = arith.constant 3.200000e+01 : f32
    %181 = vector.broadcast %cst_85 : f32 to vector<17x1xf32>
    %182 = arith.divf %180, %181 : vector<17x1xf32>
    %cst_86 = arith.constant 9.99999974E-6 : f32
    %183 = vector.broadcast %cst_86 : f32 to vector<17x1xf32>
    %184 = arith.addf %182, %183 : vector<17x1xf32>
    %185 = math.rsqrt %184 : vector<17x1xf32>
    %186 = vector.broadcast %185 : vector<17x1xf32> to vector<17x32xf32>
    %187 = arith.mulf %177, %186 : vector<17x32xf32>
    %188 = vector.broadcast %169 : vector<1x32xf32> to vector<17x32xf32>
    %189 = arith.mulf %187, %188 : vector<17x32xf32>
    %190 = vector.broadcast %171 : vector<1x32xf32> to vector<17x32xf32>
    %191 = arith.addf %189, %190 : vector<17x32xf32>
    %c0_87 = arith.constant 0 : index
    %c0_88 = arith.constant 0 : index
    %192 = vector.load %arg24[%c0_87, %c0_88] : memref<17x32xf32, #tpu.memory_space<vmem>>, vector<17x32xf32>
    tpu.vector_store %arg24[%c0_87, %c0_88], %191 {strides = array<i32>} : memref<17x32xf32, #tpu.memory_space<vmem>>, vector<17x32xf32>,
    %c1_i32 = arith.constant 1 : i32
    %193 = arith.cmpi eq, %arg1, %c1_i32 : i32
    %194 = arith.extui %193 : i1 to i32
    %c0_i32_89 = arith.constant 0 : i32
    %195 = arith.cmpi ne, %194, %c0_i32_89 : i32
    scf.if %195 {
      %196 = vector.extract_strided_slice %191 {offsets = [0, 0], sizes = [1, 32], strides = [1, 1]} : vector<17x32xf32> to vector<1x32xf32>
      %c0_90 = arith.constant 0 : index
      %c0_91 = arith.constant 0 : index
      %197 = vector.load %arg19[%c0_90, %c0_91] : memref<1x32xf32, #tpu.memory_space<vmem>>, vector<1x32xf32>
      %c0_92 = arith.constant 0 : index
      %c0_93 = arith.constant 0 : index
      %198 = vector.load %arg20[%c0_92, %c0_93] : memref<1x32xf32, #tpu.memory_space<vmem>>, vector<1x32xf32>
      %cst_94 = arith.constant dense<0.000000e+00> : vector<1xf32>
      %199 = vector.multi_reduction <add>, %196, %cst_94 [1] : vector<1x32xf32> to vector<1xf32>
      %200 = vector.shape_cast %199 : vector<1xf32> to vector<1x1xf32>
      %cst_95 = arith.constant 3.200000e+01 : f32
      %201 = vector.broadcast %cst_95 : f32 to vector<1x1xf32>
      %202 = arith.divf %200, %201 : vector<1x1xf32>
      %203 = vector.broadcast %202 : vector<1x1xf32> to vector<1x32xf32>
      %204 = arith.subf %196, %203 : vector<1x32xf32>
      %205 = arith.mulf %204, %204 : vector<1x32xf32>
      %cst_96 = arith.constant dense<0.000000e+00> : vector<1xf32>
      %206 = vector.multi_reduction <add>, %205, %cst_96 [1] : vector<1x32xf32> to vector<1xf32>
      %207 = vector.shape_cast %206 : vector<1xf32> to vector<1x1xf32>
      %cst_97 = arith.constant 3.200000e+01 : f32
      %208 = vector.broadcast %cst_97 : f32 to vector<1x1xf32>
      %209 = arith.divf %207, %208 : vector<1x1xf32>
      %cst_98 = arith.constant 9.99999974E-6 : f32
      %210 = vector.broadcast %cst_98 : f32 to vector<1x1xf32>
      %211 = arith.addf %209, %210 : vector<1x1xf32>
      %212 = math.rsqrt %211 : vector<1x1xf32>
      %213 = vector.broadcast %212 : vector<1x1xf32> to vector<1x32xf32>
      %214 = arith.mulf %204, %213 : vector<1x32xf32>
      %215 = arith.mulf %214, %197 : vector<1x32xf32>
      %216 = arith.addf %215, %198 : vector<1x32xf32>
      %c0_99 = arith.constant 0 : index
      %c0_100 = arith.constant 0 : index
      %217 = vector.load %arg21[%c0_99, %c0_100] : memref<32x10xf32, #tpu.memory_space<vmem>>, vector<32x10xf32>
      %cst_101 = arith.constant dense<0.000000e+00> : vector<1x10xf32>
      %218 = tpu.matmul %216, %217, %cst_101 {dimension_numbers = #tpu.dot_dimension_numbers<[1], [0], [0], [1], [0, 0, 1, 1], [], []>} : vector<1x32xf32>, vector<32x10xf32>, vector<1x10xf32> -> vector<1x10xf32>
      %c0_102 = arith.constant 0 : index
      %c0_103 = arith.constant 0 : index
      %219 = vector.load %arg22[%c0_102, %c0_103] : memref<1x10xf32, #tpu.memory_space<vmem>>, vector<1x10xf32>
      %220 = arith.addf %218, %219 : vector<1x10xf32>
      %c0_104 = arith.constant 0 : index
      %c0_105 = arith.constant 0 : index
      %c0_106 = arith.constant 0 : index
      %221 = vector.load %arg23[%c0_104, %c0_105, %c0_106] : memref<1x1x10xf32, #tpu.memory_space<vmem>>, vector<1x1x10xf32>
      %222 = vector.shape_cast %221 : vector<1x1x10xf32> to vector<1x10xf32>
      %223 = vector.shape_cast %220 : vector<1x10xf32> to vector<1x1x10xf32>
      tpu.vector_store %arg23[%c0_104, %c0_105, %c0_106], %223 {strides = array<i32>} : memref<1x1x10xf32, #tpu.memory_space<vmem>>, vector<1x1x10xf32>,
    } else {
    }
    return
  }
  func.func @transform_0(%arg0: i32, %arg1: i32) -> (i32, i32, i32) {
    %c0_i32 = arith.constant 0 : i32
    %c0_i32_0 = arith.constant 0 : i32
    %c0_i32_1 = arith.constant 0 : i32
    return %arg0, %c0_i32, %c0_i32_0 : i32, i32, i32
  }
  func.func @transform_1(%arg0: i32, %arg1: i32) -> (i32, i32) {
    %c0_i32 = arith.constant 0 : i32
    %c0_i32_0 = arith.constant 0 : i32
    %c0_i32_1 = arith.constant 0 : i32
    return %c0_i32, %c0_i32_0 : i32, i32
  }
  func.func @transform_2(%arg0: i32, %arg1: i32) -> (i32, i32) {
    %c0_i32 = arith.constant 0 : i32
    %c0_i32_0 = arith.constant 0 : i32
    %c0_i32_1 = arith.constant 0 : i32
    return %c0_i32, %c0_i32_0 : i32, i32
  }
  func.func @transform_3(%arg0: i32, %arg1: i32) -> (i32, i32) {
    %c0_i32 = arith.constant 0 : i32
    %c0_i32_0 = arith.constant 0 : i32
    %c0_i32_1 = arith.constant 0 : i32
    return %c0_i32, %c0_i32_0 : i32, i32
  }
  func.func @transform_4(%arg0: i32, %arg1: i32) -> (i32, i32) {
    %c0_i32 = arith.constant 0 : i32
    %c0_i32_0 = arith.constant 0 : i32
    %c0_i32_1 = arith.constant 0 : i32
    return %c0_i32, %c0_i32_0 : i32, i32
  }
  func.func @transform_5(%arg0: i32, %arg1: i32) -> (i32, i32, i32) {
    %c0_i32 = arith.constant 0 : i32
    %c0_i32_0 = arith.constant 0 : i32
    %c0_i32_1 = arith.constant 0 : i32
    return %arg1, %c0_i32, %c0_i32_0 : i32, i32, i32
  }
  func.func @transform_6(%arg0: i32, %arg1: i32) -> (i32, i32, i32) {
    %c0_i32 = arith.constant 0 : i32
    %c0_i32_0 = arith.constant 0 : i32
    %c0_i32_1 = arith.constant 0 : i32
    return %arg1, %c0_i32, %c0_i32_0 : i32, i32, i32
  }
  func.func @transform_7(%arg0: i32, %arg1: i32) -> (i32, i32, i32) {
    %c0_i32 = arith.constant 0 : i32
    %c0_i32_0 = arith.constant 0 : i32
    %c0_i32_1 = arith.constant 0 : i32
    return %arg1, %c0_i32, %c0_i32_0 : i32, i32, i32
  }
  func.func @transform_8(%arg0: i32, %arg1: i32) -> (i32, i32, i32) {
    %c0_i32 = arith.constant 0 : i32
    %c0_i32_0 = arith.constant 0 : i32
    %c0_i32_1 = arith.constant 0 : i32
    return %arg1, %c0_i32, %c0_i32_0 : i32, i32, i32
  }
  func.func @transform_9(%arg0: i32, %arg1: i32) -> (i32, i32, i32) {
    %c0_i32 = arith.constant 0 : i32
    %c0_i32_0 = arith.constant 0 : i32
    %c0_i32_1 = arith.constant 0 : i32
    return %arg1, %c0_i32, %c0_i32_0 : i32, i32, i32
  }
  func.func @transform_10(%arg0: i32, %arg1: i32) -> (i32, i32, i32) {
    %c0_i32 = arith.constant 0 : i32
    %c0_i32_0 = arith.constant 0 : i32
    %c0_i32_1 = arith.constant 0 : i32
    return %arg1, %c0_i32, %c0_i32_0 : i32, i32, i32
  }
  func.func @transform_11(%arg0: i32, %arg1: i32) -> (i32, i32, i32) {
    %c0_i32 = arith.constant 0 : i32
    %c0_i32_0 = arith.constant 0 : i32
    %c0_i32_1 = arith.constant 0 : i32
    return %arg1, %c0_i32, %c0_i32_0 : i32, i32, i32
  }
  func.func @transform_12(%arg0: i32, %arg1: i32) -> (i32, i32, i32) {
    %c0_i32 = arith.constant 0 : i32
    %c0_i32_0 = arith.constant 0 : i32
    %c0_i32_1 = arith.constant 0 : i32
    return %arg1, %c0_i32, %c0_i32_0 : i32, i32, i32
  }
  func.func @transform_13(%arg0: i32, %arg1: i32) -> (i32, i32, i32) {
    %c0_i32 = arith.constant 0 : i32
    %c0_i32_0 = arith.constant 0 : i32
    %c0_i32_1 = arith.constant 0 : i32
    return %arg1, %c0_i32, %c0_i32_0 : i32, i32, i32
  }
  func.func @transform_14(%arg0: i32, %arg1: i32) -> (i32, i32, i32) {
    %c0_i32 = arith.constant 0 : i32
    %c0_i32_0 = arith.constant 0 : i32
    %c0_i32_1 = arith.constant 0 : i32
    return %arg1, %c0_i32, %c0_i32_0 : i32, i32, i32
  }
  func.func @transform_15(%arg0: i32, %arg1: i32) -> (i32, i32, i32) {
    %c0_i32 = arith.constant 0 : i32
    %c0_i32_0 = arith.constant 0 : i32
    %c0_i32_1 = arith.constant 0 : i32
    return %arg1, %c0_i32, %c0_i32_0 : i32, i32, i32
  }
  func.func @transform_16(%arg0: i32, %arg1: i32) -> (i32, i32, i32) {
    %c0_i32 = arith.constant 0 : i32
    %c0_i32_0 = arith.constant 0 : i32
    %c0_i32_1 = arith.constant 0 : i32
    return %arg1, %c0_i32, %c0_i32_0 : i32, i32, i32
  }
  func.func @transform_17(%arg0: i32, %arg1: i32) -> (i32, i32) {
    %c0_i32 = arith.constant 0 : i32
    %c0_i32_0 = arith.constant 0 : i32
    %c0_i32_1 = arith.constant 0 : i32
    return %c0_i32, %c0_i32_0 : i32, i32
  }
  func.func @transform_18(%arg0: i32, %arg1: i32) -> (i32, i32) {
    %c0_i32 = arith.constant 0 : i32
    %c0_i32_0 = arith.constant 0 : i32
    %c0_i32_1 = arith.constant 0 : i32
    return %c0_i32, %c0_i32_0 : i32, i32
  }
  func.func @transform_19(%arg0: i32, %arg1: i32) -> (i32, i32) {
    %c0_i32 = arith.constant 0 : i32
    %c0_i32_0 = arith.constant 0 : i32
    %c0_i32_1 = arith.constant 0 : i32
    return %c0_i32, %c0_i32_0 : i32, i32
  }
  func.func @transform_20(%arg0: i32, %arg1: i32) -> (i32, i32) {
    %c0_i32 = arith.constant 0 : i32
    %c0_i32_0 = arith.constant 0 : i32
    %c0_i32_1 = arith.constant 0 : i32
    return %c0_i32, %c0_i32_0 : i32, i32
  }
  func.func @transform_21(%arg0: i32, %arg1: i32) -> (i32, i32, i32) {
    %c0_i32 = arith.constant 0 : i32
    %c0_i32_0 = arith.constant 0 : i32
    %c0_i32_1 = arith.constant 0 : i32
    return %arg0, %c0_i32, %c0_i32_0 : i32, i32, i32
  }
}

</mosaic_0001>

<llo_original>
// kernel: tpu_custom_call.1
$region0: #{tpu_custom_call.1}
  #allocation0 [shape = 'u32[]', space=smem, size = 0x4, offset = 0x4, fixed_abs, tag = 'smem constant byte address 0x4 - core index']
  #allocation1 [shape = 'u32[144,128]{1,0:T(1,128)}', space=vmem, size = 0x12000, scoped, tag = 'internal scratch']
  %s0 = inlined_call_operand.hbm [shape: f32[8,128], index: 0, kind: input, shape index: {}]
  %s1 = inlined_call_operand.hbm [shape: f32[8,128], index: 1, kind: output, shape index: {}]
  %s2 = sld [smem:[#allocation0]]
  $region18: #{tpu_custom_call.1} parent=0
    _
  %s4 = ssub.s32 1, %s2
  %s5 = scalar_select 0, %s4, %s2
  $region1: #{tpu_custom_call.1} parent=0
    #allocation2 [shape = 'u8[4096]{0}', space=vmem, size = 0x1000, scoped, tag = 'input window, operand 0, single buffered']
    #allocation3 [shape = 's32[1]{0}', space=sflag, size = 0x4, scoped, tag = 'scoped memory for tpu_custom_call.1']
    #allocation4 [shape = 's32[1]{0}', space=sflag, size = 0x4, scoped, tag = 'scoped memory for tpu_custom_call.1']
    #allocation5 [shape = 'u8[4096]{0}', space=vmem, size = 0x1000, scoped, tag = 'output window, operand 0, single buffered']
    %6 = vsyncpa [#allocation3], 0
    %7 = vsyncpa [#allocation4], 0
    // Predicated region
    $region2: #{tpu_custom_call.1} parent=1 // pred_check
      _
    $region3: #{tpu_custom_call.1} parent=1 // pred_check_branch
      %9 = sbr.rel (0) target = $region5
    $region4: #{tpu_custom_call.1} parent=1 // pred_region
      %s11 = ssub.s32 128, 128
      %12 = vsyncadd [#allocation3], %s11
      %s14 = sshll.u32 [#allocation2], 4
      %s15 = int_to_ptr.vmem [resolvable:$true] %s14
      %17 = dma.hbm_to_vmem [thread:$0]  %s0, 128, %s15, [#allocation3]
    $region5: #{tpu_custom_call.1} parent=1 // pred_fallthru
      _
    // Predicated region
    $region6: #{tpu_custom_call.1} parent=1 // pred_check
      _
    $region7: #{tpu_custom_call.1} parent=1 // pred_check_branch
      %19 = sbr.rel (0) target = $region9
    $region8: #{tpu_custom_call.1} parent=1 // pred_region
      %20 = dma.done [#allocation3], 128
    $region9: #{tpu_custom_call.1} parent=1 // pred_fallthru
      _
    %v21 = vld [vmem:[#allocation2] sm:$0xff]
    %v22 = verf.f32.pop %v21
    %23 = vst [vmem:[#allocation5] sm:$0xff] %v22
    // Predicated region
    $region10: #{tpu_custom_call.1} parent=1 // pred_check
      _
    $region11: #{tpu_custom_call.1} parent=1 // pred_check_branch
      %25 = sbr.rel (0) target = $region13
    $region12: #{tpu_custom_call.1} parent=1 // pred_region
      %s27 = ssub.s32 128, 128
      %28 = vsyncadd [#allocation4], %s27
      %s30 = sshll.u32 [#allocation5], 4
      %s31 = int_to_ptr.vmem [resolvable:$true] %s30
      %33 = dma.vmem_to_hbm [thread:$0]  %s31, 128, %s1, [#allocation4]
    $region13: #{tpu_custom_call.1} parent=1 // pred_fallthru
      _
    // Predicated region
    $region14: #{tpu_custom_call.1} parent=1 // pred_check
      _
    $region15: #{tpu_custom_call.1} parent=1 // pred_check_branch
      %35 = sbr.rel (0) target = $region17
    $region16: #{tpu_custom_call.1} parent=1 // pred_region
      %36 = dma.done [#allocation4], 128
    $region17: #{tpu_custom_call.1} parent=1 // pred_fallthru
      _
    %37 = vsyncpa [#allocation3], 1
    %38 = vsyncpa [#allocation4], 1

// kernel: tpu_custom_call.1
$region0: #{tpu_custom_call.1}
  #allocation0 [shape = 'u32[]', space=smem, size = 0x4, offset = 0x4, fixed_abs, tag = 'smem constant byte address 0x4 - core index']
  #allocation1 [shape = 'u32[144,128]{1,0:T(1,128)}', space=vmem, size = 0x12000, scoped, tag = 'internal scratch']
  #allocation2 [shape = 'f32[17,32]{1,0:T(8,128)}', space=vmem, size = 0x3000, scoped, tag = 'scratch operand']
  %s0 = inlined_call_operand.vmem [shape: f32[2,16,48], index: 0, kind: input, shape index: {}]
  %s1 = inlined_call_operand.vmem [shape: f32[1,32], index: 1, kind: input, shape index: {}]
  %s2 = inlined_call_operand.vmem [shape: f32[17,32], index: 2, kind: input, shape index: {}]
  %s3 = inlined_call_operand.vmem [shape: f32[48,32], index: 3, kind: input, shape index: {}]
  %s4 = inlined_call_operand.vmem [shape: f32[1,32], index: 4, kind: input, shape index: {}]
  %s5 = inlined_call_operand.vmem [shape: f32[2,32,96], index: 5, kind: input, shape index: {}]
  %s6 = inlined_call_operand.vmem [shape: f32[2,1,96], index: 6, kind: input, shape index: {}]
  %s7 = inlined_call_operand.vmem [shape: f32[2,32,32], index: 7, kind: input, shape index: {}]
  %s8 = inlined_call_operand.vmem [shape: f32[2,1,32], index: 8, kind: input, shape index: {}]
  %s9 = inlined_call_operand.vmem [shape: f32[2,1,32], index: 9, kind: input, shape index: {}]
  %s10 = inlined_call_operand.vmem [shape: f32[2,1,32], index: 10, kind: input, shape index: {}]
  %s11 = inlined_call_operand.vmem [shape: f32[2,32,128], index: 11, kind: input, shape index: {}]
  %s12 = inlined_call_operand.vmem [shape: f32[2,1,128], index: 12, kind: input, shape index: {}]
  %s13 = inlined_call_operand.vmem [shape: f32[2,128,32], index: 13, kind: input, shape index: {}]
  %s14 = inlined_call_operand.vmem [shape: f32[2,1,32], index: 14, kind: input, shape index: {}]
  %s15 = inlined_call_operand.vmem [shape: f32[2,1,32], index: 15, kind: input, shape index: {}]
  %s16 = inlined_call_operand.vmem [shape: f32[2,1,32], index: 16, kind: input, shape index: {}]
  %s17 = inlined_call_operand.vmem [shape: f32[1,32], index: 17, kind: input, shape index: {}]
  %s18 = inlined_call_operand.vmem [shape: f32[1,32], index: 18, kind: input, shape index: {}]
  %s19 = inlined_call_operand.vmem [shape: f32[32,10], index: 19, kind: input, shape index: {}]
  %s20 = inlined_call_operand.vmem [shape: f32[1,10], index: 20, kind: input, shape index: {}]
  %s21 = inlined_call_operand.hbm [shape: f32[2,1,10], index: 21, kind: output, shape index: {}]
  %s22 = sld [smem:[#allocation0]]
  $region125: #{tpu_custom_call.1} parent=0
    _
  %s24 = ssub.s32 1, %s22
  %s25 = scalar_select 0, %s24, %s22
  $region1: #{tpu_custom_call.1} parent=0
    #allocation3 [shape = 'u8[1024]{0}', space=vmem, size = 0x400, scoped, tag = 'output window, operand 0']
    #allocation4 [shape = 's32[2]{0}', space=sflag, size = 0x8, scoped, tag = 'scoped memory for tpu_custom_call.1']
    %26 = vsyncpa [#allocation4], 0
    %s27 = scalar_lea.sflag [#allocation4], 1
    %28 = vsyncpa %s27, 0
    loop: start=0, step=1, limit=6
    $region2: #{tpu_custom_call.1} parent=1 // loop_pre_header
      _
    $region3: #{tpu_custom_call.1} parent=1 // loop_header
      %s30 = sphi 0, %s34
      %p31 = scmp.ge.s32.totalorder %s30, 6
      %s37 = sphi 0, %s49
      %s38 = sphi 0, %s45
      %s39 = sphi 0, %s37
      %s40 = sphi 0, %s38
      %s41 = sphi 0, %s39
      %s42 = sphi 0, %s40
      %s52 = sphi 0, %s54
      %s55 = sphi 0, %s52
      %s56 = sphi 0, %s55
      %s72 = sphi 0, %s56
      %s76 = sphi 0, %s76
      %s78 = sphi 0, %s76
      %s79 = sphi 0, %s78
      %s93 = sphi 0, %s79
      %s97 = sphi 0, %s97
      %s99 = sphi 0, %s97
      %s100 = sphi 0, %s99
      %s114 = sphi 0, %s100
      %s118 = sphi 0, %s118
      %s120 = sphi 0, %s118
      %s121 = sphi 0, %s120
      %s135 = sphi 0, %s121
      %s139 = sphi 0, %s139
      %s141 = sphi 0, %s139
      %s142 = sphi 0, %s141
      %s156 = sphi 0, %s142
      %s162 = sphi 0, %s164
      %s165 = sphi 0, %s162
      %s166 = sphi 0, %s165
      %s182 = sphi 0, %s166
      %s188 = sphi 0, %s190
      %s191 = sphi 0, %s188
      %s192 = sphi 0, %s191
      %s208 = sphi 0, %s192
      %s214 = sphi 0, %s216
      %s217 = sphi 0, %s214
      %s218 = sphi 0, %s217
      %s234 = sphi 0, %s218
      %s240 = sphi 0, %s242
      %s243 = sphi 0, %s240
      %s244 = sphi 0, %s243
      %s260 = sphi 0, %s244
      %s266 = sphi 0, %s268
      %s269 = sphi 0, %s266
      %s270 = sphi 0, %s269
      %s286 = sphi 0, %s270
      %s292 = sphi 0, %s294
      %s295 = sphi 0, %s292
      %s296 = sphi 0, %s295
      %s312 = sphi 0, %s296
      %s318 = sphi 0, %s320
      %s321 = sphi 0, %s318
      %s322 = sphi 0, %s321
      %s338 = sphi 0, %s322
      %s344 = sphi 0, %s346
      %s347 = sphi 0, %s344
      %s348 = sphi 0, %s347
      %s364 = sphi 0, %s348
      %s370 = sphi 0, %s372
      %s373 = sphi 0, %s370
      %s374 = sphi 0, %s373
      %s390 = sphi 0, %s374
      %s396 = sphi 0, %s398
      %s399 = sphi 0, %s396
      %s400 = sphi 0, %s399
      %s416 = sphi 0, %s400
      %s422 = sphi 0, %s424
      %s425 = sphi 0, %s422
      %s426 = sphi 0, %s425
      %s442 = sphi 0, %s426
      %s448 = sphi 0, %s450
      %s451 = sphi 0, %s448
      %s452 = sphi 0, %s451
      %s468 = sphi 0, %s452
      %s472 = sphi 0, %s472
      %s474 = sphi 0, %s472
      %s475 = sphi 0, %s474
      %s489 = sphi 0, %s475
      %s493 = sphi 0, %s493
      %s495 = sphi 0, %s493
      %s496 = sphi 0, %s495
      %s510 = sphi 0, %s496
      %s514 = sphi 0, %s514
      %s516 = sphi 0, %s514
      %s517 = sphi 0, %s516
      %s531 = sphi 0, %s517
      %s535 = sphi 0, %s535
      %s537 = sphi 0, %s535
      %s538 = sphi 0, %s537
      %s552 = sphi 0, %s538
      %s558 = sphi 0, %s560
      %s561 = sphi 0, %s558
      %s562 = sphi 0, %s561
      %s578 = sphi 0, %s562
    $region4: #{tpu_custom_call.1} parent=1 // loop_header_branch
      %33 = sbr.rel (%p31) target = $region8
    $region5: #{tpu_custom_call.1} parent=1 // loop_body
      %s35 = ssub.s32 %s30, 1
      %s36 = ssub.s32 %s30, 2
      %s43 = sadd.s32 1, %s38
      %p44 = scmp.ge.s32.totalorder %s43, 2
      %s45 = scalar_select %p44, 0, %s43
      %s46 = sadd.s32 1, %s37
      %s47 = scalar_select %p44, %s46, %s37
      %p48 = scmp.ge.s32.totalorder %s47, 2
      %s49 = scalar_select %p48, 0, %s47
      %s50 = ssub.s32 %s37, %s49
      %p51 = scmp.eq.s32.totalorder %s50, 0
      %s53 = sadd.s32 %s52, 1
      %s54 = scalar_select %p51, %s52, %s53
      %p57 = pneg %p51
      %p58 = scmp.eq.s32.totalorder %s30, 3
      %p59 = por %p57, %p58
      %p60 = scmp.ne.s32.totalorder %s52, %s55
      %p61 = scmp.eq.s32.totalorder %s30, 0
      %p62 = por %p60, %p61
      %p63 = scmp.ne.s32.totalorder %s52, %s55
      %p64 = scmp.eq.s32.totalorder %s35, 3
      %p65 = por %p63, %p64
      %p66 = scmp.ne.s32.totalorder %s55, %s56
      %p67 = scmp.eq.s32.totalorder %s35, 0
      %p68 = por %p66, %p67
      %p69 = scmp.ne.s32.totalorder %s55, %s56
      %p70 = scmp.eq.s32.totalorder %s36, 3
      %p71 = por %p69, %p70
      %p73 = scmp.ne.s32.totalorder %s56, %s72
      %p74 = scmp.eq.s32.totalorder %s36, 0
      %p75 = por %p73, %p74
      %s77 = sadd.s32 %s76, 1
      %p80 = scmp.eq.s32.totalorder %s30, 3
      %p81 = scmp.ne.s32.totalorder %s76, %s78
      %p82 = scmp.eq.s32.totalorder %s30, 0
      %p83 = por %p81, %p82
      %p84 = scmp.ne.s32.totalorder %s76, %s78
      %p85 = scmp.eq.s32.totalorder %s35, 3
      %p86 = por %p84, %p85
      %p87 = scmp.ne.s32.totalorder %s78, %s79
      %p88 = scmp.eq.s32.totalorder %s35, 0
      %p89 = por %p87, %p88
      %p90 = scmp.ne.s32.totalorder %s78, %s79
      %p91 = scmp.eq.s32.totalorder %s36, 3
      %p92 = por %p90, %p91
      %p94 = scmp.ne.s32.totalorder %s79, %s93
      %p95 = scmp.eq.s32.totalorder %s36, 0
      %p96 = por %p94, %p95
      %s98 = sadd.s32 %s97, 1
      %p101 = scmp.eq.s32.totalorder %s30, 3
      %p102 = scmp.ne.s32.totalorder %s97, %s99
      %p103 = scmp.eq.s32.totalorder %s30, 0
      %p104 = por %p102, %p103
      %p105 = scmp.ne.s32.totalorder %s97, %s99
      %p106 = scmp.eq.s32.totalorder %s35, 3
      %p107 = por %p105, %p106
      %p108 = scmp.ne.s32.totalorder %s99, %s100
      %p109 = scmp.eq.s32.totalorder %s35, 0
      %p110 = por %p108, %p109
      %p111 = scmp.ne.s32.totalorder %s99, %s100
      %p112 = scmp.eq.s32.totalorder %s36, 3
      %p113 = por %p111, %p112
      %p115 = scmp.ne.s32.totalorder %s100, %s114
      %p116 = scmp.eq.s32.totalorder %s36, 0
      %p117 = por %p115, %p116
      %s119 = sadd.s32 %s118, 1
      %p122 = scmp.eq.s32.totalorder %s30, 3
      %p123 = scmp.ne.s32.totalorder %s118, %s120
      %p124 = scmp.eq.s32.totalorder %s30, 0
      %p125 = por %p123, %p124
      %p126 = scmp.ne.s32.totalorder %s118, %s120
      %p127 = scmp.eq.s32.totalorder %s35, 3
      %p128 = por %p126, %p127
      %p129 = scmp.ne.s32.totalorder %s120, %s121
      %p130 = scmp.eq.s32.totalorder %s35, 0
      %p131 = por %p129, %p130
      %p132 = scmp.ne.s32.totalorder %s120, %s121
      %p133 = scmp.eq.s32.totalorder %s36, 3
      %p134 = por %p132, %p133
      %p136 = scmp.ne.s32.totalorder %s121, %s135
      %p137 = scmp.eq.s32.totalorder %s36, 0
      %p138 = por %p136, %p137
      %s140 = sadd.s32 %s139, 1
      %p143 = scmp.eq.s32.totalorder %s30, 3
      %p144 = scmp.ne.s32.totalorder %s139, %s141
      %p145 = scmp.eq.s32.totalorder %s30, 0
      %p146 = por %p144, %p145
      %p147 = scmp.ne.s32.totalorder %s139, %s141
      %p148 = scmp.eq.s32.totalorder %s35, 3
      %p149 = por %p147, %p148
      %p150 = scmp.ne.s32.totalorder %s141, %s142
      %p151 = scmp.eq.s32.totalorder %s35, 0
      %p152 = por %p150, %p151
      %p153 = scmp.ne.s32.totalorder %s141, %s142
      %p154 = scmp.eq.s32.totalorder %s36, 3
      %p155 = por %p153, %p154
      %p157 = scmp.ne.s32.totalorder %s142, %s156
      %p158 = scmp.eq.s32.totalorder %s36, 0
      %p159 = por %p157, %p158
      %s160 = ssub.s32 %s38, %s45
      %p161 = scmp.eq.s32.totalorder %s160, 0
      %s163 = sadd.s32 %s162, 1
      %s164 = scalar_select %p161, %s162, %s163
      %p167 = pneg %p161
      %p168 = scmp.eq.s32.totalorder %s30, 3
      %p169 = por %p167, %p168
      %p170 = scmp.ne.s32.totalorder %s162, %s165
      %p171 = scmp.eq.s32.totalorder %s30, 0
      %p172 = por %p170, %p171
      %p173 = scmp.ne.s32.totalorder %s162, %s165
      %p174 = scmp.eq.s32.totalorder %s35, 3
      %p175 = por %p173, %p174
      %p176 = scmp.ne.s32.totalorder %s165, %s166
      %p177 = scmp.eq.s32.totalorder %s35, 0
      %p178 = por %p176, %p177
      %p179 = scmp.ne.s32.totalorder %s165, %s166
      %p180 = scmp.eq.s32.totalorder %s36, 3
      %p181 = por %p179, %p180
      %p183 = scmp.ne.s32.totalorder %s166, %s182
      %p184 = scmp.eq.s32.totalorder %s36, 0
      %p185 = por %p183, %p184
      %s186 = ssub.s32 %s38, %s45
      %p187 = scmp.eq.s32.totalorder %s186, 0
      %s189 = sadd.s32 %s188, 1
      %s190 = scalar_select %p187, %s188, %s189
      %p193 = pneg %p187
      %p194 = scmp.eq.s32.totalorder %s30, 3
      %p195 = por %p193, %p194
      %p196 = scmp.ne.s32.totalorder %s188, %s191
      %p197 = scmp.eq.s32.totalorder %s30, 0
      %p198 = por %p196, %p197
      %p199 = scmp.ne.s32.totalorder %s188, %s191
      %p200 = scmp.eq.s32.totalorder %s35, 3
      %p201 = por %p199, %p200
      %p202 = scmp.ne.s32.totalorder %s191, %s192
      %p203 = scmp.eq.s32.totalorder %s35, 0
      %p204 = por %p202, %p203
      %p205 = scmp.ne.s32.totalorder %s191, %s192
      %p206 = scmp.eq.s32.totalorder %s36, 3
      %p207 = por %p205, %p206
      %p209 = scmp.ne.s32.totalorder %s192, %s208
      %p210 = scmp.eq.s32.totalorder %s36, 0
      %p211 = por %p209, %p210
      %s212 = ssub.s32 %s38, %s45
      %p213 = scmp.eq.s32.totalorder %s212, 0
      %s215 = sadd.s32 %s214, 1
      %s216 = scalar_select %p213, %s214, %s215
      %p219 = pneg %p213
      %p220 = scmp.eq.s32.totalorder %s30, 3
      %p221 = por %p219, %p220
      %p222 = scmp.ne.s32.totalorder %s214, %s217
      %p223 = scmp.eq.s32.totalorder %s30, 0
      %p224 = por %p222, %p223
      %p225 = scmp.ne.s32.totalorder %s214, %s217
      %p226 = scmp.eq.s32.totalorder %s35, 3
      %p227 = por %p225, %p226
      %p228 = scmp.ne.s32.totalorder %s217, %s218
      %p229 = scmp.eq.s32.totalorder %s35, 0
      %p230 = por %p228, %p229
      %p231 = scmp.ne.s32.totalorder %s217, %s218
      %p232 = scmp.eq.s32.totalorder %s36, 3
      %p233 = por %p231, %p232
      %p235 = scmp.ne.s32.totalorder %s218, %s234
      %p236 = scmp.eq.s32.totalorder %s36, 0
      %p237 = por %p235, %p236
      %s238 = ssub.s32 %s38, %s45
      %p239 = scmp.eq.s32.totalorder %s238, 0
      %s241 = sadd.s32 %s240, 1
      %s242 = scalar_select %p239, %s240, %s241
      %p245 = pneg %p239
      %p246 = scmp.eq.s32.totalorder %s30, 3
      %p247 = por %p245, %p246
      %p248 = scmp.ne.s32.totalorder %s240, %s243
      %p249 = scmp.eq.s32.totalorder %s30, 0
      %p250 = por %p248, %p249
      %p251 = scmp.ne.s32.totalorder %s240, %s243
      %p252 = scmp.eq.s32.totalorder %s35, 3
      %p253 = por %p251, %p252
      %p254 = scmp.ne.s32.totalorder %s243, %s244
      %p255 = scmp.eq.s32.totalorder %s35, 0
      %p256 = por %p254, %p255
      %p257 = scmp.ne.s32.totalorder %s243, %s244
      %p258 = scmp.eq.s32.totalorder %s36, 3
      %p259 = por %p257, %p258
      %p261 = scmp.ne.s32.totalorder %s244, %s260
      %p262 = scmp.eq.s32.totalorder %s36, 0
      %p263 = por %p261, %p262
      %s264 = ssub.s32 %s38, %s45
      %p265 = scmp.eq.s32.totalorder %s264, 0
      %s267 = sadd.s32 %s266, 1
      %s268 = scalar_select %p265, %s266, %s267
      %p271 = pneg %p265
      %p272 = scmp.eq.s32.totalorder %s30, 3
      %p273 = por %p271, %p272
      %p274 = scmp.ne.s32.totalorder %s266, %s269
      %p275 = scmp.eq.s32.totalorder %s30, 0
      %p276 = por %p274, %p275
      %p277 = scmp.ne.s32.totalorder %s266, %s269
      %p278 = scmp.eq.s32.totalorder %s35, 3
      %p279 = por %p277, %p278
      %p280 = scmp.ne.s32.totalorder %s269, %s270
      %p281 = scmp.eq.s32.totalorder %s35, 0
      %p282 = por %p280, %p281
      %p283 = scmp.ne.s32.totalorder %s269, %s270
      %p284 = scmp.eq.s32.totalorder %s36, 3
      %p285 = por %p283, %p284
      %p287 = scmp.ne.s32.totalorder %s270, %s286
      %p288 = scmp.eq.s32.totalorder %s36, 0
      %p289 = por %p287, %p288
      %s290 = ssub.s32 %s38, %s45
      %p291 = scmp.eq.s32.totalorder %s290, 0
      %s293 = sadd.s32 %s292, 1
      %s294 = scalar_select %p291, %s292, %s293
      %p297 = pneg %p291
      %p298 = scmp.eq.s32.totalorder %s30, 3
      %p299 = por %p297, %p298
      %p300 = scmp.ne.s32.totalorder %s292, %s295
      %p301 = scmp.eq.s32.totalorder %s30, 0
      %p302 = por %p300, %p301
      %p303 = scmp.ne.s32.totalorder %s292, %s295
      %p304 = scmp.eq.s32.totalorder %s35, 3
      %p305 = por %p303, %p304
      %p306 = scmp.ne.s32.totalorder %s295, %s296
      %p307 = scmp.eq.s32.totalorder %s35, 0
      %p308 = por %p306, %p307
      %p309 = scmp.ne.s32.totalorder %s295, %s296
      %p310 = scmp.eq.s32.totalorder %s36, 3
      %p311 = por %p309, %p310
      %p313 = scmp.ne.s32.totalorder %s296, %s312
      %p314 = scmp.eq.s32.totalorder %s36, 0
      %p315 = por %p313, %p314
      %s316 = ssub.s32 %s38, %s45
      %p317 = scmp.eq.s32.totalorder %s316, 0
      %s319 = sadd.s32 %s318, 1
      %s320 = scalar_select %p317, %s318, %s319
      %p323 = pneg %p317
      %p324 = scmp.eq.s32.totalorder %s30, 3
      %p325 = por %p323, %p324
      %p326 = scmp.ne.s32.totalorder %s318, %s321
      %p327 = scmp.eq.s32.totalorder %s30, 0
      %p328 = por %p326, %p327
      %p329 = scmp.ne.s32.totalorder %s318, %s321
      %p330 = scmp.eq.s32.totalorder %s35, 3
      %p331 = por %p329, %p330
      %p332 = scmp.ne.s32.totalorder %s321, %s322
      %p333 = scmp.eq.s32.totalorder %s35, 0
      %p334 = por %p332, %p333
      %p335 = scmp.ne.s32.totalorder %s321, %s322
      %p336 = scmp.eq.s32.totalorder %s36, 3
      %p337 = por %p335, %p336
      %p339 = scmp.ne.s32.totalorder %s322, %s338
      %p340 = scmp.eq.s32.totalorder %s36, 0
      %p341 = por %p339, %p340
      %s342 = ssub.s32 %s38, %s45
      %p343 = scmp.eq.s32.totalorder %s342, 0
      %s345 = sadd.s32 %s344, 1
      %s346 = scalar_select %p343, %s344, %s345
      %p349 = pneg %p343
      %p350 = scmp.eq.s32.totalorder %s30, 3
      %p351 = por %p349, %p350
      %p352 = scmp.ne.s32.totalorder %s344, %s347
      %p353 = scmp.eq.s32.totalorder %s30, 0
      %p354 = por %p352, %p353
      %p355 = scmp.ne.s32.totalorder %s344, %s347
      %p356 = scmp.eq.s32.totalorder %s35, 3
      %p357 = por %p355, %p356
      %p358 = scmp.ne.s32.totalorder %s347, %s348
      %p359 = scmp.eq.s32.totalorder %s35, 0
      %p360 = por %p358, %p359
      %p361 = scmp.ne.s32.totalorder %s347, %s348
      %p362 = scmp.eq.s32.totalorder %s36, 3
      %p363 = por %p361, %p362
      %p365 = scmp.ne.s32.totalorder %s348, %s364
      %p366 = scmp.eq.s32.totalorder %s36, 0
      %p367 = por %p365, %p366
      %s368 = ssub.s32 %s38, %s45
      %p369 = scmp.eq.s32.totalorder %s368, 0
      %s371 = sadd.s32 %s370, 1
      %s372 = scalar_select %p369, %s370, %s371
      %p375 = pneg %p369
      %p376 = scmp.eq.s32.totalorder %s30, 3
      %p377 = por %p375, %p376
      %p378 = scmp.ne.s32.totalorder %s370, %s373
      %p379 = scmp.eq.s32.totalorder %s30, 0
      %p380 = por %p378, %p379
      %p381 = scmp.ne.s32.totalorder %s370, %s373
      %p382 = scmp.eq.s32.totalorder %s35, 3
      %p383 = por %p381, %p382
      %p384 = scmp.ne.s32.totalorder %s373, %s374
      %p385 = scmp.eq.s32.totalorder %s35, 0
      %p386 = por %p384, %p385
      %p387 = scmp.ne.s32.totalorder %s373, %s374
      %p388 = scmp.eq.s32.totalorder %s36, 3
      %p389 = por %p387, %p388
      %p391 = scmp.ne.s32.totalorder %s374, %s390
      %p392 = scmp.eq.s32.totalorder %s36, 0
      %p393 = por %p391, %p392
      %s394 = ssub.s32 %s38, %s45
      %p395 = scmp.eq.s32.totalorder %s394, 0
      %s397 = sadd.s32 %s396, 1
      %s398 = scalar_select %p395, %s396, %s397
      %p401 = pneg %p395
      %p402 = scmp.eq.s32.totalorder %s30, 3
      %p403 = por %p401, %p402
      %p404 = scmp.ne.s32.totalorder %s396, %s399
      %p405 = scmp.eq.s32.totalorder %s30, 0
      %p406 = por %p404, %p405
      %p407 = scmp.ne.s32.totalorder %s396, %s399
      %p408 = scmp.eq.s32.totalorder %s35, 3
      %p409 = por %p407, %p408
      %p410 = scmp.ne.s32.totalorder %s399, %s400
      %p411 = scmp.eq.s32.totalorder %s35, 0
      %p412 = por %p410, %p411
      %p413 = scmp.ne.s32.totalorder %s399, %s400
      %p414 = scmp.eq.s32.totalorder %s36, 3
      %p415 = por %p413, %p414
      %p417 = scmp.ne.s32.totalorder %s400, %s416
      %p418 = scmp.eq.s32.totalorder %s36, 0
      %p419 = por %p417, %p418
      %s420 = ssub.s32 %s38, %s45
      %p421 = scmp.eq.s32.totalorder %s420, 0
      %s423 = sadd.s32 %s422, 1
      %s424 = scalar_select %p421, %s422, %s423
      %p427 = pneg %p421
      %p428 = scmp.eq.s32.totalorder %s30, 3
      %p429 = por %p427, %p428
      %p430 = scmp.ne.s32.totalorder %s422, %s425
      %p431 = scmp.eq.s32.totalorder %s30, 0
      %p432 = por %p430, %p431
      %p433 = scmp.ne.s32.totalorder %s422, %s425
      %p434 = scmp.eq.s32.totalorder %s35, 3
      %p435 = por %p433, %p434
      %p436 = scmp.ne.s32.totalorder %s425, %s426
      %p437 = scmp.eq.s32.totalorder %s35, 0
      %p438 = por %p436, %p437
      %p439 = scmp.ne.s32.totalorder %s425, %s426
      %p440 = scmp.eq.s32.totalorder %s36, 3
      %p441 = por %p439, %p440
      %p443 = scmp.ne.s32.totalorder %s426, %s442
      %p444 = scmp.eq.s32.totalorder %s36, 0
      %p445 = por %p443, %p444
      %s446 = ssub.s32 %s38, %s45
      %p447 = scmp.eq.s32.totalorder %s446, 0
      %s449 = sadd.s32 %s448, 1
      %s450 = scalar_select %p447, %s448, %s449
      %p453 = pneg %p447
      %p454 = scmp.eq.s32.totalorder %s30, 3
      %p455 = por %p453, %p454
      %p456 = scmp.ne.s32.totalorder %s448, %s451
      %p457 = scmp.eq.s32.totalorder %s30, 0
      %p458 = por %p456, %p457
      %p459 = scmp.ne.s32.totalorder %s448, %s451
      %p460 = scmp.eq.s32.totalorder %s35, 3
      %p461 = por %p459, %p460
      %p462 = scmp.ne.s32.totalorder %s451, %s452
      %p463 = scmp.eq.s32.totalorder %s35, 0
      %p464 = por %p462, %p463
      %p465 = scmp.ne.s32.totalorder %s451, %s452
      %p466 = scmp.eq.s32.totalorder %s36, 3
      %p467 = por %p465, %p466
      %p469 = scmp.ne.s32.totalorder %s452, %s468
      %p470 = scmp.eq.s32.totalorder %s36, 0
      %p471 = por %p469, %p470
      %s473 = sadd.s32 %s472, 1
      %p476 = scmp.eq.s32.totalorder %s30, 3
      %p477 = scmp.ne.s32.totalorder %s472, %s474
      %p478 = scmp.eq.s32.totalorder %s30, 0
      %p479 = por %p477, %p478
      %p480 = scmp.ne.s32.totalorder %s472, %s474
      %p481 = scmp.eq.s32.totalorder %s35, 3
      %p482 = por %p480, %p481
      %p483 = scmp.ne.s32.totalorder %s474, %s475
      %p484 = scmp.eq.s32.totalorder %s35, 0
      %p485 = por %p483, %p484
      %p486 = scmp.ne.s32.totalorder %s474, %s475
      %p487 = scmp.eq.s32.totalorder %s36, 3
      %p488 = por %p486, %p487
      %p490 = scmp.ne.s32.totalorder %s475, %s489
      %p491 = scmp.eq.s32.totalorder %s36, 0
      %p492 = por %p490, %p491
      %s494 = sadd.s32 %s493, 1
      %p497 = scmp.eq.s32.totalorder %s30, 3
      %p498 = scmp.ne.s32.totalorder %s493, %s495
      %p499 = scmp.eq.s32.totalorder %s30, 0
      %p500 = por %p498, %p499
      %p501 = scmp.ne.s32.totalorder %s493, %s495
      %p502 = scmp.eq.s32.totalorder %s35, 3
      %p503 = por %p501, %p502
      %p504 = scmp.ne.s32.totalorder %s495, %s496
      %p505 = scmp.eq.s32.totalorder %s35, 0
      %p506 = por %p504, %p505
      %p507 = scmp.ne.s32.totalorder %s495, %s496
      %p508 = scmp.eq.s32.totalorder %s36, 3
      %p509 = por %p507, %p508
      %p511 = scmp.ne.s32.totalorder %s496, %s510
      %p512 = scmp.eq.s32.totalorder %s36, 0
      %p513 = por %p511, %p512
      %s515 = sadd.s32 %s514, 1
      %p518 = scmp.eq.s32.totalorder %s30, 3
      %p519 = scmp.ne.s32.totalorder %s514, %s516
      %p520 = scmp.eq.s32.totalorder %s30, 0
      %p521 = por %p519, %p520
      %p522 = scmp.ne.s32.totalorder %s514, %s516
      %p523 = scmp.eq.s32.totalorder %s35, 3
      %p524 = por %p522, %p523
      %p525 = scmp.ne.s32.totalorder %s516, %s517
      %p526 = scmp.eq.s32.totalorder %s35, 0
      %p527 = por %p525, %p526
      %p528 = scmp.ne.s32.totalorder %s516, %s517
      %p529 = scmp.eq.s32.totalorder %s36, 3
      %p530 = por %p528, %p529
      %p532 = scmp.ne.s32.totalorder %s517, %s531
      %p533 = scmp.eq.s32.totalorder %s36, 0
      %p534 = por %p532, %p533
      %s536 = sadd.s32 %s535, 1
      %p539 = scmp.eq.s32.totalorder %s30, 3
      %p540 = scmp.ne.s32.totalorder %s535, %s537
      %p541 = scmp.eq.s32.totalorder %s30, 0
      %p542 = por %p540, %p541
      %p543 = scmp.ne.s32.totalorder %s535, %s537
      %p544 = scmp.eq.s32.totalorder %s35, 3
      %p545 = por %p543, %p544
      %p546 = scmp.ne.s32.totalorder %s537, %s538
      %p547 = scmp.eq.s32.totalorder %s35, 0
      %p548 = por %p546, %p547
      %p549 = scmp.ne.s32.totalorder %s537, %s538
      %p550 = scmp.eq.s32.totalorder %s36, 3
      %p551 = por %p549, %p550
      %p553 = scmp.ne.s32.totalorder %s538, %s552
      %p554 = scmp.eq.s32.totalorder %s36, 0
      %p555 = por %p553, %p554
      %s556 = ssub.s32 %s37, %s49
      %p557 = scmp.eq.s32.totalorder %s556, 0
      %s559 = sadd.s32 %s558, 1
      %s560 = scalar_select %p557, %s558, %s559
      %p563 = pneg %p557
      %p564 = scmp.eq.s32.totalorder %s30, 3
      %p565 = por %p563, %p564
      %p566 = scmp.ne.s32.totalorder %s558, %s561
      %p567 = scmp.eq.s32.totalorder %s30, 0
      %p568 = por %p566, %p567
      %p569 = scmp.ne.s32.totalorder %s558, %s561
      %p570 = scmp.eq.s32.totalorder %s35, 3
      %p571 = por %p569, %p570
      %p572 = scmp.ne.s32.totalorder %s561, %s562
      %p573 = scmp.eq.s32.totalorder %s35, 0
      %p574 = por %p572, %p573
      %p575 = scmp.ne.s32.totalorder %s561, %s562
      %p576 = scmp.eq.s32.totalorder %s36, 3
      %p577 = por %p575, %p576
      %p579 = scmp.ne.s32.totalorder %s562, %s578
      %p580 = scmp.eq.s32.totalorder %s36, 0
      %p581 = por %p579, %p580
      %p582 = scmp.le.s32.totalorder 1, %s30
      %p583 = scmp.lt.s32.totalorder %s30, 5
      %p584 = pnand %p582, %p583
      %p585 = pneg %p584
      // Predicated region
      $region9: #{tpu_custom_call.1} parent=5 // pred_check
        _
      $region10: #{tpu_custom_call.1} parent=5 // pred_check_branch
        %587 = sbr.rel (%p584) target = $region12
      $region11: #{tpu_custom_call.1} parent=5 // pred_region
        %s588 = ssub.s32 %s30, 1
        // Predicated region
        $region13: #{tpu_custom_call.1} parent=11 // pred_check
          %p589 = pneg %p89
        $region14: #{tpu_custom_call.1} parent=11 // pred_check_branch
          %591 = sbr.rel (%p589) target = $region16
        $region15: #{tpu_custom_call.1} parent=11 // pred_region
          _
        $region16: #{tpu_custom_call.1} parent=11 // pred_fallthru
          _
        // Predicated region
        $region17: #{tpu_custom_call.1} parent=11 // pred_check
          %p592 = pneg %p110
        $region18: #{tpu_custom_call.1} parent=11 // pred_check_branch
          %594 = sbr.rel (%p592) target = $region20
        $region19: #{tpu_custom_call.1} parent=11 // pred_region
          _
        $region20: #{tpu_custom_call.1} parent=11 // pred_fallthru
          _
        // Predicated region
        $region21: #{tpu_custom_call.1} parent=11 // pred_check
          %p595 = pneg %p131
        $region22: #{tpu_custom_call.1} parent=11 // pred_check_branch
          %597 = sbr.rel (%p595) target = $region24
        $region23: #{tpu_custom_call.1} parent=11 // pred_region
          _
        $region24: #{tpu_custom_call.1} parent=11 // pred_fallthru
          _
        // Predicated region
        $region25: #{tpu_custom_call.1} parent=11 // pred_check
          %p598 = pneg %p152
        $region26: #{tpu_custom_call.1} parent=11 // pred_check_branch
          %600 = sbr.rel (%p598) target = $region28
        $region27: #{tpu_custom_call.1} parent=11 // pred_region
          _
        $region28: #{tpu_custom_call.1} parent=11 // pred_fallthru
          _
        // Predicated region
        $region29: #{tpu_custom_call.1} parent=11 // pred_check
          %p601 = pneg %p485
        $region30: #{tpu_custom_call.1} parent=11 // pred_check_branch
          %603 = sbr.rel (%p601) target = $region32
        $region31: #{tpu_custom_call.1} parent=11 // pred_region
          _
        $region32: #{tpu_custom_call.1} parent=11 // pred_fallthru
          _
        // Predicated region
        $region33: #{tpu_custom_call.1} parent=11 // pred_check
          %p604 = pneg %p506
        $region34: #{tpu_custom_call.1} parent=11 // pred_check_branch
          %606 = sbr.rel (%p604) target = $region36
        $region35: #{tpu_custom_call.1} parent=11 // pred_region
          _
        $region36: #{tpu_custom_call.1} parent=11 // pred_fallthru
          _
        // Predicated region
        $region37: #{tpu_custom_call.1} parent=11 // pred_check
          %p607 = pneg %p527
        $region38: #{tpu_custom_call.1} parent=11 // pred_check_branch
          %609 = sbr.rel (%p607) target = $region40
        $region39: #{tpu_custom_call.1} parent=11 // pred_region
          _
        $region40: #{tpu_custom_call.1} parent=11 // pred_fallthru
          _
        // Predicated region
        $region41: #{tpu_custom_call.1} parent=11 // pred_check
          %p610 = pneg %p548
        $region42: #{tpu_custom_call.1} parent=11 // pred_check_branch
          %612 = sbr.rel (%p610) target = $region44
        $region43: #{tpu_custom_call.1} parent=11 // pred_region
          _
        $region44: #{tpu_custom_call.1} parent=11 // pred_fallthru
          _
      $region12: #{tpu_custom_call.1} parent=5 // pred_fallthru
        _
      %p613 = scmp.lt.s32.totalorder %s30, 4
      // Predicated region
      $region45: #{tpu_custom_call.1} parent=5 // pred_check
        %p614 = pneg %p613
      $region46: #{tpu_custom_call.1} parent=5 // pred_check_branch
        %616 = sbr.rel (%p614) target = $region48
      $region47: #{tpu_custom_call.1} parent=5 // pred_region
        // Predicated region
        $region49: #{tpu_custom_call.1} parent=47 // pred_check
          %p617 = pneg %p62
        $region50: #{tpu_custom_call.1} parent=47 // pred_check_branch
          %619 = sbr.rel (%p617) target = $region52
        $region51: #{tpu_custom_call.1} parent=47 // pred_region
          %p620 = scmp.lt.s32.totalorder %s37, 1
          %s621 = scalar_select %p620, %s37, 1
          %s622 = smul.addr %s621, 2
          %s623 = smul.addr %s622, 8
          %s624 = scalar_lea.vmem %s0, %s623
        $region52: #{tpu_custom_call.1} parent=47 // pred_fallthru
          _
        // Predicated region
        $region53: #{tpu_custom_call.1} parent=47 // pred_check
          %p625 = pneg %p172
        $region54: #{tpu_custom_call.1} parent=47 // pred_check_branch
          %627 = sbr.rel (%p625) target = $region56
        $region55: #{tpu_custom_call.1} parent=47 // pred_region
          %p628 = scmp.lt.s32.totalorder %s38, 1
          %s629 = scalar_select %p628, %s38, 1
          %s630 = smul.addr %s629, 4
          %s631 = smul.addr %s630, 8
          %s632 = scalar_lea.vmem %s5, %s631
        $region56: #{tpu_custom_call.1} parent=47 // pred_fallthru
          _
        // Predicated region
        $region57: #{tpu_custom_call.1} parent=47 // pred_check
          %p633 = pneg %p198
        $region58: #{tpu_custom_call.1} parent=47 // pred_check_branch
          %635 = sbr.rel (%p633) target = $region60
        $region59: #{tpu_custom_call.1} parent=47 // pred_region
          %p636 = scmp.lt.s32.totalorder %s38, 1
          %s637 = scalar_select %p636, %s38, 1
          %s638 = scalar_lea.vmem %s6, %s637
        $region60: #{tpu_custom_call.1} parent=47 // pred_fallthru
          _
        // Predicated region
        $region61: #{tpu_custom_call.1} parent=47 // pred_check
          %p639 = pneg %p224
        $region62: #{tpu_custom_call.1} parent=47 // pred_check_branch
          %641 = sbr.rel (%p639) target = $region64
        $region63: #{tpu_custom_call.1} parent=47 // pred_region
          %p642 = scmp.lt.s32.totalorder %s38, 1
          %s643 = scalar_select %p642, %s38, 1
          %s644 = smul.addr %s643, 4
          %s645 = smul.addr %s644, 8
          %s646 = scalar_lea.vmem %s7, %s645
        $region64: #{tpu_custom_call.1} parent=47 // pred_fallthru
          _
        // Predicated region
        $region65: #{tpu_custom_call.1} parent=47 // pred_check
          %p647 = pneg %p250
        $region66: #{tpu_custom_call.1} parent=47 // pred_check_branch
          %649 = sbr.rel (%p647) target = $region68
        $region67: #{tpu_custom_call.1} parent=47 // pred_region
          %p650 = scmp.lt.s32.totalorder %s38, 1
          %s651 = scalar_select %p650, %s38, 1
          %s652 = scalar_lea.vmem %s8, %s651
        $region68: #{tpu_custom_call.1} parent=47 // pred_fallthru
          _
        // Predicated region
        $region69: #{tpu_custom_call.1} parent=47 // pred_check
          %p653 = pneg %p276
        $region70: #{tpu_custom_call.1} parent=47 // pred_check_branch
          %655 = sbr.rel (%p653) target = $region72
        $region71: #{tpu_custom_call.1} parent=47 // pred_region
          %p656 = scmp.lt.s32.totalorder %s38, 1
          %s657 = scalar_select %p656, %s38, 1
          %s658 = scalar_lea.vmem %s9, %s657
        $region72: #{tpu_custom_call.1} parent=47 // pred_fallthru
          _
        // Predicated region
        $region73: #{tpu_custom_call.1} parent=47 // pred_check
          %p659 = pneg %p302
        $region74: #{tpu_custom_call.1} parent=47 // pred_check_branch
          %661 = sbr.rel (%p659) target = $region76
        $region75: #{tpu_custom_call.1} parent=47 // pred_region
          %p662 = scmp.lt.s32.totalorder %s38, 1
          %s663 = scalar_select %p662, %s38, 1
          %s664 = scalar_lea.vmem %s10, %s663
        $region76: #{tpu_custom_call.1} parent=47 // pred_fallthru
          _
        // Predicated region
        $region77: #{tpu_custom_call.1} parent=47 // pred_check
          %p665 = pneg %p328
        $region78: #{tpu_custom_call.1} parent=47 // pred_check_branch
          %667 = sbr.rel (%p665) target = $region80
        $region79: #{tpu_custom_call.1} parent=47 // pred_region
          %p668 = scmp.lt.s32.totalorder %s38, 1
          %s669 = scalar_select %p668, %s38, 1
          %s670 = smul.addr %s669, 4
          %s671 = smul.addr %s670, 8
          %s672 = scalar_lea.vmem %s11, %s671
        $region80: #{tpu_custom_call.1} parent=47 // pred_fallthru
          _
        // Predicated region
        $region81: #{tpu_custom_call.1} parent=47 // pred_check
          %p673 = pneg %p354
        $region82: #{tpu_custom_call.1} parent=47 // pred_check_branch
          %675 = sbr.rel (%p673) target = $region84
        $region83: #{tpu_custom_call.1} parent=47 // pred_region
          %p676 = scmp.lt.s32.totalorder %s38, 1
          %s677 = scalar_select %p676, %s38, 1
          %s678 = scalar_lea.vmem %s12, %s677
        $region84: #{tpu_custom_call.1} parent=47 // pred_fallthru
          _
        // Predicated region
        $region85: #{tpu_custom_call.1} parent=47 // pred_check
          %p679 = pneg %p380
        $region86: #{tpu_custom_call.1} parent=47 // pred_check_branch
          %681 = sbr.rel (%p679) target = $region88
        $region87: #{tpu_custom_call.1} parent=47 // pred_region
          %p682 = scmp.lt.s32.totalorder %s38, 1
          %s683 = scalar_select %p682, %s38, 1
          %s684 = smul.addr %s683, 16
          %s685 = smul.addr %s684, 8
          %s686 = scalar_lea.vmem %s13, %s685
        $region88: #{tpu_custom_call.1} parent=47 // pred_fallthru
          _
        // Predicated region
        $region89: #{tpu_custom_call.1} parent=47 // pred_check
          %p687 = pneg %p406
        $region90: #{tpu_custom_call.1} parent=47 // pred_check_branch
          %689 = sbr.rel (%p687) target = $region92
        $region91: #{tpu_custom_call.1} parent=47 // pred_region
          %p690 = scmp.lt.s32.totalorder %s38, 1
          %s691 = scalar_select %p690, %s38, 1
          %s692 = scalar_lea.vmem %s14, %s691
        $region92: #{tpu_custom_call.1} parent=47 // pred_fallthru
          _
        // Predicated region
        $region93: #{tpu_custom_call.1} parent=47 // pred_check
          %p693 = pneg %p432
        $region94: #{tpu_custom_call.1} parent=47 // pred_check_branch
          %695 = sbr.rel (%p693) target = $region96
        $region95: #{tpu_custom_call.1} parent=47 // pred_region
          %p696 = scmp.lt.s32.totalorder %s38, 1
          %s697 = scalar_select %p696, %s38, 1
          %s698 = scalar_lea.vmem %s15, %s697
        $region96: #{tpu_custom_call.1} parent=47 // pred_fallthru
          _
        // Predicated region
        $region97: #{tpu_custom_call.1} parent=47 // pred_check
          %p699 = pneg %p458
        $region98: #{tpu_custom_call.1} parent=47 // pred_check_branch
          %701 = sbr.rel (%p699) target = $region100
        $region99: #{tpu_custom_call.1} parent=47 // pred_region
          %p702 = scmp.lt.s32.totalorder %s38, 1
          %s703 = scalar_select %p702, %s38, 1
          %s704 = scalar_lea.vmem %s16, %s703
        $region100: #{tpu_custom_call.1} parent=47 // pred_fallthru
          _
      $region48: #{tpu_custom_call.1} parent=5 // pred_fallthru
        _
      %p705 = scmp.le.s32.totalorder 1, %s30
      %p706 = scmp.lt.s32.totalorder %s30, 5
      %p707 = pnand %p705, %p706
      %p708 = pneg %p707
      // Predicated region
      $region101: #{tpu_custom_call.1} parent=5 // pred_check
        _
      $region102: #{tpu_custom_call.1} parent=5 // pred_check_branch
        %710 = sbr.rel (%p707) target = $region104
      $region103: #{tpu_custom_call.1} parent=5 // pred_region
        %s711 = ssub.s32 %s30, 1
        %p712 = scmp.lt.s32.totalorder %s39, 1
        %s713 = scalar_select %p712, %s39, 1
        %s714 = smul.addr %s713, 2
        %s715 = smul.addr %s714, 8
        %s716 = scalar_lea.vmem %s0, %s715
        %p717 = pneg %p68
        %p718 = pneg %p65
        %p719 = pneg %p89
        %p720 = pneg %p86
        %p721 = pneg %p110
        %p722 = pneg %p107
        %p723 = pneg %p131
        %p724 = pneg %p128
        %p725 = pneg %p152
        %p726 = pneg %p149
        %p727 = scmp.lt.s32.totalorder %s40, 1
        %s728 = scalar_select %p727, %s40, 1
        %s729 = smul.addr %s728, 4
        %s730 = smul.addr %s729, 8
        %s731 = scalar_lea.vmem %s5, %s730
        %p732 = pneg %p178
        %p733 = pneg %p175
        %p734 = scmp.lt.s32.totalorder %s40, 1
        %s735 = scalar_select %p734, %s40, 1
        %s736 = scalar_lea.vmem %s6, %s735
        %p737 = pneg %p204
        %p738 = pneg %p201
        %p739 = scmp.lt.s32.totalorder %s40, 1
        %s740 = scalar_select %p739, %s40, 1
        %s741 = smul.addr %s740, 4
        %s742 = smul.addr %s741, 8
        %s743 = scalar_lea.vmem %s7, %s742
        %p744 = pneg %p230
        %p745 = pneg %p227
        %p746 = scmp.lt.s32.totalorder %s40, 1
        %s747 = scalar_select %p746, %s40, 1
        %s748 = scalar_lea.vmem %s8, %s747
        %p749 = pneg %p256
        %p750 = pneg %p253
        %p751 = scmp.lt.s32.totalorder %s40, 1
        %s752 = scalar_select %p751, %s40, 1
        %s753 = scalar_lea.vmem %s9, %s752
        %p754 = pneg %p282
        %p755 = pneg %p279
        %p756 = scmp.lt.s32.totalorder %s40, 1
        %s757 = scalar_select %p756, %s40, 1
        %s758 = scalar_lea.vmem %s10, %s757
        %p759 = pneg %p308
        %p760 = pneg %p305
        %p761 = scmp.lt.s32.totalorder %s40, 1
        %s762 = scalar_select %p761, %s40, 1
        %s763 = smul.addr %s762, 4
        %s764 = smul.addr %s763, 8
        %s765 = scalar_lea.vmem %s11, %s764
        %p766 = pneg %p334
        %p767 = pneg %p331
        %p768 = scmp.lt.s32.totalorder %s40, 1
        %s769 = scalar_select %p768, %s40, 1
        %s770 = scalar_lea.vmem %s12, %s769
        %p771 = pneg %p360
        %p772 = pneg %p357
        %p773 = scmp.lt.s32.totalorder %s40, 1
        %s774 = scalar_select %p773, %s40, 1
        %s775 = smul.addr %s774, 16
        %s776 = smul.addr %s775, 8
        %s777 = scalar_lea.vmem %s13, %s776
        %p778 = pneg %p386
        %p779 = pneg %p383
        %p780 = scmp.lt.s32.totalorder %s40, 1
        %s781 = scalar_select %p780, %s40, 1
        %s782 = scalar_lea.vmem %s14, %s781
        %p783 = pneg %p412
        %p784 = pneg %p409
        %p785 = scmp.lt.s32.totalorder %s40, 1
        %s786 = scalar_select %p785, %s40, 1
        %s787 = scalar_lea.vmem %s15, %s786
        %p788 = pneg %p438
        %p789 = pneg %p435
        %p790 = scmp.lt.s32.totalorder %s40, 1
        %s791 = scalar_select %p790, %s40, 1
        %s792 = scalar_lea.vmem %s16, %s791
        %p793 = pneg %p464
        %p794 = pneg %p461
        %p795 = pneg %p485
        %p796 = pneg %p482
        %p797 = pneg %p506
        %p798 = pneg %p503
        %p799 = pneg %p527
        %p800 = pneg %p524
        %p801 = pneg %p548
        %p802 = pneg %p545
        %p803 = pneg %p574
        %p804 = pneg %p571
        %s805 = sand.u32 %s561, 1
        %s806 = scalar_lea.sflag [#allocation4], %s805
        %s807 = sand.u32 %s561, 1
        %s808 = scalar_lea.vmem [#allocation3], %s807
        %p809 = scmp.lt.s32.totalorder %s39, 1
        %s810 = scalar_select %p809, %s39, 1
        %s811 = smul.addr %s810, 2
        %s812 = smul.addr %s811, 8
        %s813 = scalar_lea.vmem %s0, %s812
        %p814 = scmp.lt.s32.totalorder %s40, 1
        %s815 = scalar_select %p814, %s40, 1
        %s816 = smul.addr %s815, 4
        %s817 = smul.addr %s816, 8
        %s818 = scalar_lea.vmem %s5, %s817
        %p819 = scmp.lt.s32.totalorder %s40, 1
        %s820 = scalar_select %p819, %s40, 1
        %s821 = scalar_lea.vmem %s6, %s820
        %p822 = scmp.lt.s32.totalorder %s40, 1
        %s823 = scalar_select %p822, %s40, 1
        %s824 = smul.addr %s823, 4
        %s825 = smul.addr %s824, 8
        %s826 = scalar_lea.vmem %s7, %s825
        %p827 = scmp.lt.s32.totalorder %s40, 1
        %s828 = scalar_select %p827, %s40, 1
        %s829 = scalar_lea.vmem %s8, %s828
        %p830 = scmp.lt.s32.totalorder %s40, 1
        %s831 = scalar_select %p830, %s40, 1
        %s832 = scalar_lea.vmem %s9, %s831
        %p833 = scmp.lt.s32.totalorder %s40, 1
        %s834 = scalar_select %p833, %s40, 1
        %s835 = scalar_lea.vmem %s10, %s834
        %p836 = scmp.lt.s32.totalorder %s40, 1
        %s837 = scalar_select %p836, %s40, 1
        %s838 = smul.addr %s837, 4
        %s839 = smul.addr %s838, 8
        %s840 = scalar_lea.vmem %s11, %s839
        %p841 = scmp.lt.s32.totalorder %s40, 1
        %s842 = scalar_select %p841, %s40, 1
        %s843 = scalar_lea.vmem %s12, %s842
        %p844 = scmp.lt.s32.totalorder %s40, 1
        %s845 = scalar_select %p844, %s40, 1
        %s846 = smul.addr %s845, 16
        %s847 = smul.addr %s846, 8
        %s848 = scalar_lea.vmem %s13, %s847
        %p849 = scmp.lt.s32.totalorder %s40, 1
        %s850 = scalar_select %p849, %s40, 1
        %s851 = scalar_lea.vmem %s14, %s850
        %p852 = scmp.lt.s32.totalorder %s40, 1
        %s853 = scalar_select %p852, %s40, 1
        %s854 = scalar_lea.vmem %s15, %s853
        %p855 = scmp.lt.s32.totalorder %s40, 1
        %s856 = scalar_select %p855, %s40, 1
        %s857 = scalar_lea.vmem %s16, %s856
        %p858 = scmp.eq.s32.totalorder %s40, 0
        // Predicated region
        $region105: #{tpu_custom_call.1} parent=103 // pred_check
          %p859 = pneg %p858
        $region106: #{tpu_custom_call.1} parent=103 // pred_check_branch
          %861 = sbr.rel (%p859) target = $region108
        $region107: #{tpu_custom_call.1} parent=103 // pred_region
          %v862 = vld [vmem:[%s813] sm:$0xff]
          %v863 = vld [vmem:[%s813 + $0x8] sm:$0xff]
          %v864 = vld [vmem:[%s3] sm:$0xff]
          %v865 = vld [vmem:[%s3 + $0x8] sm:$0xff]
          %v866 = vld [vmem:[%s3 + $0x10] sm:$0xff]
          %v867 = vld [vmem:[%s3 + $0x18] sm:$0xff]
          %v868 = vld [vmem:[%s3 + $0x20] sm:$0xff]
          %v869 = vld [vmem:[%s3 + $0x28] sm:$0xff]
          %v870 = vld [vmem:[%s4] sm:$0x1]
          %v872 = vlaneseq
          %v873 = vshrl.u32 %v872, 7
          %v874 = vsub.s32 0, %v873
          %v875 = vrot.slane %v870, %v874
          %vm877 = vcmask 392192
          %v879 = vsel %vm877, %v862, 0
          %v882 = vsel %vm877, %v863, 0
          %884 = vmatprep.subr.mxu0 0.0
          %885 = vmatpush1.msra.mxu0 %v864
          %886 = vmatprep.subr.mxu0 0.0
          %887 = vmatpush1.msra.mxu0 %v865
          %888 = vmatprep.subr.mxu0 0.0
          %889 = vmatpush1.msra.mxu0 %v866
          %890 = vmatprep.subr.mxu0 0.0
          %891 = vmatpush1.msra.mxu0 %v867
          %892 = vmatprep.subr.mxu0 0.0
          %893 = vmatpush1.msra.mxu0 %v868
          %894 = vmatprep.subr.mxu0 0.0
          %895 = vmatpush1.msra.mxu0 %v869
          %896 = vmatprep.subr.mxu0 0.0
          %897 = vmatpush1.msra.mxu0 0.0
          %898 = vmatprep.subr.mxu0 0.0
          %899 = vmatpush1.msra.mxu0 0.0
          %900 = vmatprep.subr.mxu0 0.0
          %901 = vmatpush1.msra.mxu0 0.0
          %902 = vmatprep.subr.mxu0 0.0
          %903 = vmatpush1.msra.mxu0 0.0
          %904 = vmatprep.subr.mxu0 0.0
          %905 = vmatpush1.msra.mxu0 0.0
          %906 = vmatprep.subr.mxu0 0.0
          %907 = vmatpush1.msra.mxu0 0.0
          %908 = vmatprep.subr.mxu0 0.0
          %909 = vmatpush1.msra.mxu0 0.0
          %910 = vmatprep.subr.mxu0 0.0
          %911 = vmatpush1.msra.mxu0 0.0
          %912 = vmatprep.subr.mxu0 0.0
          %913 = vmatpush1.msra.mxu0 0.0
          %914 = vmatprep.subr.mxu0 0.0
          %915 = vmatpush1.msra.mxu0 0.0
          %916 = vmatprep.subr.mxu0 0.0
          %917 = vmatpush1.msra.mxu0 0.0
          %918 = vmatprep.subr.mxu0 0.0
          %919 = vmatpush1.msra.mxu0 0.0
          %920 = vmatprep.subr.mxu0 0.0
          %921 = vmatpush1.msra.mxu0 0.0
          %922 = vmatprep.subr.mxu0 0.0
          %923 = vmatpush1.msra.mxu0 0.0
          %924 = vmatprep.subr.mxu0 0.0
          %925 = vmatpush1.msra.mxu0 0.0
          %926 = vmatprep.subr.mxu0 0.0
          %927 = vmatpush1.msra.mxu0 0.0
          %928 = vmatprep.subr.mxu0 0.0
          %929 = vmatpush1.msra.mxu0 0.0
          %930 = vmatprep.subr.mxu0 0.0
          %931 = vmatpush1.msra.mxu0 0.0
          %932 = vmatprep.subr.mxu0 0.0
          %933 = vmatpush1.msra.mxu0 0.0
          %934 = vmatprep.subr.mxu0 0.0
          %935 = vmatpush1.msra.mxu0 0.0
          %936 = vmatprep.subr.mxu0 0.0
          %937 = vmatpush1.msra.mxu0 0.0
          %938 = vmatprep.subr.mxu0 0.0
          %939 = vmatpush1.msra.mxu0 0.0
          %940 = vmatprep.subr.mxu0 0.0
          %941 = vmatpush1.msra.mxu0 0.0
          %942 = vmatprep.subr.mxu0 0.0
          %943 = vmatpush1.msra.mxu0 0.0
          %944 = vmatprep.subr.mxu0 0.0
          %945 = vmatpush1.msra.mxu0 0.0
          %946 = vmatprep.subr.mxu0 0.0
          %947 = vmatpush1.msra.mxu0 0.0
          %948 = vmatprep.mubr.f32.mxu0 0.0
          %949 = vmatmul.mubr.f32.gmra.mrb[0].mxu0 %v879
          %v950 = vpop.f32.mrb[0].mxu0
          %v951 = vadd.f32 %v875, %v950
          %v952 = vpop.f32.mrb[0].mxu0
          %953 = vmatprep.mubr.f32.mxu0 0.0
          %954 = vmatmul.mubr.f32.gmra.mrb[0].mxu0 %v882
          %v955 = vpop.f32.mrb[0].mxu0
          %v956 = vadd.f32 %v875, %v955
          %v957 = vpop.f32.mrb[0].mxu0
          %958 = vdwg.mxu0
          %v959 = vld [vmem:[%s1] sm:$0x1]
          %vm962 = vcmask 1040384
          %v963 = vrot.slane %v951, 7
          %v964 = vrot.slane %v956, 7
          %v965 = vsel %vm962, %v963, %v964
          %v969 = vsel %vm962, %v959, %v963
          %v970 = vld [vmem:[%s2] sm:$0xff]
          %v971 = vld [vmem:[%s2 + $0x8] sm:$0xff]
          %v972 = vld [vmem:[%s2 + $0x10] sm:$0x1]
          %v973 = vadd.f32 %v969, %v970
          %v974 = vadd.f32 %v965, %v971
          %v975 = vadd.f32 %v964, %v972
          %vm976 = vcmask 261120
          %977 = vst.msk [vmem:[#allocation2] sm:$0xff] %vm976, %v973
          %978 = vst.msk [vmem:[#allocation2 + $0x8] sm:$0xff] %vm976, %v974
          %vm979 = vcmask 253952
          %980 = vst.msk [vmem:[#allocation2 + $0x10] sm:$0x1] %vm979, %v975
        $region108: #{tpu_custom_call.1} parent=103 // pred_fallthru
          _
        %v981 = vld [vmem:[#allocation2] sm:$0xff]
        %v982 = vld [vmem:[#allocation2 + $0x8] sm:$0xff]
        %v983 = vld [vmem:[#allocation2 + $0x10] sm:$0x1]
        %v984 = vld [vmem:[%s818] sm:$0xff]
        %v985 = vld [vmem:[%s818 + $0x8] sm:$0xff]
        %v986 = vld [vmem:[%s818 + $0x10] sm:$0xff]
        %v987 = vld [vmem:[%s818 + $0x18] sm:$0xff]
        %v988 = vld [vmem:[%s821] sm:$0x1]
        %v990 = vlaneseq
        %v991 = vshrl.u32 %v990, 7
        %v992 = vsub.s32 0, %v991
        %v993 = vrot.slane %v988, %v992
        %vm995 = vcmask 261120
        %v997 = vsel %vm995, %v981, 0
        %v1000 = vsel %vm995, %v982, 0
        %v1003 = vsel %vm995, %v983, 0
        %1005 = vmatprep.subr.mxu0 0.0
        %1006 = vmatpush1.msra.mxu0 %v984
        %1007 = vmatprep.subr.mxu0 0.0
        %1008 = vmatpush1.msra.mxu0 %v985
        %1009 = vmatprep.subr.mxu0 0.0
        %1010 = vmatpush1.msra.mxu0 %v986
        %1011 = vmatprep.subr.mxu0 0.0
        %1012 = vmatpush1.msra.mxu0 %v987
        %1013 = vmatprep.subr.mxu0 0.0
        %1014 = vmatpush1.msra.mxu0 0.0
        %1015 = vmatprep.subr.mxu0 0.0
        %1016 = vmatpush1.msra.mxu0 0.0
        %1017 = vmatprep.subr.mxu0 0.0
        %1018 = vmatpush1.msra.mxu0 0.0
        %1019 = vmatprep.subr.mxu0 0.0
        %1020 = vmatpush1.msra.mxu0 0.0
        %1021 = vmatprep.subr.mxu0 0.0
        %1022 = vmatpush1.msra.mxu0 0.0
        %1023 = vmatprep.subr.mxu0 0.0
        %1024 = vmatpush1.msra.mxu0 0.0
        %1025 = vmatprep.subr.mxu0 0.0
        %1026 = vmatpush1.msra.mxu0 0.0
        %1027 = vmatprep.subr.mxu0 0.0
        %1028 = vmatpush1.msra.mxu0 0.0
        %1029 = vmatprep.subr.mxu0 0.0
        %1030 = vmatpush1.msra.mxu0 0.0
        %1031 = vmatprep.subr.mxu0 0.0
        %1032 = vmatpush1.msra.mxu0 0.0
        %1033 = vmatprep.subr.mxu0 0.0
        %1034 = vmatpush1.msra.mxu0 0.0
        %1035 = vmatprep.subr.mxu0 0.0
        %1036 = vmatpush1.msra.mxu0 0.0
        %1037 = vmatprep.subr.mxu0 0.0
        %1038 = vmatpush1.msra.mxu0 0.0
        %1039 = vmatprep.subr.mxu0 0.0
        %1040 = vmatpush1.msra.mxu0 0.0
        %1041 = vmatprep.subr.mxu0 0.0
        %1042 = vmatpush1.msra.mxu0 0.0
        %1043 = vmatprep.subr.mxu0 0.0
        %1044 = vmatpush1.msra.mxu0 0.0
        %1045 = vmatprep.subr.mxu0 0.0
        %1046 = vmatpush1.msra.mxu0 0.0
        %1047 = vmatprep.subr.mxu0 0.0
        %1048 = vmatpush1.msra.mxu0 0.0
        %1049 = vmatprep.subr.mxu0 0.0
        %1050 = vmatpush1.msra.mxu0 0.0
        %1051 = vmatprep.subr.mxu0 0.0
        %1052 = vmatpush1.msra.mxu0 0.0
        %1053 = vmatprep.subr.mxu0 0.0
        %1054 = vmatpush1.msra.mxu0 0.0
        %1055 = vmatprep.subr.mxu0 0.0
        %1056 = vmatpush1.msra.mxu0 0.0
        %1057 = vmatprep.subr.mxu0 0.0
        %1058 = vmatpush1.msra.mxu0 0.0
        %1059 = vmatprep.subr.mxu0 0.0
        %1060 = vmatpush1.msra.mxu0 0.0
        %1061 = vmatprep.subr.mxu0 0.0
        %1062 = vmatpush1.msra.mxu0 0.0
        %1063 = vmatprep.subr.mxu0 0.0
        %1064 = vmatpush1.msra.mxu0 0.0
        %1065 = vmatprep.subr.mxu0 0.0
        %1066 = vmatpush1.msra.mxu0 0.0
        %1067 = vmatprep.subr.mxu0 0.0
        %1068 = vmatpush1.msra.mxu0 0.0
        %1069 = vmatprep.mubr.f32.mxu0 0.0
        %1070 = vmatmul.mubr.f32.gmra.mrb[0].mxu0 %v997
        %v1071 = vpop.f32.mrb[0].mxu0
        %v1072 = vadd.f32 %v993, %v1071
        %v1073 = vpop.f32.mrb[0].mxu0
        %1074 = vmatprep.mubr.f32.mxu0 0.0
        %1075 = vmatmul.mubr.f32.gmra.mrb[0].mxu0 %v1000
        %v1076 = vpop.f32.mrb[0].mxu0
        %v1077 = vadd.f32 %v993, %v1076
        %v1078 = vpop.f32.mrb[0].mxu0
        %1079 = vmatprep.mubr.f32.mxu0 0.0
        %1080 = vmatmul.mubr.f32.gmra.mrb[0].mxu0 %v1003
        %v1081 = vpop.f32.mrb[0].mxu0
        %v1082 = vadd.f32 %v993, %v1081
        %v1083 = vpop.f32.mrb[0].mxu0
        %1084 = vdwg.mxu0
        %v1085 = vmul.f32 %v1072, 0.35355338
        %v1086 = vmul.f32 %v1077, 0.35355338
        %v1087 = vmul.f32 %v1082, 0.35355338
        %1091 = vrot.lane.b32.xlu0 %v1072, 96
        %v1092 = vpop.permute.xlu0 %1091
        %1093 = vrot.lane.b32.xlu0 %v1077, 96
        %v1094 = vpop.permute.xlu0 %1093
        %1095 = vrot.lane.b32.xlu0 %v1082, 96
        %v1096 = vpop.permute.xlu0 %1095
        %vm1097 = vcmask 64512
        %v1099 = vsel %vm1097, %v1085, 0
        %v1102 = vsel %vm1097, %v1086, 0
        %v1105 = vsel %vm1097, %v1087, 0
        %v1107 = vsel %vm1097, %v1092, 0
        %v1109 = vsel %vm1097, %v1094, 0
        %v1111 = vsel %vm1097, %v1096, 0
        %1113 = vmatprep.subr.mxu0 0.0
        %1114 = vmatpush1.xpose.msra.mxu0 %v1107
        %1115 = vmatprep.subr.mxu0 0.0
        %1116 = vmatpush1.xpose.msra.mxu0 %v1109
        %1117 = vmatprep.subr.mxu0 0.0
        %1118 = vmatpush1.xpose.msra.mxu0 %v1111
        %1119 = vmatprep.subr.mxu0 0.0
        %1120 = vmatpush1.xpose.msra.mxu0 0.0
        %1121 = vmatprep.subr.mxu0 0.0
        %1122 = vmatpush1.xpose.msra.mxu0 0.0
        %1123 = vmatprep.subr.mxu0 0.0
        %1124 = vmatpush1.xpose.msra.mxu0 0.0
        %1125 = vmatprep.subr.mxu0 0.0
        %1126 = vmatpush1.xpose.msra.mxu0 0.0
        %1127 = vmatprep.subr.mxu0 0.0
        %1128 = vmatpush1.xpose.msra.mxu0 0.0
        %1129 = vmatprep.subr.mxu0 0.0
        %1130 = vmatpush1.xpose.msra.mxu0 0.0
        %1131 = vmatprep.subr.mxu0 0.0
        %1132 = vmatpush1.xpose.msra.mxu0 0.0
        %1133 = vmatprep.subr.mxu0 0.0
        %1134 = vmatpush1.xpose.msra.mxu0 0.0
        %1135 = vmatprep.subr.mxu0 0.0
        %1136 = vmatpush1.xpose.msra.mxu0 0.0
        %1137 = vmatprep.subr.mxu0 0.0
        %1138 = vmatpush1.xpose.msra.mxu0 0.0
        %1139 = vmatprep.subr.mxu0 0.0
        %1140 = vmatpush1.xpose.msra.mxu0 0.0
        %1141 = vmatprep.subr.mxu0 0.0
        %1142 = vmatpush1.xpose.msra.mxu0 0.0
        %1143 = vmatprep.subr.mxu0 0.0
        %1144 = vmatpush1.xpose.msra.mxu0 0.0
        %1145 = vmatprep.subr.mxu0 0.0
        %1146 = vmatpush1.xpose.msra.mxu0 0.0
        %1147 = vmatprep.subr.mxu0 0.0
        %1148 = vmatpush1.xpose.msra.mxu0 0.0
        %1149 = vmatprep.subr.mxu0 0.0
        %1150 = vmatpush1.xpose.msra.mxu0 0.0
        %1151 = vmatprep.subr.mxu0 0.0
        %1152 = vmatpush1.xpose.msra.mxu0 0.0
        %1153 = vmatprep.subr.mxu0 0.0
        %1154 = vmatpush1.xpose.msra.mxu0 0.0
        %1155 = vmatprep.subr.mxu0 0.0
        %1156 = vmatpush1.xpose.msra.mxu0 0.0
        %1157 = vmatprep.subr.mxu0 0.0
        %1158 = vmatpush1.xpose.msra.mxu0 0.0
        %1159 = vmatprep.subr.mxu0 0.0
        %1160 = vmatpush1.xpose.msra.mxu0 0.0
        %1161 = vmatprep.subr.mxu0 0.0
        %1162 = vmatpush1.xpose.msra.mxu0 0.0
        %1163 = vmatprep.subr.mxu0 0.0
        %1164 = vmatpush1.xpose.msra.mxu0 0.0
        %1165 = vmatprep.subr.mxu0 0.0
        %1166 = vmatpush1.xpose.msra.mxu0 0.0
        %1167 = vmatprep.subr.mxu0 0.0
        %1168 = vmatpush1.xpose.msra.mxu0 0.0
        %1169 = vmatprep.subr.mxu0 0.0
        %1170 = vmatpush1.xpose.msra.mxu0 0.0
        %1171 = vmatprep.subr.mxu0 0.0
        %1172 = vmatpush1.xpose.msra.mxu0 0.0
        %1173 = vmatprep.subr.mxu0 0.0
        %1174 = vmatpush1.xpose.msra.mxu0 0.0
        %1175 = vmatprep.subr.mxu0 0.0
        %1176 = vmatpush1.xpose.msra.mxu0 0.0
        %1177 = vmatprep.mubr.f32.mxu0 0.0
        %1178 = vmatmul.mubr.f32.gmra.mrb[0].mxu0 %v1099
        %v1179 = vpop.f32.mrb[0].mxu0
        %v1180 = vadd.f32 0.0, %v1179
        %v1181 = vpop.f32.mrb[0].mxu0
        %1182 = vmatprep.mubr.f32.mxu0 0.0
        %1183 = vmatmul.mubr.f32.gmra.mrb[0].mxu0 %v1102
        %v1184 = vpop.f32.mrb[0].mxu0
        %v1185 = vadd.f32 0.0, %v1184
        %v1186 = vpop.f32.mrb[0].mxu0
        %1187 = vmatprep.mubr.f32.mxu0 0.0
        %1188 = vmatmul.mubr.f32.gmra.mrb[0].mxu0 %v1105
        %v1189 = vpop.f32.mrb[0].mxu0
        %v1190 = vadd.f32 0.0, %v1189
        %v1191 = vpop.f32.mrb[0].mxu0
        %1192 = vdwg.mxu0
        %vm1193 = vcmask 138240
        %v1194 = vsel %vm1193, %v1180, -inf
        %1195 = vmax.xlane.f32.xlu0 %v1194
        %v1196 = vpop.xlane.xlu0 %1195
        %v1197 = vsel %vm1193, %v1185, -inf
        %1198 = vmax.xlane.f32.xlu0 %v1197
        %v1199 = vpop.xlane.xlu0 %1198
        %vm1200 = vcmask 131072
        %v1201 = vsel %vm1200, %v1190, -inf
        %1202 = vmax.xlane.f32.xlu0 %v1201
        %v1203 = vpop.xlane.xlu0 %1202
        %v1204 = vsub.f32 %v1180, %v1196
        %v1205 = vsub.f32 %v1185, %v1199
        %v1206 = vsub.f32 %v1190, %v1203
        %v1207 = vmul.f32 %v1204, 1.442695
        %v1208 = vpow.pop %v1207
        %v1209 = vmul.f32 %v1205, 1.442695
        %v1210 = vpow.pop %v1209
        %v1211 = vmul.f32 %v1206, 1.442695
        %v1212 = vpow.pop %v1211
        %v1213 = vsel %vm1193, %v1208, 0.0
        %1214 = vadd.xlane.f32.xlu0 %v1213
        %v1215 = vpop.xlane.xlu0 %1214
        %v1216 = vsel %vm1193, %v1210, 0.0
        %1217 = vadd.xlane.f32.xlu0 %v1216
        %v1218 = vpop.xlane.xlu0 %1217
        %v1219 = vsel %vm1200, %v1212, 0.0
        %1220 = vadd.xlane.f32.xlu0 %v1219
        %v1221 = vpop.xlane.xlu0 %1220
        %v1222 = vrcp.pop %v1215
        %v1223 = vrcp.pop %v1218
        %v1224 = vrcp.pop %v1221
        %v1225 = vmul.f32 %v1208, %v1222
        %v1226 = vmul.f32 %v1210, %v1223
        %v1227 = vmul.f32 %v1212, %v1224
        %1228 = vrot.lane.b32.xlu0 %v1072, 64
        %v1229 = vpop.permute.xlu0 %1228
        %1230 = vrot.lane.b32.xlu0 %v1077, 64
        %v1231 = vpop.permute.xlu0 %1230
        %1232 = vrot.lane.b32.xlu0 %v1082, 64
        %v1233 = vpop.permute.xlu0 %1232
        %v1237 = vsel %vm1193, %v1225, 0
        %v1240 = vsel %vm1193, %v1226, 0
        %v1243 = vsel %vm1193, %v1227, 0
        %vm1245 = vcmask 1040384
        %v1246 = vsel %vm1245, %v1233, 0
        %1248 = vmatprep.subr.mxu0 0.0
        %1249 = vmatpush1.msra.mxu0 %v1229
        %1250 = vmatprep.subr.mxu0 0.0
        %1251 = vmatpush1.msra.mxu0 %v1231
        %1252 = vmatprep.subr.mxu0 0.0
        %1253 = vmatpush1.msra.mxu0 %v1246
        %1254 = vmatprep.subr.mxu0 0.0
        %1255 = vmatpush1.msra.mxu0 0.0
        %1256 = vmatprep.subr.mxu0 0.0
        %1257 = vmatpush1.msra.mxu0 0.0
        %1258 = vmatprep.subr.mxu0 0.0
        %1259 = vmatpush1.msra.mxu0 0.0
        %1260 = vmatprep.subr.mxu0 0.0
        %1261 = vmatpush1.msra.mxu0 0.0
        %1262 = vmatprep.subr.mxu0 0.0
        %1263 = vmatpush1.msra.mxu0 0.0
        %1264 = vmatprep.subr.mxu0 0.0
        %1265 = vmatpush1.msra.mxu0 0.0
        %1266 = vmatprep.subr.mxu0 0.0
        %1267 = vmatpush1.msra.mxu0 0.0
        %1268 = vmatprep.subr.mxu0 0.0
        %1269 = vmatpush1.msra.mxu0 0.0
        %1270 = vmatprep.subr.mxu0 0.0
        %1271 = vmatpush1.msra.mxu0 0.0
        %1272 = vmatprep.subr.mxu0 0.0
        %1273 = vmatpush1.msra.mxu0 0.0
        %1274 = vmatprep.subr.mxu0 0.0
        %1275 = vmatpush1.msra.mxu0 0.0
        %1276 = vmatprep.subr.mxu0 0.0
        %1277 = vmatpush1.msra.mxu0 0.0
        %1278 = vmatprep.subr.mxu0 0.0
        %1279 = vmatpush1.msra.mxu0 0.0
        %1280 = vmatprep.subr.mxu0 0.0
        %1281 = vmatpush1.msra.mxu0 0.0
        %1282 = vmatprep.subr.mxu0 0.0
        %1283 = vmatpush1.msra.mxu0 0.0
        %1284 = vmatprep.subr.mxu0 0.0
        %1285 = vmatpush1.msra.mxu0 0.0
        %1286 = vmatprep.subr.mxu0 0.0
        %1287 = vmatpush1.msra.mxu0 0.0
        %1288 = vmatprep.subr.mxu0 0.0
        %1289 = vmatpush1.msra.mxu0 0.0
        %1290 = vmatprep.subr.mxu0 0.0
        %1291 = vmatpush1.msra.mxu0 0.0
        %1292 = vmatprep.subr.mxu0 0.0
        %1293 = vmatpush1.msra.mxu0 0.0
        %1294 = vmatprep.subr.mxu0 0.0
        %1295 = vmatpush1.msra.mxu0 0.0
        %1296 = vmatprep.subr.mxu0 0.0
        %1297 = vmatpush1.msra.mxu0 0.0
        %1298 = vmatprep.subr.mxu0 0.0
        %1299 = vmatpush1.msra.mxu0 0.0
        %1300 = vmatprep.subr.mxu0 0.0
        %1301 = vmatpush1.msra.mxu0 0.0
        %1302 = vmatprep.subr.mxu0 0.0
        %1303 = vmatpush1.msra.mxu0 0.0
        %1304 = vmatprep.subr.mxu0 0.0
        %1305 = vmatpush1.msra.mxu0 0.0
        %1306 = vmatprep.subr.mxu0 0.0
        %1307 = vmatpush1.msra.mxu0 0.0
        %1308 = vmatprep.subr.mxu0 0.0
        %1309 = vmatpush1.msra.mxu0 0.0
        %1310 = vmatprep.subr.mxu0 0.0
        %1311 = vmatpush1.msra.mxu0 0.0
        %1312 = vmatprep.mubr.f32.mxu0 0.0
        %1313 = vmatmul.mubr.f32.gmra.mrb[0].mxu0 %v1237
        %v1314 = vpop.f32.mrb[0].mxu0
        %v1315 = vadd.f32 0.0, %v1314
        %v1316 = vpop.f32.mrb[0].mxu0
        %1317 = vmatprep.mubr.f32.mxu0 0.0
        %1318 = vmatmul.mubr.f32.gmra.mrb[0].mxu0 %v1240
        %v1319 = vpop.f32.mrb[0].mxu0
        %v1320 = vadd.f32 0.0, %v1319
        %v1321 = vpop.f32.mrb[0].mxu0
        %1322 = vmatprep.mubr.f32.mxu0 0.0
        %1323 = vmatmul.mubr.f32.gmra.mrb[0].mxu0 %v1243
        %v1324 = vpop.f32.mrb[0].mxu0
        %v1325 = vadd.f32 0.0, %v1324
        %v1326 = vpop.f32.mrb[0].mxu0
        %1327 = vdwg.mxu0
        %1328 = vrot.lane.b32.xlu0 %v1085, 120
        %v1329 = vpop.permute.xlu0 %1328
        %1330 = vrot.lane.b32.xlu0 %v1086, 120
        %v1331 = vpop.permute.xlu0 %1330
        %1332 = vrot.lane.b32.xlu0 %v1087, 120
        %v1333 = vpop.permute.xlu0 %1332
        %1334 = vrot.lane.b32.xlu0 %v1072, 88
        %v1335 = vpop.permute.xlu0 %1334
        %1336 = vrot.lane.b32.xlu0 %v1077, 88
        %v1337 = vpop.permute.xlu0 %1336
        %1338 = vrot.lane.b32.xlu0 %v1082, 88
        %v1339 = vpop.permute.xlu0 %1338
        %v1340 = vsel %vm1097, %v1329, 0
        %v1342 = vsel %vm1097, %v1331, 0
        %v1344 = vsel %vm1097, %v1333, 0
        %v1346 = vsel %vm1097, %v1335, 0
        %v1348 = vsel %vm1097, %v1337, 0
        %v1350 = vsel %vm1097, %v1339, 0
        %1352 = vmatprep.subr.mxu0 0.0
        %1353 = vmatpush1.xpose.msra.mxu0 %v1346
        %1354 = vmatprep.subr.mxu0 0.0
        %1355 = vmatpush1.xpose.msra.mxu0 %v1348
        %1356 = vmatprep.subr.mxu0 0.0
        %1357 = vmatpush1.xpose.msra.mxu0 %v1350
        %1358 = vmatprep.subr.mxu0 0.0
        %1359 = vmatpush1.xpose.msra.mxu0 0.0
        %1360 = vmatprep.subr.mxu0 0.0
        %1361 = vmatpush1.xpose.msra.mxu0 0.0
        %1362 = vmatprep.subr.mxu0 0.0
        %1363 = vmatpush1.xpose.msra.mxu0 0.0
        %1364 = vmatprep.subr.mxu0 0.0
        %1365 = vmatpush1.xpose.msra.mxu0 0.0
        %1366 = vmatprep.subr.mxu0 0.0
        %1367 = vmatpush1.xpose.msra.mxu0 0.0
        %1368 = vmatprep.subr.mxu0 0.0
        %1369 = vmatpush1.xpose.msra.mxu0 0.0
        %1370 = vmatprep.subr.mxu0 0.0
        %1371 = vmatpush1.xpose.msra.mxu0 0.0
        %1372 = vmatprep.subr.mxu0 0.0
        %1373 = vmatpush1.xpose.msra.mxu0 0.0
        %1374 = vmatprep.subr.mxu0 0.0
        %1375 = vmatpush1.xpose.msra.mxu0 0.0
        %1376 = vmatprep.subr.mxu0 0.0
        %1377 = vmatpush1.xpose.msra.mxu0 0.0
        %1378 = vmatprep.subr.mxu0 0.0
        %1379 = vmatpush1.xpose.msra.mxu0 0.0
        %1380 = vmatprep.subr.mxu0 0.0
        %1381 = vmatpush1.xpose.msra.mxu0 0.0
        %1382 = vmatprep.subr.mxu0 0.0
        %1383 = vmatpush1.xpose.msra.mxu0 0.0
        %1384 = vmatprep.subr.mxu0 0.0
        %1385 = vmatpush1.xpose.msra.mxu0 0.0
        %1386 = vmatprep.subr.mxu0 0.0
        %1387 = vmatpush1.xpose.msra.mxu0 0.0
        %1388 = vmatprep.subr.mxu0 0.0
        %1389 = vmatpush1.xpose.msra.mxu0 0.0
        %1390 = vmatprep.subr.mxu0 0.0
        %1391 = vmatpush1.xpose.msra.mxu0 0.0
        %1392 = vmatprep.subr.mxu0 0.0
        %1393 = vmatpush1.xpose.msra.mxu0 0.0
        %1394 = vmatprep.subr.mxu0 0.0
        %1395 = vmatpush1.xpose.msra.mxu0 0.0
        %1396 = vmatprep.subr.mxu0 0.0
        %1397 = vmatpush1.xpose.msra.mxu0 0.0
        %1398 = vmatprep.subr.mxu0 0.0
        %1399 = vmatpush1.xpose.msra.mxu0 0.0
        %1400 = vmatprep.subr.mxu0 0.0
        %1401 = vmatpush1.xpose.msra.mxu0 0.0
        %1402 = vmatprep.subr.mxu0 0.0
        %1403 = vmatpush1.xpose.msra.mxu0 0.0
        %1404 = vmatprep.subr.mxu0 0.0
        %1405 = vmatpush1.xpose.msra.mxu0 0.0
        %1406 = vmatprep.subr.mxu0 0.0
        %1407 = vmatpush1.xpose.msra.mxu0 0.0
        %1408 = vmatprep.subr.mxu0 0.0
        %1409 = vmatpush1.xpose.msra.mxu0 0.0
        %1410 = vmatprep.subr.mxu0 0.0
        %1411 = vmatpush1.xpose.msra.mxu0 0.0
        %1412 = vmatprep.subr.mxu0 0.0
        %1413 = vmatpush1.xpose.msra.mxu0 0.0
        %1414 = vmatprep.subr.mxu0 0.0
        %1415 = vmatpush1.xpose.msra.mxu0 0.0
        %1416 = vmatprep.mubr.f32.mxu0 0.0
        %1417 = vmatmul.mubr.f32.gmra.mrb[0].mxu0 %v1340
        %v1418 = vpop.f32.mrb[0].mxu0
        %v1419 = vadd.f32 0.0, %v1418
        %v1420 = vpop.f32.mrb[0].mxu0
        %1421 = vmatprep.mubr.f32.mxu0 0.0
        %1422 = vmatmul.mubr.f32.gmra.mrb[0].mxu0 %v1342
        %v1423 = vpop.f32.mrb[0].mxu0
        %v1424 = vadd.f32 0.0, %v1423
        %v1425 = vpop.f32.mrb[0].mxu0
        %1426 = vmatprep.mubr.f32.mxu0 0.0
        %1427 = vmatmul.mubr.f32.gmra.mrb[0].mxu0 %v1344
        %v1428 = vpop.f32.mrb[0].mxu0
        %v1429 = vadd.f32 0.0, %v1428
        %v1430 = vpop.f32.mrb[0].mxu0
        %1431 = vdwg.mxu0
        %v1432 = vsel %vm1193, %v1419, -inf
        %1433 = vmax.xlane.f32.xlu0 %v1432
        %v1434 = vpop.xlane.xlu0 %1433
        %v1435 = vsel %vm1193, %v1424, -inf
        %1436 = vmax.xlane.f32.xlu0 %v1435
        %v1437 = vpop.xlane.xlu0 %1436
        %v1438 = vsel %vm1200, %v1429, -inf
        %1439 = vmax.xlane.f32.xlu0 %v1438
        %v1440 = vpop.xlane.xlu0 %1439
        %v1441 = vsub.f32 %v1419, %v1434
        %v1442 = vsub.f32 %v1424, %v1437
        %v1443 = vsub.f32 %v1429, %v1440
        %v1444 = vmul.f32 %v1441, 1.442695
        %v1445 = vpow.pop %v1444
        %v1446 = vmul.f32 %v1442, 1.442695
        %v1447 = vpow.pop %v1446
        %v1448 = vmul.f32 %v1443, 1.442695
        %v1449 = vpow.pop %v1448
        %v1450 = vsel %vm1193, %v1445, 0.0
        %1451 = vadd.xlane.f32.xlu0 %v1450
        %v1452 = vpop.xlane.xlu0 %1451
        %v1453 = vsel %vm1193, %v1447, 0.0
        %1454 = vadd.xlane.f32.xlu0 %v1453
        %v1455 = vpop.xlane.xlu0 %1454
        %v1456 = vsel %vm1200, %v1449, 0.0
        %1457 = vadd.xlane.f32.xlu0 %v1456
        %v1458 = vpop.xlane.xlu0 %1457
        %v1459 = vrcp.pop %v1452
        %v1460 = vrcp.pop %v1455
        %v1461 = vrcp.pop %v1458
        %v1462 = vmul.f32 %v1445, %v1459
        %v1463 = vmul.f32 %v1447, %v1460
        %v1464 = vmul.f32 %v1449, %v1461
        %1465 = vrot.lane.b32.xlu0 %v1072, 56
        %v1466 = vpop.permute.xlu0 %1465
        %1467 = vrot.lane.b32.xlu0 %v1077, 56
        %v1468 = vpop.permute.xlu0 %1467
        %1469 = vrot.lane.b32.xlu0 %v1082, 56
        %v1470 = vpop.permute.xlu0 %1469
        %v1474 = vsel %vm1193, %v1462, 0
        %v1477 = vsel %vm1193, %v1463, 0
        %v1480 = vsel %vm1193, %v1464, 0
        %v1482 = vsel %vm1245, %v1470, 0
        %1484 = vmatprep.subr.mxu0 0.0
        %1485 = vmatpush1.msra.mxu0 %v1466
        %1486 = vmatprep.subr.mxu0 0.0
        %1487 = vmatpush1.msra.mxu0 %v1468
        %1488 = vmatprep.subr.mxu0 0.0
        %1489 = vmatpush1.msra.mxu0 %v1482
        %1490 = vmatprep.subr.mxu0 0.0
        %1491 = vmatpush1.msra.mxu0 0.0
        %1492 = vmatprep.subr.mxu0 0.0
        %1493 = vmatpush1.msra.mxu0 0.0
        %1494 = vmatprep.subr.mxu0 0.0
        %1495 = vmatpush1.msra.mxu0 0.0
        %1496 = vmatprep.subr.mxu0 0.0
        %1497 = vmatpush1.msra.mxu0 0.0
        %1498 = vmatprep.subr.mxu0 0.0
        %1499 = vmatpush1.msra.mxu0 0.0
        %1500 = vmatprep.subr.mxu0 0.0
        %1501 = vmatpush1.msra.mxu0 0.0
        %1502 = vmatprep.subr.mxu0 0.0
        %1503 = vmatpush1.msra.mxu0 0.0
        %1504 = vmatprep.subr.mxu0 0.0
        %1505 = vmatpush1.msra.mxu0 0.0
        %1506 = vmatprep.subr.mxu0 0.0
        %1507 = vmatpush1.msra.mxu0 0.0
        %1508 = vmatprep.subr.mxu0 0.0
        %1509 = vmatpush1.msra.mxu0 0.0
        %1510 = vmatprep.subr.mxu0 0.0
        %1511 = vmatpush1.msra.mxu0 0.0
        %1512 = vmatprep.subr.mxu0 0.0
        %1513 = vmatpush1.msra.mxu0 0.0
        %1514 = vmatprep.subr.mxu0 0.0
        %1515 = vmatpush1.msra.mxu0 0.0
        %1516 = vmatprep.subr.mxu0 0.0
        %1517 = vmatpush1.msra.mxu0 0.0
        %1518 = vmatprep.subr.mxu0 0.0
        %1519 = vmatpush1.msra.mxu0 0.0
        %1520 = vmatprep.subr.mxu0 0.0
        %1521 = vmatpush1.msra.mxu0 0.0
        %1522 = vmatprep.subr.mxu0 0.0
        %1523 = vmatpush1.msra.mxu0 0.0
        %1524 = vmatprep.subr.mxu0 0.0
        %1525 = vmatpush1.msra.mxu0 0.0
        %1526 = vmatprep.subr.mxu0 0.0
        %1527 = vmatpush1.msra.mxu0 0.0
        %1528 = vmatprep.subr.mxu0 0.0
        %1529 = vmatpush1.msra.mxu0 0.0
        %1530 = vmatprep.subr.mxu0 0.0
        %1531 = vmatpush1.msra.mxu0 0.0
        %1532 = vmatprep.subr.mxu0 0.0
        %1533 = vmatpush1.msra.mxu0 0.0
        %1534 = vmatprep.subr.mxu0 0.0
        %1535 = vmatpush1.msra.mxu0 0.0
        %1536 = vmatprep.subr.mxu0 0.0
        %1537 = vmatpush1.msra.mxu0 0.0
        %1538 = vmatprep.subr.mxu0 0.0
        %1539 = vmatpush1.msra.mxu0 0.0
        %1540 = vmatprep.subr.mxu0 0.0
        %1541 = vmatpush1.msra.mxu0 0.0
        %1542 = vmatprep.subr.mxu0 0.0
        %1543 = vmatpush1.msra.mxu0 0.0
        %1544 = vmatprep.subr.mxu0 0.0
        %1545 = vmatpush1.msra.mxu0 0.0
        %1546 = vmatprep.subr.mxu0 0.0
        %1547 = vmatpush1.msra.mxu0 0.0
        %1548 = vmatprep.mubr.f32.mxu0 0.0
        %1549 = vmatmul.mubr.f32.gmra.mrb[0].mxu0 %v1474
        %v1550 = vpop.f32.mrb[0].mxu0
        %v1551 = vadd.f32 0.0, %v1550
        %v1552 = vpop.f32.mrb[0].mxu0
        %1553 = vmatprep.mubr.f32.mxu0 0.0
        %1554 = vmatmul.mubr.f32.gmra.mrb[0].mxu0 %v1477
        %v1555 = vpop.f32.mrb[0].mxu0
        %v1556 = vadd.f32 0.0, %v1555
        %v1557 = vpop.f32.mrb[0].mxu0
        %1558 = vmatprep.mubr.f32.mxu0 0.0
        %1559 = vmatmul.mubr.f32.gmra.mrb[0].mxu0 %v1480
        %v1560 = vpop.f32.mrb[0].mxu0
        %v1561 = vadd.f32 0.0, %v1560
        %v1562 = vpop.f32.mrb[0].mxu0
        %1563 = vdwg.mxu0
        %1564 = vrot.lane.b32.xlu0 %v1085, 112
        %v1565 = vpop.permute.xlu0 %1564
        %1566 = vrot.lane.b32.xlu0 %v1086, 112
        %v1567 = vpop.permute.xlu0 %1566
        %1568 = vrot.lane.b32.xlu0 %v1087, 112
        %v1569 = vpop.permute.xlu0 %1568
        %1570 = vrot.lane.b32.xlu0 %v1072, 80
        %v1571 = vpop.permute.xlu0 %1570
        %1572 = vrot.lane.b32.xlu0 %v1077, 80
        %v1573 = vpop.permute.xlu0 %1572
        %1574 = vrot.lane.b32.xlu0 %v1082, 80
        %v1575 = vpop.permute.xlu0 %1574
        %v1576 = vsel %vm1097, %v1565, 0
        %v1578 = vsel %vm1097, %v1567, 0
        %v1580 = vsel %vm1097, %v1569, 0
        %v1582 = vsel %vm1097, %v1571, 0
        %v1584 = vsel %vm1097, %v1573, 0
        %v1586 = vsel %vm1097, %v1575, 0
        %1588 = vmatprep.subr.mxu0 0.0
        %1589 = vmatpush1.xpose.msra.mxu0 %v1582
        %1590 = vmatprep.subr.mxu0 0.0
        %1591 = vmatpush1.xpose.msra.mxu0 %v1584
        %1592 = vmatprep.subr.mxu0 0.0
        %1593 = vmatpush1.xpose.msra.mxu0 %v1586
        %1594 = vmatprep.subr.mxu0 0.0
        %1595 = vmatpush1.xpose.msra.mxu0 0.0
        %1596 = vmatprep.subr.mxu0 0.0
        %1597 = vmatpush1.xpose.msra.mxu0 0.0
        %1598 = vmatprep.subr.mxu0 0.0
        %1599 = vmatpush1.xpose.msra.mxu0 0.0
        %1600 = vmatprep.subr.mxu0 0.0
        %1601 = vmatpush1.xpose.msra.mxu0 0.0
        %1602 = vmatprep.subr.mxu0 0.0
        %1603 = vmatpush1.xpose.msra.mxu0 0.0
        %1604 = vmatprep.subr.mxu0 0.0
        %1605 = vmatpush1.xpose.msra.mxu0 0.0
        %1606 = vmatprep.subr.mxu0 0.0
        %1607 = vmatpush1.xpose.msra.mxu0 0.0
        %1608 = vmatprep.subr.mxu0 0.0
        %1609 = vmatpush1.xpose.msra.mxu0 0.0
        %1610 = vmatprep.subr.mxu0 0.0
        %1611 = vmatpush1.xpose.msra.mxu0 0.0
        %1612 = vmatprep.subr.mxu0 0.0
        %1613 = vmatpush1.xpose.msra.mxu0 0.0
        %1614 = vmatprep.subr.mxu0 0.0
        %1615 = vmatpush1.xpose.msra.mxu0 0.0
        %1616 = vmatprep.subr.mxu0 0.0
        %1617 = vmatpush1.xpose.msra.mxu0 0.0
        %1618 = vmatprep.subr.mxu0 0.0
        %1619 = vmatpush1.xpose.msra.mxu0 0.0
        %1620 = vmatprep.subr.mxu0 0.0
        %1621 = vmatpush1.xpose.msra.mxu0 0.0
        %1622 = vmatprep.subr.mxu0 0.0
        %1623 = vmatpush1.xpose.msra.mxu0 0.0
        %1624 = vmatprep.subr.mxu0 0.0
        %1625 = vmatpush1.xpose.msra.mxu0 0.0
        %1626 = vmatprep.subr.mxu0 0.0
        %1627 = vmatpush1.xpose.msra.mxu0 0.0
        %1628 = vmatprep.subr.mxu0 0.0
        %1629 = vmatpush1.xpose.msra.mxu0 0.0
        %1630 = vmatprep.subr.mxu0 0.0
        %1631 = vmatpush1.xpose.msra.mxu0 0.0
        %1632 = vmatprep.subr.mxu0 0.0
        %1633 = vmatpush1.xpose.msra.mxu0 0.0
        %1634 = vmatprep.subr.mxu0 0.0
        %1635 = vmatpush1.xpose.msra.mxu0 0.0
        %1636 = vmatprep.subr.mxu0 0.0
        %1637 = vmatpush1.xpose.msra.mxu0 0.0
        %1638 = vmatprep.subr.mxu0 0.0
        %1639 = vmatpush1.xpose.msra.mxu0 0.0
        %1640 = vmatprep.subr.mxu0 0.0
        %1641 = vmatpush1.xpose.msra.mxu0 0.0
        %1642 = vmatprep.subr.mxu0 0.0
        %1643 = vmatpush1.xpose.msra.mxu0 0.0
        %1644 = vmatprep.subr.mxu0 0.0
        %1645 = vmatpush1.xpose.msra.mxu0 0.0
        %1646 = vmatprep.subr.mxu0 0.0
        %1647 = vmatpush1.xpose.msra.mxu0 0.0
        %1648 = vmatprep.subr.mxu0 0.0
        %1649 = vmatpush1.xpose.msra.mxu0 0.0
        %1650 = vmatprep.subr.mxu0 0.0
        %1651 = vmatpush1.xpose.msra.mxu0 0.0
        %1652 = vmatprep.mubr.f32.mxu0 0.0
        %1653 = vmatmul.mubr.f32.gmra.mrb[0].mxu0 %v1576
        %v1654 = vpop.f32.mrb[0].mxu0
        %v1655 = vadd.f32 0.0, %v1654
        %v1656 = vpop.f32.mrb[0].mxu0
        %1657 = vmatprep.mubr.f32.mxu0 0.0
        %1658 = vmatmul.mubr.f32.gmra.mrb[0].mxu0 %v1578
        %v1659 = vpop.f32.mrb[0].mxu0
        %v1660 = vadd.f32 0.0, %v1659
        %v1661 = vpop.f32.mrb[0].mxu0
        %1662 = vmatprep.mubr.f32.mxu0 0.0
        %1663 = vmatmul.mubr.f32.gmra.mrb[0].mxu0 %v1580
        %v1664 = vpop.f32.mrb[0].mxu0
        %v1665 = vadd.f32 0.0, %v1664
        %v1666 = vpop.f32.mrb[0].mxu0
        %1667 = vdwg.mxu0
        %v1668 = vsel %vm1193, %v1655, -inf
        %1669 = vmax.xlane.f32.xlu0 %v1668
        %v1670 = vpop.xlane.xlu0 %1669
        %v1671 = vsel %vm1193, %v1660, -inf
        %1672 = vmax.xlane.f32.xlu0 %v1671
        %v1673 = vpop.xlane.xlu0 %1672
        %v1674 = vsel %vm1200, %v1665, -inf
        %1675 = vmax.xlane.f32.xlu0 %v1674
        %v1676 = vpop.xlane.xlu0 %1675
        %v1677 = vsub.f32 %v1655, %v1670
        %v1678 = vsub.f32 %v1660, %v1673
        %v1679 = vsub.f32 %v1665, %v1676
        %v1680 = vmul.f32 %v1677, 1.442695
        %v1681 = vpow.pop %v1680
        %v1682 = vmul.f32 %v1678, 1.442695
        %v1683 = vpow.pop %v1682
        %v1684 = vmul.f32 %v1679, 1.442695
        %v1685 = vpow.pop %v1684
        %v1686 = vsel %vm1193, %v1681, 0.0
        %1687 = vadd.xlane.f32.xlu0 %v1686
        %v1688 = vpop.xlane.xlu0 %1687
        %v1689 = vsel %vm1193, %v1683, 0.0
        %1690 = vadd.xlane.f32.xlu0 %v1689
        %v1691 = vpop.xlane.xlu0 %1690
        %v1692 = vsel %vm1200, %v1685, 0.0
        %1693 = vadd.xlane.f32.xlu0 %v1692
        %v1694 = vpop.xlane.xlu0 %1693
        %v1695 = vrcp.pop %v1688
        %v1696 = vrcp.pop %v1691
        %v1697 = vrcp.pop %v1694
        %v1698 = vmul.f32 %v1681, %v1695
        %v1699 = vmul.f32 %v1683, %v1696
        %v1700 = vmul.f32 %v1685, %v1697
        %1701 = vrot.lane.b32.xlu0 %v1072, 48
        %v1702 = vpop.permute.xlu0 %1701
        %1703 = vrot.lane.b32.xlu0 %v1077, 48
        %v1704 = vpop.permute.xlu0 %1703
        %1705 = vrot.lane.b32.xlu0 %v1082, 48
        %v1706 = vpop.permute.xlu0 %1705
        %v1710 = vsel %vm1193, %v1698, 0
        %v1713 = vsel %vm1193, %v1699, 0
        %v1716 = vsel %vm1193, %v1700, 0
        %v1718 = vsel %vm1245, %v1706, 0
        %1720 = vmatprep.subr.mxu0 0.0
        %1721 = vmatpush1.msra.mxu0 %v1702
        %1722 = vmatprep.subr.mxu0 0.0
        %1723 = vmatpush1.msra.mxu0 %v1704
        %1724 = vmatprep.subr.mxu0 0.0
        %1725 = vmatpush1.msra.mxu0 %v1718
        %1726 = vmatprep.subr.mxu0 0.0
        %1727 = vmatpush1.msra.mxu0 0.0
        %1728 = vmatprep.subr.mxu0 0.0
        %1729 = vmatpush1.msra.mxu0 0.0
        %1730 = vmatprep.subr.mxu0 0.0
        %1731 = vmatpush1.msra.mxu0 0.0
        %1732 = vmatprep.subr.mxu0 0.0
        %1733 = vmatpush1.msra.mxu0 0.0
        %1734 = vmatprep.subr.mxu0 0.0
        %1735 = vmatpush1.msra.mxu0 0.0
        %1736 = vmatprep.subr.mxu0 0.0
        %1737 = vmatpush1.msra.mxu0 0.0
        %1738 = vmatprep.subr.mxu0 0.0
        %1739 = vmatpush1.msra.mxu0 0.0
        %1740 = vmatprep.subr.mxu0 0.0
        %1741 = vmatpush1.msra.mxu0 0.0
        %1742 = vmatprep.subr.mxu0 0.0
        %1743 = vmatpush1.msra.mxu0 0.0
        %1744 = vmatprep.subr.mxu0 0.0
        %1745 = vmatpush1.msra.mxu0 0.0
        %1746 = vmatprep.subr.mxu0 0.0
        %1747 = vmatpush1.msra.mxu0 0.0
        %1748 = vmatprep.subr.mxu0 0.0
        %1749 = vmatpush1.msra.mxu0 0.0
        %1750 = vmatprep.subr.mxu0 0.0
        %1751 = vmatpush1.msra.mxu0 0.0
        %1752 = vmatprep.subr.mxu0 0.0
        %1753 = vmatpush1.msra.mxu0 0.0
        %1754 = vmatprep.subr.mxu0 0.0
        %1755 = vmatpush1.msra.mxu0 0.0
        %1756 = vmatprep.subr.mxu0 0.0
        %1757 = vmatpush1.msra.mxu0 0.0
        %1758 = vmatprep.subr.mxu0 0.0
        %1759 = vmatpush1.msra.mxu0 0.0
        %1760 = vmatprep.subr.mxu0 0.0
        %1761 = vmatpush1.msra.mxu0 0.0
        %1762 = vmatprep.subr.mxu0 0.0
        %1763 = vmatpush1.msra.mxu0 0.0
        %1764 = vmatprep.subr.mxu0 0.0
        %1765 = vmatpush1.msra.mxu0 0.0
        %1766 = vmatprep.subr.mxu0 0.0
        %1767 = vmatpush1.msra.mxu0 0.0
        %1768 = vmatprep.subr.mxu0 0.0
        %1769 = vmatpush1.msra.mxu0 0.0
        %1770 = vmatprep.subr.mxu0 0.0
        %1771 = vmatpush1.msra.mxu0 0.0
        %1772 = vmatprep.subr.mxu0 0.0
        %1773 = vmatpush1.msra.mxu0 0.0
        %1774 = vmatprep.subr.mxu0 0.0
        %1775 = vmatpush1.msra.mxu0 0.0
        %1776 = vmatprep.subr.mxu0 0.0
        %1777 = vmatpush1.msra.mxu0 0.0
        %1778 = vmatprep.subr.mxu0 0.0
        %1779 = vmatpush1.msra.mxu0 0.0
        %1780 = vmatprep.subr.mxu0 0.0
        %1781 = vmatpush1.msra.mxu0 0.0
        %1782 = vmatprep.subr.mxu0 0.0
        %1783 = vmatpush1.msra.mxu0 0.0
        %1784 = vmatprep.mubr.f32.mxu0 0.0
        %1785 = vmatmul.mubr.f32.gmra.mrb[0].mxu0 %v1710
        %v1786 = vpop.f32.mrb[0].mxu0
        %v1787 = vadd.f32 0.0, %v1786
        %v1788 = vpop.f32.mrb[0].mxu0
        %1789 = vmatprep.mubr.f32.mxu0 0.0
        %1790 = vmatmul.mubr.f32.gmra.mrb[0].mxu0 %v1713
        %v1791 = vpop.f32.mrb[0].mxu0
        %v1792 = vadd.f32 0.0, %v1791
        %v1793 = vpop.f32.mrb[0].mxu0
        %1794 = vmatprep.mubr.f32.mxu0 0.0
        %1795 = vmatmul.mubr.f32.gmra.mrb[0].mxu0 %v1716
        %v1796 = vpop.f32.mrb[0].mxu0
        %v1797 = vadd.f32 0.0, %v1796
        %v1798 = vpop.f32.mrb[0].mxu0
        %1799 = vdwg.mxu0
        %1800 = vrot.lane.b32.xlu0 %v1085, 104
        %v1801 = vpop.permute.xlu0 %1800
        %1802 = vrot.lane.b32.xlu0 %v1086, 104
        %v1803 = vpop.permute.xlu0 %1802
        %1804 = vrot.lane.b32.xlu0 %v1087, 104
        %v1805 = vpop.permute.xlu0 %1804
        %1806 = vrot.lane.b32.xlu0 %v1072, 72
        %v1807 = vpop.permute.xlu0 %1806
        %1808 = vrot.lane.b32.xlu0 %v1077, 72
        %v1809 = vpop.permute.xlu0 %1808
        %1810 = vrot.lane.b32.xlu0 %v1082, 72
        %v1811 = vpop.permute.xlu0 %1810
        %v1812 = vsel %vm1097, %v1801, 0
        %v1814 = vsel %vm1097, %v1803, 0
        %v1816 = vsel %vm1097, %v1805, 0
        %v1818 = vsel %vm1097, %v1807, 0
        %v1820 = vsel %vm1097, %v1809, 0
        %v1822 = vsel %vm1097, %v1811, 0
        %1824 = vmatprep.subr.mxu0 0.0
        %1825 = vmatpush1.xpose.msra.mxu0 %v1818
        %1826 = vmatprep.subr.mxu0 0.0
        %1827 = vmatpush1.xpose.msra.mxu0 %v1820
        %1828 = vmatprep.subr.mxu0 0.0
        %1829 = vmatpush1.xpose.msra.mxu0 %v1822
        %1830 = vmatprep.subr.mxu0 0.0
        %1831 = vmatpush1.xpose.msra.mxu0 0.0
        %1832 = vmatprep.subr.mxu0 0.0
        %1833 = vmatpush1.xpose.msra.mxu0 0.0
        %1834 = vmatprep.subr.mxu0 0.0
        %1835 = vmatpush1.xpose.msra.mxu0 0.0
        %1836 = vmatprep.subr.mxu0 0.0
        %1837 = vmatpush1.xpose.msra.mxu0 0.0
        %1838 = vmatprep.subr.mxu0 0.0
        %1839 = vmatpush1.xpose.msra.mxu0 0.0
        %1840 = vmatprep.subr.mxu0 0.0
        %1841 = vmatpush1.xpose.msra.mxu0 0.0
        %1842 = vmatprep.subr.mxu0 0.0
        %1843 = vmatpush1.xpose.msra.mxu0 0.0
        %1844 = vmatprep.subr.mxu0 0.0
        %1845 = vmatpush1.xpose.msra.mxu0 0.0
        %1846 = vmatprep.subr.mxu0 0.0
        %1847 = vmatpush1.xpose.msra.mxu0 0.0
        %1848 = vmatprep.subr.mxu0 0.0
        %1849 = vmatpush1.xpose.msra.mxu0 0.0
        %1850 = vmatprep.subr.mxu0 0.0
        %1851 = vmatpush1.xpose.msra.mxu0 0.0
        %1852 = vmatprep.subr.mxu0 0.0
        %1853 = vmatpush1.xpose.msra.mxu0 0.0
        %1854 = vmatprep.subr.mxu0 0.0
        %1855 = vmatpush1.xpose.msra.mxu0 0.0
        %1856 = vmatprep.subr.mxu0 0.0
        %1857 = vmatpush1.xpose.msra.mxu0 0.0
        %1858 = vmatprep.subr.mxu0 0.0
        %1859 = vmatpush1.xpose.msra.mxu0 0.0
        %1860 = vmatprep.subr.mxu0 0.0
        %1861 = vmatpush1.xpose.msra.mxu0 0.0
        %1862 = vmatprep.subr.mxu0 0.0
        %1863 = vmatpush1.xpose.msra.mxu0 0.0
        %1864 = vmatprep.subr.mxu0 0.0
        %1865 = vmatpush1.xpose.msra.mxu0 0.0
        %1866 = vmatprep.subr.mxu0 0.0
        %1867 = vmatpush1.xpose.msra.mxu0 0.0
        %1868 = vmatprep.subr.mxu0 0.0
        %1869 = vmatpush1.xpose.msra.mxu0 0.0
        %1870 = vmatprep.subr.mxu0 0.0
        %1871 = vmatpush1.xpose.msra.mxu0 0.0
        %1872 = vmatprep.subr.mxu0 0.0
        %1873 = vmatpush1.xpose.msra.mxu0 0.0
        %1874 = vmatprep.subr.mxu0 0.0
        %1875 = vmatpush1.xpose.msra.mxu0 0.0
        %1876 = vmatprep.subr.mxu0 0.0
        %1877 = vmatpush1.xpose.msra.mxu0 0.0
        %1878 = vmatprep.subr.mxu0 0.0
        %1879 = vmatpush1.xpose.msra.mxu0 0.0
        %1880 = vmatprep.subr.mxu0 0.0
        %1881 = vmatpush1.xpose.msra.mxu0 0.0
        %1882 = vmatprep.subr.mxu0 0.0
        %1883 = vmatpush1.xpose.msra.mxu0 0.0
        %1884 = vmatprep.subr.mxu0 0.0
        %1885 = vmatpush1.xpose.msra.mxu0 0.0
        %1886 = vmatprep.subr.mxu0 0.0
        %1887 = vmatpush1.xpose.msra.mxu0 0.0
        %1888 = vmatprep.mubr.f32.mxu0 0.0
        %1889 = vmatmul.mubr.f32.gmra.mrb[0].mxu0 %v1812
        %v1890 = vpop.f32.mrb[0].mxu0
        %v1891 = vadd.f32 0.0, %v1890
        %v1892 = vpop.f32.mrb[0].mxu0
        %1893 = vmatprep.mubr.f32.mxu0 0.0
        %1894 = vmatmul.mubr.f32.gmra.mrb[0].mxu0 %v1814
        %v1895 = vpop.f32.mrb[0].mxu0
        %v1896 = vadd.f32 0.0, %v1895
        %v1897 = vpop.f32.mrb[0].mxu0
        %1898 = vmatprep.mubr.f32.mxu0 0.0
        %1899 = vmatmul.mubr.f32.gmra.mrb[0].mxu0 %v1816
        %v1900 = vpop.f32.mrb[0].mxu0
        %v1901 = vadd.f32 0.0, %v1900
        %v1902 = vpop.f32.mrb[0].mxu0
        %1903 = vdwg.mxu0
        %v1904 = vsel %vm1193, %v1891, -inf
        %1905 = vmax.xlane.f32.xlu0 %v1904
        %v1906 = vpop.xlane.xlu0 %1905
        %v1907 = vsel %vm1193, %v1896, -inf
        %1908 = vmax.xlane.f32.xlu0 %v1907
        %v1909 = vpop.xlane.xlu0 %1908
        %v1910 = vsel %vm1200, %v1901, -inf
        %1911 = vmax.xlane.f32.xlu0 %v1910
        %v1912 = vpop.xlane.xlu0 %1911
        %v1913 = vsub.f32 %v1891, %v1906
        %v1914 = vsub.f32 %v1896, %v1909
        %v1915 = vsub.f32 %v1901, %v1912
        %v1916 = vmul.f32 %v1913, 1.442695
        %v1917 = vpow.pop %v1916
        %v1918 = vmul.f32 %v1914, 1.442695
        %v1919 = vpow.pop %v1918
        %v1920 = vmul.f32 %v1915, 1.442695
        %v1921 = vpow.pop %v1920
        %v1922 = vsel %vm1193, %v1917, 0.0
        %1923 = vadd.xlane.f32.xlu0 %v1922
        %v1924 = vpop.xlane.xlu0 %1923
        %v1925 = vsel %vm1193, %v1919, 0.0
        %1926 = vadd.xlane.f32.xlu0 %v1925
        %v1927 = vpop.xlane.xlu0 %1926
        %v1928 = vsel %vm1200, %v1921, 0.0
        %1929 = vadd.xlane.f32.xlu0 %v1928
        %v1930 = vpop.xlane.xlu0 %1929
        %v1931 = vrcp.pop %v1924
        %v1932 = vrcp.pop %v1927
        %v1933 = vrcp.pop %v1930
        %v1934 = vmul.f32 %v1917, %v1931
        %v1935 = vmul.f32 %v1919, %v1932
        %v1936 = vmul.f32 %v1921, %v1933
        %1937 = vrot.lane.b32.xlu0 %v1072, 40
        %v1938 = vpop.permute.xlu0 %1937
        %1939 = vrot.lane.b32.xlu0 %v1077, 40
        %v1940 = vpop.permute.xlu0 %1939
        %1941 = vrot.lane.b32.xlu0 %v1082, 40
        %v1942 = vpop.permute.xlu0 %1941
        %v1946 = vsel %vm1193, %v1934, 0
        %v1949 = vsel %vm1193, %v1935, 0
        %v1952 = vsel %vm1193, %v1936, 0
        %v1954 = vsel %vm1245, %v1942, 0
        %1956 = vmatprep.subr.mxu0 0.0
        %1957 = vmatpush1.msra.mxu0 %v1938
        %1958 = vmatprep.subr.mxu0 0.0
        %1959 = vmatpush1.msra.mxu0 %v1940
        %1960 = vmatprep.subr.mxu0 0.0
        %1961 = vmatpush1.msra.mxu0 %v1954
        %1962 = vmatprep.subr.mxu0 0.0
        %1963 = vmatpush1.msra.mxu0 0.0
        %1964 = vmatprep.subr.mxu0 0.0
        %1965 = vmatpush1.msra.mxu0 0.0
        %1966 = vmatprep.subr.mxu0 0.0
        %1967 = vmatpush1.msra.mxu0 0.0
        %1968 = vmatprep.subr.mxu0 0.0
        %1969 = vmatpush1.msra.mxu0 0.0
        %1970 = vmatprep.subr.mxu0 0.0
        %1971 = vmatpush1.msra.mxu0 0.0
        %1972 = vmatprep.subr.mxu0 0.0
        %1973 = vmatpush1.msra.mxu0 0.0
        %1974 = vmatprep.subr.mxu0 0.0
        %1975 = vmatpush1.msra.mxu0 0.0
        %1976 = vmatprep.subr.mxu0 0.0
        %1977 = vmatpush1.msra.mxu0 0.0
        %1978 = vmatprep.subr.mxu0 0.0
        %1979 = vmatpush1.msra.mxu0 0.0
        %1980 = vmatprep.subr.mxu0 0.0
        %1981 = vmatpush1.msra.mxu0 0.0
        %1982 = vmatprep.subr.mxu0 0.0
        %1983 = vmatpush1.msra.mxu0 0.0
        %1984 = vmatprep.subr.mxu0 0.0
        %1985 = vmatpush1.msra.mxu0 0.0
        %1986 = vmatprep.subr.mxu0 0.0
        %1987 = vmatpush1.msra.mxu0 0.0
        %1988 = vmatprep.subr.mxu0 0.0
        %1989 = vmatpush1.msra.mxu0 0.0
        %1990 = vmatprep.subr.mxu0 0.0
        %1991 = vmatpush1.msra.mxu0 0.0
        %1992 = vmatprep.subr.mxu0 0.0
        %1993 = vmatpush1.msra.mxu0 0.0
        %1994 = vmatprep.subr.mxu0 0.0
        %1995 = vmatpush1.msra.mxu0 0.0
        %1996 = vmatprep.subr.mxu0 0.0
        %1997 = vmatpush1.msra.mxu0 0.0
        %1998 = vmatprep.subr.mxu0 0.0
        %1999 = vmatpush1.msra.mxu0 0.0
        %2000 = vmatprep.subr.mxu0 0.0
        %2001 = vmatpush1.msra.mxu0 0.0
        %2002 = vmatprep.subr.mxu0 0.0
        %2003 = vmatpush1.msra.mxu0 0.0
        %2004 = vmatprep.subr.mxu0 0.0
        %2005 = vmatpush1.msra.mxu0 0.0
        %2006 = vmatprep.subr.mxu0 0.0
        %2007 = vmatpush1.msra.mxu0 0.0
        %2008 = vmatprep.subr.mxu0 0.0
        %2009 = vmatpush1.msra.mxu0 0.0
        %2010 = vmatprep.subr.mxu0 0.0
        %2011 = vmatpush1.msra.mxu0 0.0
        %2012 = vmatprep.subr.mxu0 0.0
        %2013 = vmatpush1.msra.mxu0 0.0
        %2014 = vmatprep.subr.mxu0 0.0
        %2015 = vmatpush1.msra.mxu0 0.0
        %2016 = vmatprep.subr.mxu0 0.0
        %2017 = vmatpush1.msra.mxu0 0.0
        %2018 = vmatprep.subr.mxu0 0.0
        %2019 = vmatpush1.msra.mxu0 0.0
        %2020 = vmatprep.mubr.f32.mxu0 0.0
        %2021 = vmatmul.mubr.f32.gmra.mrb[0].mxu0 %v1946
        %v2022 = vpop.f32.mrb[0].mxu0
        %v2023 = vadd.f32 0.0, %v2022
        %v2024 = vpop.f32.mrb[0].mxu0
        %2025 = vmatprep.mubr.f32.mxu0 0.0
        %2026 = vmatmul.mubr.f32.gmra.mrb[0].mxu0 %v1949
        %v2027 = vpop.f32.mrb[0].mxu0
        %v2028 = vadd.f32 0.0, %v2027
        %v2029 = vpop.f32.mrb[0].mxu0
        %2030 = vmatprep.mubr.f32.mxu0 0.0
        %2031 = vmatmul.mubr.f32.gmra.mrb[0].mxu0 %v1952
        %v2032 = vpop.f32.mrb[0].mxu0
        %v2033 = vadd.f32 0.0, %v2032
        %v2034 = vpop.f32.mrb[0].mxu0
        %2035 = vdwg.mxu0
        %2039 = vrot.lane.b32.xlu0 %v1551, 8
        %v2040 = vpop.permute.xlu0 %2039
        %2041 = vrot.lane.b32.xlu0 %v1556, 8
        %v2042 = vpop.permute.xlu0 %2041
        %2043 = vrot.lane.b32.xlu0 %v1561, 8
        %v2044 = vpop.permute.xlu0 %2043
        %2051 = vrot.lane.b32.xlu0 %v1787, 16
        %v2052 = vpop.permute.xlu0 %2051
        %2053 = vrot.lane.b32.xlu0 %v1792, 16
        %v2054 = vpop.permute.xlu0 %2053
        %2055 = vrot.lane.b32.xlu0 %v1797, 16
        %v2056 = vpop.permute.xlu0 %2055
        %2063 = vrot.lane.b32.xlu0 %v2023, 24
        %v2064 = vpop.permute.xlu0 %2063
        %2065 = vrot.lane.b32.xlu0 %v2028, 24
        %v2066 = vpop.permute.xlu0 %2065
        %2067 = vrot.lane.b32.xlu0 %v2033, 24
        %v2068 = vpop.permute.xlu0 %2067
        %v2072 = vsel %vm1097, %v1315, %v2040
        %v2073 = vsel %vm1097, %v1320, %v2042
        %v2074 = vsel %vm1097, %v1325, %v2044
        %vm2075 = vcmask 130048
        %v2076 = vsel %vm2075, %v2072, %v2052
        %v2077 = vsel %vm2075, %v2073, %v2054
        %v2078 = vsel %vm2075, %v2074, %v2056
        %vm2079 = vcmask 195584
        %v2080 = vsel %vm2079, %v2076, %v2064
        %v2081 = vsel %vm2079, %v2077, %v2066
        %v2082 = vsel %vm2079, %v2078, %v2068
        %v2083 = vld [vmem:[%s826] sm:$0xff]
        %v2084 = vld [vmem:[%s826 + $0x8] sm:$0xff]
        %v2085 = vld [vmem:[%s826 + $0x10] sm:$0xff]
        %v2086 = vld [vmem:[%s826 + $0x18] sm:$0xff]
        %v2087 = vld [vmem:[%s829] sm:$0x1]
        %v2089 = vlaneseq
        %v2090 = vshrl.u32 %v2089, 7
        %v2091 = vsub.s32 0, %v2090
        %v2092 = vrot.slane %v2087, %v2091
        %v2095 = vsel %vm995, %v2080, 0
        %v2098 = vsel %vm995, %v2081, 0
        %v2101 = vsel %vm995, %v2082, 0
        %2103 = vmatprep.subr.mxu0 0.0
        %2104 = vmatpush1.msra.mxu0 %v2083
        %2105 = vmatprep.subr.mxu0 0.0
        %2106 = vmatpush1.msra.mxu0 %v2084
        %2107 = vmatprep.subr.mxu0 0.0
        %2108 = vmatpush1.msra.mxu0 %v2085
        %2109 = vmatprep.subr.mxu0 0.0
        %2110 = vmatpush1.msra.mxu0 %v2086
        %2111 = vmatprep.subr.mxu0 0.0
        %2112 = vmatpush1.msra.mxu0 0.0
        %2113 = vmatprep.subr.mxu0 0.0
        %2114 = vmatpush1.msra.mxu0 0.0
        %2115 = vmatprep.subr.mxu0 0.0
        %2116 = vmatpush1.msra.mxu0 0.0
        %2117 = vmatprep.subr.mxu0 0.0
        %2118 = vmatpush1.msra.mxu0 0.0
        %2119 = vmatprep.subr.mxu0 0.0
        %2120 = vmatpush1.msra.mxu0 0.0
        %2121 = vmatprep.subr.mxu0 0.0
        %2122 = vmatpush1.msra.mxu0 0.0
        %2123 = vmatprep.subr.mxu0 0.0
        %2124 = vmatpush1.msra.mxu0 0.0
        %2125 = vmatprep.subr.mxu0 0.0
        %2126 = vmatpush1.msra.mxu0 0.0
        %2127 = vmatprep.subr.mxu0 0.0
        %2128 = vmatpush1.msra.mxu0 0.0
        %2129 = vmatprep.subr.mxu0 0.0
        %2130 = vmatpush1.msra.mxu0 0.0
        %2131 = vmatprep.subr.mxu0 0.0
        %2132 = vmatpush1.msra.mxu0 0.0
        %2133 = vmatprep.subr.mxu0 0.0
        %2134 = vmatpush1.msra.mxu0 0.0
        %2135 = vmatprep.subr.mxu0 0.0
        %2136 = vmatpush1.msra.mxu0 0.0
        %2137 = vmatprep.subr.mxu0 0.0
        %2138 = vmatpush1.msra.mxu0 0.0
        %2139 = vmatprep.subr.mxu0 0.0
        %2140 = vmatpush1.msra.mxu0 0.0
        %2141 = vmatprep.subr.mxu0 0.0
        %2142 = vmatpush1.msra.mxu0 0.0
        %2143 = vmatprep.subr.mxu0 0.0
        %2144 = vmatpush1.msra.mxu0 0.0
        %2145 = vmatprep.subr.mxu0 0.0
        %2146 = vmatpush1.msra.mxu0 0.0
        %2147 = vmatprep.subr.mxu0 0.0
        %2148 = vmatpush1.msra.mxu0 0.0
        %2149 = vmatprep.subr.mxu0 0.0
        %2150 = vmatpush1.msra.mxu0 0.0
        %2151 = vmatprep.subr.mxu0 0.0
        %2152 = vmatpush1.msra.mxu0 0.0
        %2153 = vmatprep.subr.mxu0 0.0
        %2154 = vmatpush1.msra.mxu0 0.0
        %2155 = vmatprep.subr.mxu0 0.0
        %2156 = vmatpush1.msra.mxu0 0.0
        %2157 = vmatprep.subr.mxu0 0.0
        %2158 = vmatpush1.msra.mxu0 0.0
        %2159 = vmatprep.subr.mxu0 0.0
        %2160 = vmatpush1.msra.mxu0 0.0
        %2161 = vmatprep.subr.mxu0 0.0
        %2162 = vmatpush1.msra.mxu0 0.0
        %2163 = vmatprep.subr.mxu0 0.0
        %2164 = vmatpush1.msra.mxu0 0.0
        %2165 = vmatprep.subr.mxu0 0.0
        %2166 = vmatpush1.msra.mxu0 0.0
        %2167 = vmatprep.mubr.f32.mxu0 0.0
        %2168 = vmatmul.mubr.f32.gmra.mrb[0].mxu0 %v2095
        %v2169 = vpop.f32.mrb[0].mxu0
        %v2170 = vadd.f32 %v2092, %v2169
        %v2171 = vpop.f32.mrb[0].mxu0
        %2172 = vmatprep.mubr.f32.mxu0 0.0
        %2173 = vmatmul.mubr.f32.gmra.mrb[0].mxu0 %v2098
        %v2174 = vpop.f32.mrb[0].mxu0
        %v2175 = vadd.f32 %v2092, %v2174
        %v2176 = vpop.f32.mrb[0].mxu0
        %2177 = vmatprep.mubr.f32.mxu0 0.0
        %2178 = vmatmul.mubr.f32.gmra.mrb[0].mxu0 %v2101
        %v2179 = vpop.f32.mrb[0].mxu0
        %v2180 = vadd.f32 %v2092, %v2179
        %v2181 = vpop.f32.mrb[0].mxu0
        %2182 = vdwg.mxu0
        %v2183 = vadd.f32 %v981, %v2170
        %v2184 = vadd.f32 %v982, %v2175
        %v2185 = vadd.f32 %v983, %v2180
        %v2186 = vld [vmem:[%s832] sm:$0x1]
        %v2187 = vld [vmem:[%s835] sm:$0x1]
        %v2188 = vsel %vm995, %v2183, 0.0
        %2189 = vadd.xlane.f32.xlu0 %v2188
        %v2190 = vpop.xlane.xlu0 %2189
        %v2191 = vsel %vm995, %v2184, 0.0
        %2192 = vadd.xlane.f32.xlu0 %v2191
        %v2193 = vpop.xlane.xlu0 %2192
        %vm2194 = vcmask 253952
        %v2195 = vsel %vm2194, %v2185, 0.0
        %2196 = vadd.xlane.f32.xlu0 %v2195
        %v2197 = vpop.xlane.xlu0 %2196
        %v2198 = vrcp.pop 32.0
        %v2199 = vmul.f32 %v2190, %v2198
        %v2200 = vmul.f32 %v2193, %v2198
        %v2201 = vmul.f32 %v2197, %v2198
        %v2202 = vsub.f32 %v2183, %v2199
        %v2203 = vsub.f32 %v2184, %v2200
        %v2204 = vsub.f32 %v2185, %v2201
        %v2205 = vmul.f32 %v2202, %v2202
        %v2206 = vmul.f32 %v2203, %v2203
        %v2207 = vmul.f32 %v2204, %v2204
        %v2208 = vsel %vm995, %v2205, 0.0
        %2209 = vadd.xlane.f32.xlu0 %v2208
        %v2210 = vpop.xlane.xlu0 %2209
        %v2211 = vsel %vm995, %v2206, 0.0
        %2212 = vadd.xlane.f32.xlu0 %v2211
        %v2213 = vpop.xlane.xlu0 %2212
        %v2214 = vsel %vm2194, %v2207, 0.0
        %2215 = vadd.xlane.f32.xlu0 %v2214
        %v2216 = vpop.xlane.xlu0 %2215
        %v2217 = vmul.f32 %v2210, %v2198
        %v2218 = vmul.f32 %v2213, %v2198
        %v2219 = vmul.f32 %v2216, %v2198
        %v2220 = vadd.f32 %v2217, 1e-05
        %v2221 = vadd.f32 %v2218, 1e-05
        %v2222 = vadd.f32 %v2219, 1e-05
        %v2223 = vrsqrt.pop %v2220
        %v2224 = vrsqrt.pop %v2221
        %v2225 = vrsqrt.pop %v2222
        %v2226 = vmul.f32 %v2202, %v2223
        %v2227 = vmul.f32 %v2203, %v2224
        %v2228 = vmul.f32 %v2204, %v2225
        %v2230 = vlaneseq
        %v2231 = vshrl.u32 %v2230, 7
        %v2232 = vsub.s32 0, %v2231
        %v2233 = vrot.slane %v2186, %v2232
        %v2235 = vmul.f32 %v2226, %v2233
        %v2236 = vmul.f32 %v2227, %v2233
        %v2237 = vmul.f32 %v2228, %v2233
        %v2239 = vlaneseq
        %v2240 = vshrl.u32 %v2239, 7
        %v2241 = vsub.s32 0, %v2240
        %v2242 = vrot.slane %v2187, %v2241
        %v2244 = vadd.f32 %v2235, %v2242
        %v2245 = vadd.f32 %v2236, %v2242
        %v2246 = vadd.f32 %v2237, %v2242
        %v2247 = vld [vmem:[%s840] sm:$0xff]
        %v2248 = vld [vmem:[%s840 + $0x8] sm:$0xff]
        %v2249 = vld [vmem:[%s840 + $0x10] sm:$0xff]
        %v2250 = vld [vmem:[%s840 + $0x18] sm:$0xff]
        %v2251 = vld [vmem:[%s843] sm:$0x1]
        %v2253 = vlaneseq
        %v2254 = vshrl.u32 %v2253, 7
        %v2255 = vsub.s32 0, %v2254
        %v2256 = vrot.slane %v2251, %v2255
        %v2259 = vsel %vm995, %v2244, 0
        %v2262 = vsel %vm995, %v2245, 0
        %v2265 = vsel %vm995, %v2246, 0
        %2267 = vmatprep.subr.mxu0 0.0
        %2268 = vmatpush1.msra.mxu0 %v2247
        %2269 = vmatprep.subr.mxu0 0.0
        %2270 = vmatpush1.msra.mxu0 %v2248
        %2271 = vmatprep.subr.mxu0 0.0
        %2272 = vmatpush1.msra.mxu0 %v2249
        %2273 = vmatprep.subr.mxu0 0.0
        %2274 = vmatpush1.msra.mxu0 %v2250
        %2275 = vmatprep.subr.mxu0 0.0
        %2276 = vmatpush1.msra.mxu0 0.0
        %2277 = vmatprep.subr.mxu0 0.0
        %2278 = vmatpush1.msra.mxu0 0.0
        %2279 = vmatprep.subr.mxu0 0.0
        %2280 = vmatpush1.msra.mxu0 0.0
        %2281 = vmatprep.subr.mxu0 0.0
        %2282 = vmatpush1.msra.mxu0 0.0
        %2283 = vmatprep.subr.mxu0 0.0
        %2284 = vmatpush1.msra.mxu0 0.0
        %2285 = vmatprep.subr.mxu0 0.0
        %2286 = vmatpush1.msra.mxu0 0.0
        %2287 = vmatprep.subr.mxu0 0.0
        %2288 = vmatpush1.msra.mxu0 0.0
        %2289 = vmatprep.subr.mxu0 0.0
        %2290 = vmatpush1.msra.mxu0 0.0
        %2291 = vmatprep.subr.mxu0 0.0
        %2292 = vmatpush1.msra.mxu0 0.0
        %2293 = vmatprep.subr.mxu0 0.0
        %2294 = vmatpush1.msra.mxu0 0.0
        %2295 = vmatprep.subr.mxu0 0.0
        %2296 = vmatpush1.msra.mxu0 0.0
        %2297 = vmatprep.subr.mxu0 0.0
        %2298 = vmatpush1.msra.mxu0 0.0
        %2299 = vmatprep.subr.mxu0 0.0
        %2300 = vmatpush1.msra.mxu0 0.0
        %2301 = vmatprep.subr.mxu0 0.0
        %2302 = vmatpush1.msra.mxu0 0.0
        %2303 = vmatprep.subr.mxu0 0.0
        %2304 = vmatpush1.msra.mxu0 0.0
        %2305 = vmatprep.subr.mxu0 0.0
        %2306 = vmatpush1.msra.mxu0 0.0
        %2307 = vmatprep.subr.mxu0 0.0
        %2308 = vmatpush1.msra.mxu0 0.0
        %2309 = vmatprep.subr.mxu0 0.0
        %2310 = vmatpush1.msra.mxu0 0.0
        %2311 = vmatprep.subr.mxu0 0.0
        %2312 = vmatpush1.msra.mxu0 0.0
        %2313 = vmatprep.subr.mxu0 0.0
        %2314 = vmatpush1.msra.mxu0 0.0
        %2315 = vmatprep.subr.mxu0 0.0
        %2316 = vmatpush1.msra.mxu0 0.0
        %2317 = vmatprep.subr.mxu0 0.0
        %2318 = vmatpush1.msra.mxu0 0.0
        %2319 = vmatprep.subr.mxu0 0.0
        %2320 = vmatpush1.msra.mxu0 0.0
        %2321 = vmatprep.subr.mxu0 0.0
        %2322 = vmatpush1.msra.mxu0 0.0
        %2323 = vmatprep.subr.mxu0 0.0
        %2324 = vmatpush1.msra.mxu0 0.0
        %2325 = vmatprep.subr.mxu0 0.0
        %2326 = vmatpush1.msra.mxu0 0.0
        %2327 = vmatprep.subr.mxu0 0.0
        %2328 = vmatpush1.msra.mxu0 0.0
        %2329 = vmatprep.subr.mxu0 0.0
        %2330 = vmatpush1.msra.mxu0 0.0
        %2331 = vmatprep.mubr.f32.mxu0 0.0
        %2332 = vmatmul.mubr.f32.gmra.mrb[0].mxu0 %v2259
        %v2333 = vpop.f32.mrb[0].mxu0
        %v2334 = vadd.f32 %v2256, %v2333
        %v2335 = vpop.f32.mrb[0].mxu0
        %2336 = vmatprep.mubr.f32.mxu0 0.0
        %2337 = vmatmul.mubr.f32.gmra.mrb[0].mxu0 %v2262
        %v2338 = vpop.f32.mrb[0].mxu0
        %v2339 = vadd.f32 %v2256, %v2338
        %v2340 = vpop.f32.mrb[0].mxu0
        %2341 = vmatprep.mubr.f32.mxu0 0.0
        %2342 = vmatmul.mubr.f32.gmra.mrb[0].mxu0 %v2265
        %v2343 = vpop.f32.mrb[0].mxu0
        %v2344 = vadd.f32 %v2256, %v2343
        %v2345 = vpop.f32.mrb[0].mxu0
        %2346 = vdwg.mxu0
        %v2347 = vmul.f32 %v2334, 0.5
        %v2348 = vmul.f32 %v2339, 0.5
        %v2349 = vmul.f32 %v2344, 0.5
        %v2350 = vmul.f32 %v2334, 0.70710677
        %v2351 = vmul.f32 %v2339, 0.70710677
        %v2352 = vmul.f32 %v2344, 0.70710677
        %vm2353 = vcmp.lt.f32.partialorder %v2350, 0.0
        %vm2354 = vcmp.lt.f32.partialorder %v2351, 0.0
        %vm2355 = vcmp.lt.f32.partialorder %v2352, 0.0
        %v2356 = vsel %vm2353, -1.0, 1.0
        %v2357 = vsel %vm2354, -1.0, 1.0
        %v2358 = vsel %vm2355, -1.0, 1.0
        %v2359 = vand.u32 2147483647, %v2350
        %v2360 = vand.u32 2147483647, %v2351
        %v2361 = vand.u32 2147483647, %v2352
        %v2362 = vmul.f32 %v2359, 0.3275911
        %v2363 = vmul.f32 %v2360, 0.3275911
        %v2364 = vmul.f32 %v2361, 0.3275911
        %v2365 = vadd.f32 %v2362, 1.0
        %v2366 = vadd.f32 %v2363, 1.0
        %v2367 = vadd.f32 %v2364, 1.0
        %v2368 = vrcp.pop %v2365
        %v2369 = vmul.f32 1.0, %v2368
        %v2370 = vrcp.pop %v2366
        %v2371 = vmul.f32 1.0, %v2370
        %v2372 = vrcp.pop %v2367
        %v2373 = vmul.f32 1.0, %v2372
        %v2374 = vmul.f32 %v2369, 1.0614054
        %v2375 = vmul.f32 %v2371, 1.0614054
        %v2376 = vmul.f32 %v2373, 1.0614054
        %v2377 = vsub.f32 %v2374, 1.4531521
        %v2378 = vsub.f32 %v2375, 1.4531521
        %v2379 = vsub.f32 %v2376, 1.4531521
        %v2380 = vmul.f32 %v2377, %v2369
        %v2381 = vmul.f32 %v2378, %v2371
        %v2382 = vmul.f32 %v2379, %v2373
        %v2383 = vadd.f32 %v2380, 1.4214138
        %v2384 = vadd.f32 %v2381, 1.4214138
        %v2385 = vadd.f32 %v2382, 1.4214138
        %v2386 = vmul.f32 %v2383, %v2369
        %v2387 = vmul.f32 %v2384, %v2371
        %v2388 = vmul.f32 %v2385, %v2373
        %v2389 = vsub.f32 %v2386, 0.28449672
        %v2390 = vsub.f32 %v2387, 0.28449672
        %v2391 = vsub.f32 %v2388, 0.28449672
        %v2392 = vmul.f32 %v2389, %v2369
        %v2393 = vmul.f32 %v2390, %v2371
        %v2394 = vmul.f32 %v2391, %v2373
        %v2395 = vadd.f32 %v2392, 0.2548296
        %v2396 = vadd.f32 %v2393, 0.2548296
        %v2397 = vadd.f32 %v2394, 0.2548296
        %v2398 = vmul.f32 %v2395, %v2369
        %v2399 = vmul.f32 %v2396, %v2371
        %v2400 = vmul.f32 %v2397, %v2373
        %v2401 = vsub.f32 0.0, %v2359
        %v2402 = vsub.f32 0.0, %v2360
        %v2403 = vsub.f32 0.0, %v2361
        %v2404 = vmul.f32 %v2401, %v2359
        %v2405 = vmul.f32 %v2402, %v2360
        %v2406 = vmul.f32 %v2403, %v2361
        %v2407 = vmul.f32 %v2404, 1.442695
        %v2408 = vpow.pop %v2407
        %v2409 = vmul.f32 %v2405, 1.442695
        %v2410 = vpow.pop %v2409
        %v2411 = vmul.f32 %v2406, 1.442695
        %v2412 = vpow.pop %v2411
        %v2413 = vmul.f32 %v2398, %v2408
        %v2414 = vmul.f32 %v2399, %v2410
        %v2415 = vmul.f32 %v2400, %v2412
        %v2416 = vsub.f32 1.0, %v2413
        %v2417 = vsub.f32 1.0, %v2414
        %v2418 = vsub.f32 1.0, %v2415
        %v2419 = vmul.f32 %v2356, %v2416
        %v2420 = vmul.f32 %v2357, %v2417
        %v2421 = vmul.f32 %v2358, %v2418
        %v2422 = vadd.f32 %v2419, 1.0
        %v2423 = vadd.f32 %v2420, 1.0
        %v2424 = vadd.f32 %v2421, 1.0
        %v2425 = vmul.f32 %v2347, %v2422
        %v2426 = vmul.f32 %v2348, %v2423
        %v2427 = vmul.f32 %v2349, %v2424
        %v2428 = vld [vmem:[%s848] sm:$0xff]
        %v2429 = vld [vmem:[%s848 + $0x8] sm:$0xff]
        %v2430 = vld [vmem:[%s848 + $0x10] sm:$0xff]
        %v2431 = vld [vmem:[%s848 + $0x18] sm:$0xff]
        %v2432 = vld [vmem:[%s848 + $0x20] sm:$0xff]
        %v2433 = vld [vmem:[%s848 + $0x28] sm:$0xff]
        %v2434 = vld [vmem:[%s848 + $0x30] sm:$0xff]
        %v2435 = vld [vmem:[%s848 + $0x38] sm:$0xff]
        %v2436 = vld [vmem:[%s848 + $0x40] sm:$0xff]
        %v2437 = vld [vmem:[%s848 + $0x48] sm:$0xff]
        %v2438 = vld [vmem:[%s848 + $0x50] sm:$0xff]
        %v2439 = vld [vmem:[%s848 + $0x58] sm:$0xff]
        %v2440 = vld [vmem:[%s848 + $0x60] sm:$0xff]
        %v2441 = vld [vmem:[%s848 + $0x68] sm:$0xff]
        %v2442 = vld [vmem:[%s848 + $0x70] sm:$0xff]
        %v2443 = vld [vmem:[%s848 + $0x78] sm:$0xff]
        %v2444 = vld [vmem:[%s851] sm:$0x1]
        %v2446 = vlaneseq
        %v2447 = vshrl.u32 %v2446, 7
        %v2448 = vsub.s32 0, %v2447
        %v2449 = vrot.slane %v2444, %v2448
        %2451 = vmatprep.subr.mxu0 0.0
        %2452 = vmatpush1.msra.mxu0 %v2428
        %2453 = vmatprep.subr.mxu0 0.0
        %2454 = vmatpush1.msra.mxu0 %v2429
        %2455 = vmatprep.subr.mxu0 0.0
        %2456 = vmatpush1.msra.mxu0 %v2430
        %2457 = vmatprep.subr.mxu0 0.0
        %2458 = vmatpush1.msra.mxu0 %v2431
        %2459 = vmatprep.subr.mxu0 0.0
        %2460 = vmatpush1.msra.mxu0 %v2432
        %2461 = vmatprep.subr.mxu0 0.0
        %2462 = vmatpush1.msra.mxu0 %v2433
        %2463 = vmatprep.subr.mxu0 0.0
        %2464 = vmatpush1.msra.mxu0 %v2434
        %2465 = vmatprep.subr.mxu0 0.0
        %2466 = vmatpush1.msra.mxu0 %v2435
        %2467 = vmatprep.subr.mxu0 0.0
        %2468 = vmatpush1.msra.mxu0 %v2436
        %2469 = vmatprep.subr.mxu0 0.0
        %2470 = vmatpush1.msra.mxu0 %v2437
        %2471 = vmatprep.subr.mxu0 0.0
        %2472 = vmatpush1.msra.mxu0 %v2438
        %2473 = vmatprep.subr.mxu0 0.0
        %2474 = vmatpush1.msra.mxu0 %v2439
        %2475 = vmatprep.subr.mxu0 0.0
        %2476 = vmatpush1.msra.mxu0 %v2440
        %2477 = vmatprep.subr.mxu0 0.0
        %2478 = vmatpush1.msra.mxu0 %v2441
        %2479 = vmatprep.subr.mxu0 0.0
        %2480 = vmatpush1.msra.mxu0 %v2442
        %2481 = vmatprep.subr.mxu0 0.0
        %2482 = vmatpush1.msra.mxu0 %v2443
        %2483 = vmatprep.subr.mxu0 0.0
        %2484 = vmatpush1.msra.mxu0 0.0
        %2485 = vmatprep.subr.mxu0 0.0
        %2486 = vmatpush1.msra.mxu0 0.0
        %2487 = vmatprep.subr.mxu0 0.0
        %2488 = vmatpush1.msra.mxu0 0.0
        %2489 = vmatprep.subr.mxu0 0.0
        %2490 = vmatpush1.msra.mxu0 0.0
        %2491 = vmatprep.subr.mxu0 0.0
        %2492 = vmatpush1.msra.mxu0 0.0
        %2493 = vmatprep.subr.mxu0 0.0
        %2494 = vmatpush1.msra.mxu0 0.0
        %2495 = vmatprep.subr.mxu0 0.0
        %2496 = vmatpush1.msra.mxu0 0.0
        %2497 = vmatprep.subr.mxu0 0.0
        %2498 = vmatpush1.msra.mxu0 0.0
        %2499 = vmatprep.subr.mxu0 0.0
        %2500 = vmatpush1.msra.mxu0 0.0
        %2501 = vmatprep.subr.mxu0 0.0
        %2502 = vmatpush1.msra.mxu0 0.0
        %2503 = vmatprep.subr.mxu0 0.0
        %2504 = vmatpush1.msra.mxu0 0.0
        %2505 = vmatprep.subr.mxu0 0.0
        %2506 = vmatpush1.msra.mxu0 0.0
        %2507 = vmatprep.subr.mxu0 0.0
        %2508 = vmatpush1.msra.mxu0 0.0
        %2509 = vmatprep.subr.mxu0 0.0
        %2510 = vmatpush1.msra.mxu0 0.0
        %2511 = vmatprep.subr.mxu0 0.0
        %2512 = vmatpush1.msra.mxu0 0.0
        %2513 = vmatprep.subr.mxu0 0.0
        %2514 = vmatpush1.msra.mxu0 0.0
        %2515 = vmatprep.mubr.f32.mxu0 0.0
        %2516 = vmatmul.mubr.f32.gmra.mrb[0].mxu0 %v2425
        %v2517 = vpop.f32.mrb[0].mxu0
        %v2518 = vadd.f32 %v2449, %v2517
        %v2519 = vpop.f32.mrb[0].mxu0
        %2520 = vmatprep.mubr.f32.mxu0 0.0
        %2521 = vmatmul.mubr.f32.gmra.mrb[0].mxu0 %v2426
        %v2522 = vpop.f32.mrb[0].mxu0
        %v2523 = vadd.f32 %v2449, %v2522
        %v2524 = vpop.f32.mrb[0].mxu0
        %2525 = vmatprep.mubr.f32.mxu0 0.0
        %2526 = vmatmul.mubr.f32.gmra.mrb[0].mxu0 %v2427
        %v2527 = vpop.f32.mrb[0].mxu0
        %v2528 = vadd.f32 %v2449, %v2527
        %v2529 = vpop.f32.mrb[0].mxu0
        %2530 = vdwg.mxu0
        %v2531 = vadd.f32 %v2244, %v2518
        %v2532 = vadd.f32 %v2245, %v2523
        %v2533 = vadd.f32 %v2246, %v2528
        %v2534 = vld [vmem:[%s854] sm:$0x1]
        %v2535 = vld [vmem:[%s857] sm:$0x1]
        %v2536 = vsel %vm995, %v2531, 0.0
        %2537 = vadd.xlane.f32.xlu0 %v2536
        %v2538 = vpop.xlane.xlu0 %2537
        %v2539 = vsel %vm995, %v2532, 0.0
        %2540 = vadd.xlane.f32.xlu0 %v2539
        %v2541 = vpop.xlane.xlu0 %2540
        %v2542 = vsel %vm2194, %v2533, 0.0
        %2543 = vadd.xlane.f32.xlu0 %v2542
        %v2544 = vpop.xlane.xlu0 %2543
        %v2545 = vmul.f32 %v2538, %v2198
        %v2546 = vmul.f32 %v2541, %v2198
        %v2547 = vmul.f32 %v2544, %v2198
        %v2548 = vsub.f32 %v2531, %v2545
        %v2549 = vsub.f32 %v2532, %v2546
        %v2550 = vsub.f32 %v2533, %v2547
        %v2551 = vmul.f32 %v2548, %v2548
        %v2552 = vmul.f32 %v2549, %v2549
        %v2553 = vmul.f32 %v2550, %v2550
        %v2554 = vsel %vm995, %v2551, 0.0
        %2555 = vadd.xlane.f32.xlu0 %v2554
        %v2556 = vpop.xlane.xlu0 %2555
        %v2557 = vsel %vm995, %v2552, 0.0
        %2558 = vadd.xlane.f32.xlu0 %v2557
        %v2559 = vpop.xlane.xlu0 %2558
        %v2560 = vsel %vm2194, %v2553, 0.0
        %2561 = vadd.xlane.f32.xlu0 %v2560
        %v2562 = vpop.xlane.xlu0 %2561
        %v2563 = vmul.f32 %v2556, %v2198
        %v2564 = vmul.f32 %v2559, %v2198
        %v2565 = vmul.f32 %v2562, %v2198
        %v2566 = vadd.f32 %v2563, 1e-05
        %v2567 = vadd.f32 %v2564, 1e-05
        %v2568 = vadd.f32 %v2565, 1e-05
        %v2569 = vrsqrt.pop %v2566
        %v2570 = vrsqrt.pop %v2567
        %v2571 = vrsqrt.pop %v2568
        %v2572 = vmul.f32 %v2548, %v2569
        %v2573 = vmul.f32 %v2549, %v2570
        %v2574 = vmul.f32 %v2550, %v2571
        %v2576 = vlaneseq
        %v2577 = vshrl.u32 %v2576, 7
        %v2578 = vsub.s32 0, %v2577
        %v2579 = vrot.slane %v2534, %v2578
        %v2581 = vmul.f32 %v2572, %v2579
        %v2582 = vmul.f32 %v2573, %v2579
        %v2583 = vmul.f32 %v2574, %v2579
        %v2585 = vlaneseq
        %v2586 = vshrl.u32 %v2585, 7
        %v2587 = vsub.s32 0, %v2586
        %v2588 = vrot.slane %v2535, %v2587
        %v2590 = vadd.f32 %v2581, %v2588
        %v2591 = vadd.f32 %v2582, %v2588
        %v2592 = vadd.f32 %v2583, %v2588
        %2593 = vst.msk [vmem:[#allocation2] sm:$0xff] %vm995, %v2590
        %2594 = vst.msk [vmem:[#allocation2 + $0x8] sm:$0xff] %vm995, %v2591
        %2595 = vst.msk [vmem:[#allocation2 + $0x10] sm:$0x1] %vm2194, %v2592
        %p2596 = scmp.eq.s32.totalorder %s40, 1
        // Predicated region
        $region109: #{tpu_custom_call.1} parent=103 // pred_check
          %p2597 = pneg %p2596
        $region110: #{tpu_custom_call.1} parent=103 // pred_check_branch
          %2599 = sbr.rel (%p2597) target = $region112
        $region111: #{tpu_custom_call.1} parent=103 // pred_region
          %v2600 = vld [vmem:[%s17] sm:$0x1]
          %v2601 = vld [vmem:[%s18] sm:$0x1]
          %v2602 = vsel %vm2194, %v2590, 0.0
          %2603 = vadd.xlane.f32.xlu0 %v2602
          %v2604 = vpop.xlane.xlu0 %2603
          %v2605 = vmul.f32 %v2604, %v2198
          %v2606 = vsub.f32 %v2590, %v2605
          %v2607 = vmul.f32 %v2606, %v2606
          %v2608 = vsel %vm2194, %v2607, 0.0
          %2609 = vadd.xlane.f32.xlu0 %v2608
          %v2610 = vpop.xlane.xlu0 %2609
          %v2611 = vmul.f32 %v2610, %v2198
          %v2612 = vadd.f32 %v2611, 1e-05
          %v2613 = vrsqrt.pop %v2612
          %v2614 = vmul.f32 %v2606, %v2613
          %v2615 = vmul.f32 %v2614, %v2600
          %v2616 = vadd.f32 %v2615, %v2601
          %v2617 = vld [vmem:[%s19] sm:$0xff]
          %v2618 = vld [vmem:[%s19 + $0x8] sm:$0xff]
          %v2619 = vld [vmem:[%s19 + $0x10] sm:$0xff]
          %v2620 = vld [vmem:[%s19 + $0x18] sm:$0xff]
          %v2621 = vld [vmem:[%s20] sm:$0x1]
          %v2623 = vsel %vm995, %v2616, 0
          %2625 = vmatprep.subr.mxu0 0.0
          %2626 = vmatpush1.msra.mxu0 %v2617
          %2627 = vmatprep.subr.mxu0 0.0
          %2628 = vmatpush1.msra.mxu0 %v2618
          %2629 = vmatprep.subr.mxu0 0.0
          %2630 = vmatpush1.msra.mxu0 %v2619
          %2631 = vmatprep.subr.mxu0 0.0
          %2632 = vmatpush1.msra.mxu0 %v2620
          %2633 = vmatprep.subr.mxu0 0.0
          %2634 = vmatpush1.msra.mxu0 0.0
          %2635 = vmatprep.subr.mxu0 0.0
          %2636 = vmatpush1.msra.mxu0 0.0
          %2637 = vmatprep.subr.mxu0 0.0
          %2638 = vmatpush1.msra.mxu0 0.0
          %2639 = vmatprep.subr.mxu0 0.0
          %2640 = vmatpush1.msra.mxu0 0.0
          %2641 = vmatprep.subr.mxu0 0.0
          %2642 = vmatpush1.msra.mxu0 0.0
          %2643 = vmatprep.subr.mxu0 0.0
          %2644 = vmatpush1.msra.mxu0 0.0
          %2645 = vmatprep.subr.mxu0 0.0
          %2646 = vmatpush1.msra.mxu0 0.0
          %2647 = vmatprep.subr.mxu0 0.0
          %2648 = vmatpush1.msra.mxu0 0.0
          %2649 = vmatprep.subr.mxu0 0.0
          %2650 = vmatpush1.msra.mxu0 0.0
          %2651 = vmatprep.subr.mxu0 0.0
          %2652 = vmatpush1.msra.mxu0 0.0
          %2653 = vmatprep.subr.mxu0 0.0
          %2654 = vmatpush1.msra.mxu0 0.0
          %2655 = vmatprep.subr.mxu0 0.0
          %2656 = vmatpush1.msra.mxu0 0.0
          %2657 = vmatprep.subr.mxu0 0.0
          %2658 = vmatpush1.msra.mxu0 0.0
          %2659 = vmatprep.subr.mxu0 0.0
          %2660 = vmatpush1.msra.mxu0 0.0
          %2661 = vmatprep.subr.mxu0 0.0
          %2662 = vmatpush1.msra.mxu0 0.0
          %2663 = vmatprep.subr.mxu0 0.0
          %2664 = vmatpush1.msra.mxu0 0.0
          %2665 = vmatprep.subr.mxu0 0.0
          %2666 = vmatpush1.msra.mxu0 0.0
          %2667 = vmatprep.subr.mxu0 0.0
          %2668 = vmatpush1.msra.mxu0 0.0
          %2669 = vmatprep.subr.mxu0 0.0
          %2670 = vmatpush1.msra.mxu0 0.0
          %2671 = vmatprep.subr.mxu0 0.0
          %2672 = vmatpush1.msra.mxu0 0.0
          %2673 = vmatprep.subr.mxu0 0.0
          %2674 = vmatpush1.msra.mxu0 0.0
          %2675 = vmatprep.subr.mxu0 0.0
          %2676 = vmatpush1.msra.mxu0 0.0
          %2677 = vmatprep.subr.mxu0 0.0
          %2678 = vmatpush1.msra.mxu0 0.0
          %2679 = vmatprep.subr.mxu0 0.0
          %2680 = vmatpush1.msra.mxu0 0.0
          %2681 = vmatprep.subr.mxu0 0.0
          %2682 = vmatpush1.msra.mxu0 0.0
          %2683 = vmatprep.subr.mxu0 0.0
          %2684 = vmatpush1.msra.mxu0 0.0
          %2685 = vmatprep.subr.mxu0 0.0
          %2686 = vmatpush1.msra.mxu0 0.0
          %2687 = vmatprep.subr.mxu0 0.0
          %2688 = vmatpush1.msra.mxu0 0.0
          %2689 = vmatprep.mubr.f32.mxu0 0.0
          %2690 = vmatmul.mubr.f32.gmra.mrb[0].mxu0 %v2623
          %v2691 = vpop.f32.mrb[0].mxu0
          %v2692 = vadd.f32 %v2621, %v2691
          %v2693 = vpop.f32.mrb[0].mxu0
          %2694 = vdwg.mxu0
          %vm2695 = vcmask 73728
          %2696 = vst.msk [vmem:[%s808] sm:$0x1] %vm2695, %v2692
        $region112: #{tpu_custom_call.1} parent=103 // pred_fallthru
          _
        %s2697 = sand.u32 %s561, 1
        %s2698 = scalar_lea.sflag [#allocation4], %s2697
        %s2699 = sand.u32 %s561, 1
        %s2700 = scalar_lea.vmem [#allocation3], %s2699
        // Predicated region
        $region113: #{tpu_custom_call.1} parent=103 // pred_check
          %p2701 = pneg %p571
        $region114: #{tpu_custom_call.1} parent=103 // pred_check_branch
          %2703 = sbr.rel (%p2701) target = $region116
        $region115: #{tpu_custom_call.1} parent=103 // pred_region
          %s2705 = ssub.s32 16, 16
          %2706 = vsyncadd %s2698, %s2705
          %s2707 = smul.addr %s39, 16
          %s2708 = scalar_lea.hbm %s21, %s2707
          %s2710 = sshll.u32 %s2700, 4
          %s2711 = int_to_ptr.vmem [resolvable:$true] %s2710
          %2713 = dma.vmem_to_hbm [thread:$0]  %s2711, 16, %s2708, %s2698
        $region116: #{tpu_custom_call.1} parent=103 // pred_fallthru
          _
      $region104: #{tpu_custom_call.1} parent=5 // pred_fallthru
        _
      %p2714 = scmp.le.s32.totalorder 2, %s30
      // Predicated region
      $region117: #{tpu_custom_call.1} parent=5 // pred_check
        %p2715 = pneg %p2714
      $region118: #{tpu_custom_call.1} parent=5 // pred_check_branch
        %2717 = sbr.rel (%p2715) target = $region120
      $region119: #{tpu_custom_call.1} parent=5 // pred_region
        %s2718 = ssub.s32 %s30, 2
        // Predicated region
        $region121: #{tpu_custom_call.1} parent=119 // pred_check
          %p2719 = pneg %p577
        $region122: #{tpu_custom_call.1} parent=119 // pred_check_branch
          %2721 = sbr.rel (%p2719) target = $region124
        $region123: #{tpu_custom_call.1} parent=119 // pred_region
          %s2722 = sand.u32 %s562, 1
          %s2723 = scalar_lea.sflag [#allocation4], %s2722
          %s2724 = sand.u32 %s562, 1
          %s2725 = scalar_lea.vmem [#allocation3], %s2724
          %2726 = dma.done %s2723, 16
        $region124: #{tpu_custom_call.1} parent=119 // pred_fallthru
          _
      $region120: #{tpu_custom_call.1} parent=5 // pred_fallthru
        _
    $region6: #{tpu_custom_call.1} parent=1 // loop_footer
      %s34 = sadd.s32 1, %s30
    $region7: #{tpu_custom_call.1} parent=1 // loop_footer_branch
      %29 = sbr.rel target = $region3
    $region8: #{tpu_custom_call.1} parent=1 // loop_exit
      _
    %2727 = vsyncpa [#allocation4], 1
    %s2728 = scalar_lea.sflag [#allocation4], 1
    %2729 = vsyncpa %s2728, 1

</llo_original>
